<compile_context>
chip_gen: v5e
topology: v5e:2x2
jax: 0.10.0
libtpu: 0.0.40
codegen_flags: <defaults>
</compile_context>

<pallas_src>
import functools

import jax
import jax.numpy as jnp
from jax.experimental import pallas as pl
from jax.experimental.pallas import tpu as pltpu

_LANE = 128     # pad channel dims to multiples of the TPU lane width
_GUARD = 8      # zero guard rows around the flattened tiles (taps reach +/-1 element)
_BN_EPS = 1e-5


def _round_up(v, m):
    return (v + m - 1) // m * m


# ------------------------------ Pallas kernel -------------------------------

def _bottleneck_kernel(x_hbm, w1_ref, s1_ref, b1_ref, w2_ref, s2_ref, b2_ref,
                       o_ref, xt_ref, h_ref, dma_sem, *, th, wp, add):
    """Fused Bottleneck for one (batch, row-tile) grid step.

    xt_ref / h_ref hold row-flattened tiles: flat index = image_row * wp + col,
    so each 3x3 tap is a contiguous 2-D slice at a static offset and a whole
    conv becomes one (rows, 9*C) x (9*C, Cout) MXU matmul.
    """
    b = pl.program_id(0)          # batch index
    i = pl.program_id(1)          # row-tile index
    cin_p = xt_ref.shape[-1]
    cmid_p = h_ref.shape[-1]

    n_in = (th + 4) * wp          # flattened rows of the input halo window
    n_mid = (th + 2) * wp         # flattened rows of the intermediate (+1 row halo)
    n_out = th * wp               # flattened rows of the output tile
    w_img = wp - 4                # true image width

    # ---- fetch this tile's halo window (padded image rows i*th .. i*th+th+3) ----
    cp = pltpu.make_async_copy(
        x_hbm.at[b, pl.ds(i * n_out, n_in)],
        xt_ref.at[pl.ds(_GUARD, n_in)],
        dma_sem)
    cp.start()
    # Zero the guard rows while the DMA is in flight (they only ever feed
    # positions that are masked or discarded, but keep them clean).
    xt_ref[0:_GUARD, :] = jnp.zeros((_GUARD, cin_p), jnp.float32)
    xt_ref[_GUARD + n_in:_GUARD + n_in + _GUARD, :] = jnp.zeros((_GUARD, cin_p), jnp.float32)
    h_ref[0:_GUARD, :] = jnp.zeros((_GUARD, cmid_p), jnp.float32)
    h_ref[_GUARD + n_mid:_GUARD + n_mid + _GUARD, :] = jnp.zeros((_GUARD, cmid_p), jnp.float32)
    cp.wait()

    # ---- conv1 + BN + SiLU: one (n_mid, 9*cin_p) x (9*cin_p, cmid_p) matmul ----
    taps = [xt_ref[_GUARD + dy * wp + dx - 1:
                   _GUARD + dy * wp + dx - 1 + n_mid, :]
            for dy in range(3) for dx in range(3)]
    h = jnp.dot(jnp.concatenate(taps, axis=-1), w1_ref[...],
                preferred_element_type=jnp.float32)
    h = h * s1_ref[...] + b1_ref[...]
    h = h * (1.0 / (1.0 + jnp.exp(-h)))                      # SiLU
    h_ref[_GUARD:_GUARD + n_mid, :] = h

    # conv2 uses "same" zero padding: intermediate positions outside the image
    # must be exactly zero (cols -1 / W always; rows -1 / H at first/last tile).
    zrow = jnp.zeros((1, cmid_p), jnp.float32)
    for r in range(th + 2):
        base = _GUARD + r * wp
        h_ref[base + 1:base + 2, :] = zrow                   # original col -1
        h_ref[base + w_img + 2:base + w_img + 3, :] = zrow   # original col W

    @pl.when(i == 0)
    def _():                                                 # original row -1
        h_ref[_GUARD:_GUARD + wp, :] = jnp.zeros((wp, cmid_p), jnp.float32)

    @pl.when(i == pl.num_programs(1) - 1)
    def _():                                                 # original row H
        h_ref[_GUARD + (th + 1) * wp:_GUARD + n_mid, :] = (
            jnp.zeros((wp, cmid_p), jnp.float32))

    # ---- conv2 + BN + SiLU (+ fused shortcut): one (n_out, 9*cmid_p) matmul ----
    taps2 = [h_ref[_GUARD + dy * wp + dx - 1:
                   _GUARD + dy * wp + dx - 1 + n_out, :]
             for dy in range(3) for dx in range(3)]
    y = jnp.dot(jnp.concatenate(taps2, axis=-1), w2_ref[...],
                preferred_element_type=jnp.float32)
    y = y * s2_ref[...] + b2_ref[...]
    y = y * (1.0 / (1.0 + jnp.exp(-y)))                      # SiLU
    if add:                                                  # shortcut (c1 == c2)
        y = y + xt_ref[_GUARD + 2 * wp:_GUARD + 2 * wp + n_out, :]
    o_ref[...] = y


# ------------------------------ host-side glue -------------------------------

def _pad_conv_params(w, scale, shift, cin_p, cout_p):
    """Zero-pad channels to lane width; reshape HWIO weights to (9*cin_p, cout_p)."""
    kh, kw, cin, cout = w.shape
    wpad = jnp.pad(w.astype(jnp.float32),
                   ((0, 0), (0, 0), (0, cin_p - cin), (0, cout_p - cout)))
    wmat = wpad.reshape(kh * kw * cin_p, cout_p)
    sc = jnp.pad(scale.astype(jnp.float32), (0, cout_p - cout)).reshape(1, cout_p)
    sh = jnp.pad(shift.astype(jnp.float32), (0, cout_p - cout)).reshape(1, cout_p)
    return wmat, sc, sh


def _pick_row_tile(h, w):
    """Largest divisor of H giving an 8-aligned output tile of <= ~2048 flat rows."""
    best = 1
    for th in range(1, h + 1):
        if h % th == 0 and th * (w + 4) <= 2048 and (th * (w + 4)) % 8 == 0:
            best = th
    return best


def bottleneck_forward(x_nchw, params, row_tile=None):
    """Bottleneck forward pass (NCHW in / NCHW out) as one fused Pallas kernel."""
    w1, s1, b1 = params["cv1"]
    w2, s2, b2 = params["cv2"]
    add = params["add"]
    c1, c_mid = w1.shape[2], w1.shape[3]
    c2 = w2.shape[3]
    n, cx, h, w = x_nchw.shape
    assert cx == c1 and w2.shape[2] == c_mid
    if add:
        assert c1 == c2

    cin_p = _round_up(c1, _LANE)
    cmid_p = _round_up(c_mid, _LANE)
    cout_p = _round_up(c2, _LANE)

    th = row_tile if row_tile is not None else _pick_row_tile(h, w)
    assert h % th == 0, (h, th)
    wp = w + 4                                   # padded image width
    n_out = th * wp

    # NCHW -> NHWC, zero-pad channels to the lane width and spatial dims by 2
    # (enough halo for two stacked 3x3 "same" convs), then flatten (row, col)
    # so every 3x3 tap becomes a contiguous 2-D slice inside the kernel.
    x = jnp.transpose(x_nchw, (0, 2, 3, 1)).astype(jnp.float32)
    xp = jnp.pad(x, ((0, 0), (2, 2), (2, 2), (0, cin_p - c1)))
    xp = xp.reshape(n, (h + 4) * wp, cin_p)
    # (On v6e/v7x: casting xp / weights to bfloat16 here roughly doubles MXU
    #  rate and halves HBM traffic; kept float32 for the 1e-4 parity check.)

    w1p, s1p, b1p = _pad_conv_params(w1, s1, b1, cin_p, cmid_p)
    w2p, s2p, b2p = _pad_conv_params(w2, s2, b2, cmid_p, cout_p)

    kernel = functools.partial(_bottleneck_kernel, th=th, wp=wp, add=add)

    out = pl.pallas_call(
        kernel,
        out_shape=jax.ShapeDtypeStruct((n, h * wp, cout_p), jnp.float32),
        grid_spec=pltpu.PrefetchScalarGridSpec(
            num_scalar_prefetch=0,
            grid=(n, h // th),
            in_specs=[
                pl.BlockSpec(memory_space=pl.ANY),                        # x stays in HBM
                pl.BlockSpec((9 * cin_p, cmid_p), lambda b, i: (0, 0)),   # w1
                pl.BlockSpec((1, cmid_p), lambda b, i: (0, 0)),           # bn1 scale
                pl.BlockSpec((1, cmid_p), lambda b, i: (0, 0)),           # bn1 shift
                pl.BlockSpec((9 * cmid_p, cout_p), lambda b, i: (0, 0)),  # w2
                pl.BlockSpec((1, cout_p), lambda b, i: (0, 0)),           # bn2 scale
                pl.BlockSpec((1, cout_p), lambda b, i: (0, 0)),           # bn2 shift
            ],
            out_specs=pl.BlockSpec((None, n_out, cout_p), lambda b, i: (b, i, 0)),
            scratch_shapes=[
                pltpu.VMEM((2 * _GUARD + (th + 4) * wp, cin_p), jnp.float32),
                pltpu.VMEM((2 * _GUARD + (th + 2) * wp, cmid_p), jnp.float32),
                pltpu.SemaphoreType.DMA(()),
            ],
        ),
        compiler_params=pltpu.CompilerParams(
            dimension_semantics=("parallel", "parallel"),   # both TCs on v7x
            vmem_limit_bytes=32 * 1024 * 1024,
        ),
    )(xp, w1p, s1p, b1p, w2p, s2p, b2p)

    out = out.reshape(n, h, wp, cout_p)[:, :, 2:2 + w, :c2]
    return jnp.transpose(out, (0, 3, 1, 2))                 # NHWC -> NCHW


# --------------------------- parameter construction --------------------------

def _make_conv_bn_params(key, cin, cout, k=3):
    """Synthetic Conv2d(bias=False) + BatchNorm2d params; BN folded to scale/shift."""
    kw_, kg, kb, km, kv = jax.random.split(key, 5)
    w = jax.random.normal(kw_, (k, k, cin, cout), jnp.float32) * 0.2   # HWIO
    gamma = 1.0 + 0.1 * jax.random.normal(kg, (cout,), jnp.float32)
    beta = 0.1 * jax.random.normal(kb, (cout,), jnp.float32)
    mean = 0.1 * jax.random.normal(km, (cout,), jnp.float32)
    var = 1.0 + 0.1 * jnp.abs(jax.random.normal(kv, (cout,), jnp.float32))
    scale = gamma / jnp.sqrt(var + _BN_EPS)
    shift = beta - mean * scale
    return (w, scale, shift)


def make_bottleneck_params(key, c1, c2, shortcut=True, e=0.5):
    c_ = int(c2 * e)
    k1, k2 = jax.random.split(key)
    return {
        "cv1": _make_conv_bn_params(k1, c1, c_, 3),
        "cv2": _make_conv_bn_params(k2, c_, c2, 3),
        "add": bool(shortcut and c1 == c2),
    }


# ------------------------------ pure-JAX reference ---------------------------

def _ref_conv_bn_silu(x_nhwc, w, scale, shift):
    y = jax.lax.conv_general_dilated(
        x_nhwc, w, (1, 1), "SAME", dimension_numbers=("NHWC", "HWIO", "NHWC"))
    y = y * scale + shift
    return y * jax.nn.sigmoid(y)


def ref_bottleneck_forward(x_nchw, params):
    x = jnp.transpose(x_nchw, (0, 2, 3, 1))
    y = _ref_conv_bn_silu(x, *params["cv1"])
    y = _ref_conv_bn_silu(y, *params["cv2"])
    if params["add"]:
        y = x + y
    return jnp.transpose(y, (0, 3, 1, 2))


# ----------------------------------- main ------------------------------------

if __name__ == "__main__":
    key = jax.random.PRNGKey(0)
    kx, kp = jax.random.split(key)

    # Bottleneck(c1=4, c2=4, shortcut=True, g=1, k=(3, 3), e=0.5) on (2, 4, 16, 16)
    N, C1, C2, H, W = 2, 4, 4, 16, 16
    x = jax.random.normal(kx, (N, C1, H, W), jnp.float32)
    params = make_bottleneck_params(kp, C1, C2, shortcut=True, e=0.5)

    out = jax.block_until_ready(bottleneck_forward(x, params, row_tile=8))
    ref = jax.block_until_ready(ref_bottleneck_forward(x, params))

    assert out.shape == (N, C2, H, W), out.shape
    err = float(jnp.max(jnp.abs(out - ref)))
    assert jnp.allclose(out, ref, rtol=1e-4, atol=1e-4), err
    print("KERNEL_OK")
</pallas_src>

<mosaic_0001>
module attributes {stable_mosaic.version = 11 : i64} {
  func.func @_bottleneck_kernel(%arg0: i32, %arg1: i32, %arg2: memref<2x400x128xf32, #tpu.memory_space<any>>, %arg3: memref<1152x128xf32, #tpu.memory_space<vmem>>, %arg4: memref<1x128xf32, #tpu.memory_space<vmem>>, %arg5: memref<1x128xf32, #tpu.memory_space<vmem>>, %arg6: memref<1152x128xf32, #tpu.memory_space<vmem>>, %arg7: memref<1x128xf32, #tpu.memory_space<vmem>>, %arg8: memref<1x128xf32, #tpu.memory_space<vmem>>, %arg9: memref<1x160x128xf32, #tpu.memory_space<vmem>>, %arg10: memref<256x128xf32, #tpu.memory_space<vmem>>, %arg11: memref<216x128xf32, #tpu.memory_space<vmem>>, %arg12: memref<!tpu.dma_semaphore, #tpu.memory_space<semaphore_mem>>) attributes {dimension_semantics = [#tpu.dimension_semantics<parallel>, #tpu.dimension_semantics<parallel>], iteration_bounds = array<i64: 2, 2>, scalar_prefetch = 0 : i64, scratch_operands = 3 : i64, tpu.core_type = #tpu.core_type<tc>, window_params = [{}, {pipeline_mode = #tpu.pipeline_mode<synchronous>, transform_indices = @transform_1, window_bounds = array<i64: 1152, 128>}, {pipeline_mode = #tpu.pipeline_mode<synchronous>, transform_indices = @transform_2, window_bounds = array<i64: 1, 128>}, {pipeline_mode = #tpu.pipeline_mode<synchronous>, transform_indices = @transform_3, window_bounds = array<i64: 1, 128>}, {pipeline_mode = #tpu.pipeline_mode<synchronous>, transform_indices = @transform_4, window_bounds = array<i64: 1152, 128>}, {pipeline_mode = #tpu.pipeline_mode<synchronous>, transform_indices = @transform_5, window_bounds = array<i64: 1, 128>}, {pipeline_mode = #tpu.pipeline_mode<synchronous>, transform_indices = @transform_6, window_bounds = array<i64: 1, 128>}, {transform_indices = @transform_7, window_bounds = array<i64: 1, 160, 128>}]} {
    %c160_i32 = arith.constant 160 : i32
    %0 = arith.muli %arg1, %c160_i32 : i32
    %c0_i32 = arith.constant 0 : i32
    %1 = tpu.memref_slice %arg2[%arg0, %0, %c0_i32] : memref<2x400x128xf32, #tpu.memory_space<any>> -> memref<1x240x128xf32, #tpu.memory_space<any>>
    %2 = tpu.memref_squeeze %1 : memref<1x240x128xf32, #tpu.memory_space<any>> -> memref<240x128xf32, #tpu.memory_space<any>>
    %c8_i32 = arith.constant 8 : i32
    %c0_i32_0 = arith.constant 0 : i32
    %3 = tpu.memref_slice %arg10[%c8_i32, %c0_i32_0] : memref<256x128xf32, #tpu.memory_space<vmem>> -> memref<240x128xf32, #tpu.memory_space<vmem>>
    tpu.enqueue_dma source(%2 : memref<240x128xf32, #tpu.memory_space<any>>) target(%3 : memref<240x128xf32, #tpu.memory_space<vmem>>) target_semaphore(%arg12 : memref<!tpu.dma_semaphore, #tpu.memory_space<semaphore_mem>>)
    %cst = arith.constant 0.000000e+00 : f32
    %4 = vector.broadcast %cst : f32 to vector<8x128xf32>
    %c0 = arith.constant 0 : index
    %c0_1 = arith.constant 0 : index
    %5 = vector.load %arg10[%c0, %c0_1] : memref<256x128xf32, #tpu.memory_space<vmem>>, vector<8x128xf32>
    tpu.vector_store %arg10[%c0, %c0_1], %4 {strides = array<i32>} : memref<256x128xf32, #tpu.memory_space<vmem>>, vector<8x128xf32>,
    %cst_2 = arith.constant 0.000000e+00 : f32
    %6 = vector.broadcast %cst_2 : f32 to vector<8x128xf32>
    %c248 = arith.constant 248 : index
    %c0_3 = arith.constant 0 : index
    %7 = vector.load %arg10[%c248, %c0_3] : memref<256x128xf32, #tpu.memory_space<vmem>>, vector<8x128xf32>
    tpu.vector_store %arg10[%c248, %c0_3], %6 {strides = array<i32>} : memref<256x128xf32, #tpu.memory_space<vmem>>, vector<8x128xf32>,
    %cst_4 = arith.constant 0.000000e+00 : f32
    %8 = vector.broadcast %cst_4 : f32 to vector<8x128xf32>
    %c0_5 = arith.constant 0 : index
    %c0_6 = arith.constant 0 : index
    %9 = vector.load %arg11[%c0_5, %c0_6] : memref<216x128xf32, #tpu.memory_space<vmem>>, vector<8x128xf32>
    tpu.vector_store %arg11[%c0_5, %c0_6], %8 {strides = array<i32>} : memref<216x128xf32, #tpu.memory_space<vmem>>, vector<8x128xf32>,
    %cst_7 = arith.constant 0.000000e+00 : f32
    %10 = vector.broadcast %cst_7 : f32 to vector<8x128xf32>
    %c208 = arith.constant 208 : index
    %c0_8 = arith.constant 0 : index
    %11 = vector.load %arg11[%c208, %c0_8] : memref<216x128xf32, #tpu.memory_space<vmem>>, vector<8x128xf32>
    tpu.vector_store %arg11[%c208, %c0_8], %10 {strides = array<i32>} : memref<216x128xf32, #tpu.memory_space<vmem>>, vector<8x128xf32>,
    %c0_i32_9 = arith.constant 0 : i32
    %12 = tpu.memref_slice %arg2[%arg0, %0, %c0_i32_9] : memref<2x400x128xf32, #tpu.memory_space<any>> -> memref<1x240x128xf32, #tpu.memory_space<any>>
    %13 = tpu.memref_squeeze %12 : memref<1x240x128xf32, #tpu.memory_space<any>> -> memref<240x128xf32, #tpu.memory_space<any>>
    %c8_i32_10 = arith.constant 8 : i32
    %c0_i32_11 = arith.constant 0 : i32
    %14 = tpu.memref_slice %arg10[%c8_i32_10, %c0_i32_11] : memref<256x128xf32, #tpu.memory_space<vmem>> -> memref<240x128xf32, #tpu.memory_space<vmem>>
    tpu.wait_dma2 semaphore(%arg12 : memref<!tpu.dma_semaphore, #tpu.memory_space<semaphore_mem>>) src(%13 : memref<240x128xf32, #tpu.memory_space<any>>) dst(%14 : memref<240x128xf32, #tpu.memory_space<vmem>>)
    %c7 = arith.constant 7 : index
    %c0_12 = arith.constant 0 : index
    %15 = vector.load %arg10[%c7, %c0_12] : memref<256x128xf32, #tpu.memory_space<vmem>>, vector<200x128xf32>
    %c8 = arith.constant 8 : index
    %c0_13 = arith.constant 0 : index
    %16 = vector.load %arg10[%c8, %c0_13] : memref<256x128xf32, #tpu.memory_space<vmem>>, vector<200x128xf32>
    %c9 = arith.constant 9 : index
    %c0_14 = arith.constant 0 : index
    %17 = vector.load %arg10[%c9, %c0_14] : memref<256x128xf32, #tpu.memory_space<vmem>>, vector<200x128xf32>
    %c27 = arith.constant 27 : index
    %c0_15 = arith.constant 0 : index
    %18 = vector.load %arg10[%c27, %c0_15] : memref<256x128xf32, #tpu.memory_space<vmem>>, vector<200x128xf32>
    %c28 = arith.constant 28 : index
    %c0_16 = arith.constant 0 : index
    %19 = vector.load %arg10[%c28, %c0_16] : memref<256x128xf32, #tpu.memory_space<vmem>>, vector<200x128xf32>
    %c29 = arith.constant 29 : index
    %c0_17 = arith.constant 0 : index
    %20 = vector.load %arg10[%c29, %c0_17] : memref<256x128xf32, #tpu.memory_space<vmem>>, vector<200x128xf32>
    %c47 = arith.constant 47 : index
    %c0_18 = arith.constant 0 : index
    %21 = vector.load %arg10[%c47, %c0_18] : memref<256x128xf32, #tpu.memory_space<vmem>>, vector<200x128xf32>
    %c48 = arith.constant 48 : index
    %c0_19 = arith.constant 0 : index
    %22 = vector.load %arg10[%c48, %c0_19] : memref<256x128xf32, #tpu.memory_space<vmem>>, vector<200x128xf32>
    %c49 = arith.constant 49 : index
    %c0_20 = arith.constant 0 : index
    %23 = vector.load %arg10[%c49, %c0_20] : memref<256x128xf32, #tpu.memory_space<vmem>>, vector<200x128xf32>
    %24 = tpu.concatenate %15, %16, %17, %18, %19, %20, %21, %22, %23 in 1 : vector<200x128xf32>, vector<200x128xf32>, vector<200x128xf32>, vector<200x128xf32>, vector<200x128xf32>, vector<200x128xf32>, vector<200x128xf32>, vector<200x128xf32>, vector<200x128xf32> -> vector<200x1152xf32>
    %c0_21 = arith.constant 0 : index
    %c0_22 = arith.constant 0 : index
    %25 = vector.load %arg3[%c0_21, %c0_22] : memref<1152x128xf32, #tpu.memory_space<vmem>>, vector<1152x128xf32>
    %cst_23 = arith.constant dense<0.000000e+00> : vector<200x128xf32>
    %26 = tpu.matmul %24, %25, %cst_23 {dimension_numbers = #tpu.dot_dimension_numbers<[1], [0], [0], [1], [0, 0, 1, 1], [], []>} : vector<200x1152xf32>, vector<1152x128xf32>, vector<200x128xf32> -> vector<200x128xf32>
    %c0_24 = arith.constant 0 : index
    %c0_25 = arith.constant 0 : index
    %27 = vector.load %arg4[%c0_24, %c0_25] : memref<1x128xf32, #tpu.memory_space<vmem>>, vector<1x128xf32>
    %28 = vector.broadcast %27 : vector<1x128xf32> to vector<200x128xf32>
    %29 = arith.mulf %26, %28 : vector<200x128xf32>
    %c0_26 = arith.constant 0 : index
    %c0_27 = arith.constant 0 : index
    %30 = vector.load %arg5[%c0_26, %c0_27] : memref<1x128xf32, #tpu.memory_space<vmem>>, vector<1x128xf32>
    %31 = vector.broadcast %30 : vector<1x128xf32> to vector<200x128xf32>
    %32 = arith.addf %29, %31 : vector<200x128xf32>
    %cst_28 = arith.constant 0.000000e+00 : f32
    %33 = vector.broadcast %cst_28 : f32 to vector<200x128xf32>
    %34 = arith.subf %33, %32 : vector<200x128xf32>
    %35 = math.exp %34 : vector<200x128xf32>
    %cst_29 = arith.constant 1.000000e+00 : f32
    %36 = vector.broadcast %cst_29 : f32 to vector<200x128xf32>
    %37 = arith.addf %36, %35 : vector<200x128xf32>
    %cst_30 = arith.constant 1.000000e+00 : f32
    %38 = vector.broadcast %cst_30 : f32 to vector<200x128xf32>
    %39 = arith.divf %38, %37 : vector<200x128xf32>
    %40 = arith.mulf %32, %39 : vector<200x128xf32>
    %c8_31 = arith.constant 8 : index
    %c0_32 = arith.constant 0 : index
    %41 = vector.load %arg11[%c8_31, %c0_32] : memref<216x128xf32, #tpu.memory_space<vmem>>, vector<200x128xf32>
    tpu.vector_store %arg11[%c8_31, %c0_32], %40 {strides = array<i32>} : memref<216x128xf32, #tpu.memory_space<vmem>>, vector<200x128xf32>,
    %cst_33 = arith.constant 0.000000e+00 : f32
    %42 = vector.broadcast %cst_33 : f32 to vector<1x128xf32>
    %c9_34 = arith.constant 9 : index
    %c0_35 = arith.constant 0 : index
    %43 = vector.load %arg11[%c9_34, %c0_35] : memref<216x128xf32, #tpu.memory_space<vmem>>, vector<1x128xf32>
    tpu.vector_store %arg11[%c9_34, %c0_35], %42 {strides = array<i32>} : memref<216x128xf32, #tpu.memory_space<vmem>>, vector<1x128xf32>,
    %c26 = arith.constant 26 : index
    %c0_36 = arith.constant 0 : index
    %44 = vector.load %arg11[%c26, %c0_36] : memref<216x128xf32, #tpu.memory_space<vmem>>, vector<1x128xf32>
    tpu.vector_store %arg11[%c26, %c0_36], %42 {strides = array<i32>} : memref<216x128xf32, #tpu.memory_space<vmem>>, vector<1x128xf32>,
    %c29_37 = arith.constant 29 : index
    %c0_38 = arith.constant 0 : index
    %45 = vector.load %arg11[%c29_37, %c0_38] : memref<216x128xf32, #tpu.memory_space<vmem>>, vector<1x128xf32>
    tpu.vector_store %arg11[%c29_37, %c0_38], %42 {strides = array<i32>} : memref<216x128xf32, #tpu.memory_space<vmem>>, vector<1x128xf32>,
    %c46 = arith.constant 46 : index
    %c0_39 = arith.constant 0 : index
    %46 = vector.load %arg11[%c46, %c0_39] : memref<216x128xf32, #tpu.memory_space<vmem>>, vector<1x128xf32>
    tpu.vector_store %arg11[%c46, %c0_39], %42 {strides = array<i32>} : memref<216x128xf32, #tpu.memory_space<vmem>>, vector<1x128xf32>,
    %c49_40 = arith.constant 49 : index
    %c0_41 = arith.constant 0 : index
    %47 = vector.load %arg11[%c49_40, %c0_41] : memref<216x128xf32, #tpu.memory_space<vmem>>, vector<1x128xf32>
    tpu.vector_store %arg11[%c49_40, %c0_41], %42 {strides = array<i32>} : memref<216x128xf32, #tpu.memory_space<vmem>>, vector<1x128xf32>,
    %c66 = arith.constant 66 : index
    %c0_42 = arith.constant 0 : index
    %48 = vector.load %arg11[%c66, %c0_42] : memref<216x128xf32, #tpu.memory_space<vmem>>, vector<1x128xf32>
    tpu.vector_store %arg11[%c66, %c0_42], %42 {strides = array<i32>} : memref<216x128xf32, #tpu.memory_space<vmem>>, vector<1x128xf32>,
    %c69 = arith.constant 69 : index
    %c0_43 = arith.constant 0 : index
    %49 = vector.load %arg11[%c69, %c0_43] : memref<216x128xf32, #tpu.memory_space<vmem>>, vector<1x128xf32>
    tpu.vector_store %arg11[%c69, %c0_43], %42 {strides = array<i32>} : memref<216x128xf32, #tpu.memory_space<vmem>>, vector<1x128xf32>,
    %c86 = arith.constant 86 : index
    %c0_44 = arith.constant 0 : index
    %50 = vector.load %arg11[%c86, %c0_44] : memref<216x128xf32, #tpu.memory_space<vmem>>, vector<1x128xf32>
    tpu.vector_store %arg11[%c86, %c0_44], %42 {strides = array<i32>} : memref<216x128xf32, #tpu.memory_space<vmem>>, vector<1x128xf32>,
    %c89 = arith.constant 89 : index
    %c0_45 = arith.constant 0 : index
    %51 = vector.load %arg11[%c89, %c0_45] : memref<216x128xf32, #tpu.memory_space<vmem>>, vector<1x128xf32>
    tpu.vector_store %arg11[%c89, %c0_45], %42 {strides = array<i32>} : memref<216x128xf32, #tpu.memory_space<vmem>>, vector<1x128xf32>,
    %c106 = arith.constant 106 : index
    %c0_46 = arith.constant 0 : index
    %52 = vector.load %arg11[%c106, %c0_46] : memref<216x128xf32, #tpu.memory_space<vmem>>, vector<1x128xf32>
    tpu.vector_store %arg11[%c106, %c0_46], %42 {strides = array<i32>} : memref<216x128xf32, #tpu.memory_space<vmem>>, vector<1x128xf32>,
    %c109 = arith.constant 109 : index
    %c0_47 = arith.constant 0 : index
    %53 = vector.load %arg11[%c109, %c0_47] : memref<216x128xf32, #tpu.memory_space<vmem>>, vector<1x128xf32>
    tpu.vector_store %arg11[%c109, %c0_47], %42 {strides = array<i32>} : memref<216x128xf32, #tpu.memory_space<vmem>>, vector<1x128xf32>,
    %c126 = arith.constant 126 : index
    %c0_48 = arith.constant 0 : index
    %54 = vector.load %arg11[%c126, %c0_48] : memref<216x128xf32, #tpu.memory_space<vmem>>, vector<1x128xf32>
    tpu.vector_store %arg11[%c126, %c0_48], %42 {strides = array<i32>} : memref<216x128xf32, #tpu.memory_space<vmem>>, vector<1x128xf32>,
    %c129 = arith.constant 129 : index
    %c0_49 = arith.constant 0 : index
    %55 = vector.load %arg11[%c129, %c0_49] : memref<216x128xf32, #tpu.memory_space<vmem>>, vector<1x128xf32>
    tpu.vector_store %arg11[%c129, %c0_49], %42 {strides = array<i32>} : memref<216x128xf32, #tpu.memory_space<vmem>>, vector<1x128xf32>,
    %c146 = arith.constant 146 : index
    %c0_50 = arith.constant 0 : index
    %56 = vector.load %arg11[%c146, %c0_50] : memref<216x128xf32, #tpu.memory_space<vmem>>, vector<1x128xf32>
    tpu.vector_store %arg11[%c146, %c0_50], %42 {strides = array<i32>} : memref<216x128xf32, #tpu.memory_space<vmem>>, vector<1x128xf32>,
    %c149 = arith.constant 149 : index
    %c0_51 = arith.constant 0 : index
    %57 = vector.load %arg11[%c149, %c0_51] : memref<216x128xf32, #tpu.memory_space<vmem>>, vector<1x128xf32>
    tpu.vector_store %arg11[%c149, %c0_51], %42 {strides = array<i32>} : memref<216x128xf32, #tpu.memory_space<vmem>>, vector<1x128xf32>,
    %c166 = arith.constant 166 : index
    %c0_52 = arith.constant 0 : index
    %58 = vector.load %arg11[%c166, %c0_52] : memref<216x128xf32, #tpu.memory_space<vmem>>, vector<1x128xf32>
    tpu.vector_store %arg11[%c166, %c0_52], %42 {strides = array<i32>} : memref<216x128xf32, #tpu.memory_space<vmem>>, vector<1x128xf32>,
    %c169 = arith.constant 169 : index
    %c0_53 = arith.constant 0 : index
    %59 = vector.load %arg11[%c169, %c0_53] : memref<216x128xf32, #tpu.memory_space<vmem>>, vector<1x128xf32>
    tpu.vector_store %arg11[%c169, %c0_53], %42 {strides = array<i32>} : memref<216x128xf32, #tpu.memory_space<vmem>>, vector<1x128xf32>,
    %c186 = arith.constant 186 : index
    %c0_54 = arith.constant 0 : index
    %60 = vector.load %arg11[%c186, %c0_54] : memref<216x128xf32, #tpu.memory_space<vmem>>, vector<1x128xf32>
    tpu.vector_store %arg11[%c186, %c0_54], %42 {strides = array<i32>} : memref<216x128xf32, #tpu.memory_space<vmem>>, vector<1x128xf32>,
    %c189 = arith.constant 189 : index
    %c0_55 = arith.constant 0 : index
    %61 = vector.load %arg11[%c189, %c0_55] : memref<216x128xf32, #tpu.memory_space<vmem>>, vector<1x128xf32>
    tpu.vector_store %arg11[%c189, %c0_55], %42 {strides = array<i32>} : memref<216x128xf32, #tpu.memory_space<vmem>>, vector<1x128xf32>,
    %c206 = arith.constant 206 : index
    %c0_56 = arith.constant 0 : index
    %62 = vector.load %arg11[%c206, %c0_56] : memref<216x128xf32, #tpu.memory_space<vmem>>, vector<1x128xf32>
    tpu.vector_store %arg11[%c206, %c0_56], %42 {strides = array<i32>} : memref<216x128xf32, #tpu.memory_space<vmem>>, vector<1x128xf32>,
    %c0_i32_57 = arith.constant 0 : i32
    %63 = arith.cmpi eq, %arg1, %c0_i32_57 : i32
    %64 = arith.extui %63 : i1 to i32
    %c0_i32_58 = arith.constant 0 : i32
    %65 = arith.cmpi ne, %64, %c0_i32_58 : i32
    scf.if %65 {
      %cst_93 = arith.constant 0.000000e+00 : f32
      %100 = vector.broadcast %cst_93 : f32 to vector<20x128xf32>
      %c8_94 = arith.constant 8 : index
      %c0_95 = arith.constant 0 : index
      %101 = vector.load %arg11[%c8_94, %c0_95] : memref<216x128xf32, #tpu.memory_space<vmem>>, vector<20x128xf32>
      tpu.vector_store %arg11[%c8_94, %c0_95], %100 {strides = array<i32>} : memref<216x128xf32, #tpu.memory_space<vmem>>, vector<20x128xf32>,
    } else {
    }
    %c1_i32 = arith.constant 1 : i32
    %66 = arith.cmpi eq, %arg1, %c1_i32 : i32
    %67 = arith.extui %66 : i1 to i32
    %c0_i32_59 = arith.constant 0 : i32
    %68 = arith.cmpi ne, %67, %c0_i32_59 : i32
    scf.if %68 {
      %cst_93 = arith.constant 0.000000e+00 : f32
      %100 = vector.broadcast %cst_93 : f32 to vector<20x128xf32>
      %c188 = arith.constant 188 : index
      %c0_94 = arith.constant 0 : index
      %101 = vector.load %arg11[%c188, %c0_94] : memref<216x128xf32, #tpu.memory_space<vmem>>, vector<20x128xf32>
      tpu.vector_store %arg11[%c188, %c0_94], %100 {strides = array<i32>} : memref<216x128xf32, #tpu.memory_space<vmem>>, vector<20x128xf32>,
    } else {
    }
    %c7_60 = arith.constant 7 : index
    %c0_61 = arith.constant 0 : index
    %69 = vector.load %arg11[%c7_60, %c0_61] : memref<216x128xf32, #tpu.memory_space<vmem>>, vector<160x128xf32>
    %c8_62 = arith.constant 8 : index
    %c0_63 = arith.constant 0 : index
    %70 = vector.load %arg11[%c8_62, %c0_63] : memref<216x128xf32, #tpu.memory_space<vmem>>, vector<160x128xf32>
    %c9_64 = arith.constant 9 : index
    %c0_65 = arith.constant 0 : index
    %71 = vector.load %arg11[%c9_64, %c0_65] : memref<216x128xf32, #tpu.memory_space<vmem>>, vector<160x128xf32>
    %c27_66 = arith.constant 27 : index
    %c0_67 = arith.constant 0 : index
    %72 = vector.load %arg11[%c27_66, %c0_67] : memref<216x128xf32, #tpu.memory_space<vmem>>, vector<160x128xf32>
    %c28_68 = arith.constant 28 : index
    %c0_69 = arith.constant 0 : index
    %73 = vector.load %arg11[%c28_68, %c0_69] : memref<216x128xf32, #tpu.memory_space<vmem>>, vector<160x128xf32>
    %c29_70 = arith.constant 29 : index
    %c0_71 = arith.constant 0 : index
    %74 = vector.load %arg11[%c29_70, %c0_71] : memref<216x128xf32, #tpu.memory_space<vmem>>, vector<160x128xf32>
    %c47_72 = arith.constant 47 : index
    %c0_73 = arith.constant 0 : index
    %75 = vector.load %arg11[%c47_72, %c0_73] : memref<216x128xf32, #tpu.memory_space<vmem>>, vector<160x128xf32>
    %c48_74 = arith.constant 48 : index
    %c0_75 = arith.constant 0 : index
    %76 = vector.load %arg11[%c48_74, %c0_75] : memref<216x128xf32, #tpu.memory_space<vmem>>, vector<160x128xf32>
    %c49_76 = arith.constant 49 : index
    %c0_77 = arith.constant 0 : index
    %77 = vector.load %arg11[%c49_76, %c0_77] : memref<216x128xf32, #tpu.memory_space<vmem>>, vector<160x128xf32>
    %78 = tpu.concatenate %69, %70, %71, %72, %73, %74, %75, %76, %77 in 1 : vector<160x128xf32>, vector<160x128xf32>, vector<160x128xf32>, vector<160x128xf32>, vector<160x128xf32>, vector<160x128xf32>, vector<160x128xf32>, vector<160x128xf32>, vector<160x128xf32> -> vector<160x1152xf32>
    %c0_78 = arith.constant 0 : index
    %c0_79 = arith.constant 0 : index
    %79 = vector.load %arg6[%c0_78, %c0_79] : memref<1152x128xf32, #tpu.memory_space<vmem>>, vector<1152x128xf32>
    %cst_80 = arith.constant dense<0.000000e+00> : vector<160x128xf32>
    %80 = tpu.matmul %78, %79, %cst_80 {dimension_numbers = #tpu.dot_dimension_numbers<[1], [0], [0], [1], [0, 0, 1, 1], [], []>} : vector<160x1152xf32>, vector<1152x128xf32>, vector<160x128xf32> -> vector<160x128xf32>
    %c0_81 = arith.constant 0 : index
    %c0_82 = arith.constant 0 : index
    %81 = vector.load %arg7[%c0_81, %c0_82] : memref<1x128xf32, #tpu.memory_space<vmem>>, vector<1x128xf32>
    %82 = vector.broadcast %81 : vector<1x128xf32> to vector<160x128xf32>
    %83 = arith.mulf %80, %82 : vector<160x128xf32>
    %c0_83 = arith.constant 0 : index
    %c0_84 = arith.constant 0 : index
    %84 = vector.load %arg8[%c0_83, %c0_84] : memref<1x128xf32, #tpu.memory_space<vmem>>, vector<1x128xf32>
    %85 = vector.broadcast %84 : vector<1x128xf32> to vector<160x128xf32>
    %86 = arith.addf %83, %85 : vector<160x128xf32>
    %cst_85 = arith.constant 0.000000e+00 : f32
    %87 = vector.broadcast %cst_85 : f32 to vector<160x128xf32>
    %88 = arith.subf %87, %86 : vector<160x128xf32>
    %89 = math.exp %88 : vector<160x128xf32>
    %cst_86 = arith.constant 1.000000e+00 : f32
    %90 = vector.broadcast %cst_86 : f32 to vector<160x128xf32>
    %91 = arith.addf %90, %89 : vector<160x128xf32>
    %cst_87 = arith.constant 1.000000e+00 : f32
    %92 = vector.broadcast %cst_87 : f32 to vector<160x128xf32>
    %93 = arith.divf %92, %91 : vector<160x128xf32>
    %94 = arith.mulf %86, %93 : vector<160x128xf32>
    %c48_88 = arith.constant 48 : index
    %c0_89 = arith.constant 0 : index
    %95 = vector.load %arg10[%c48_88, %c0_89] : memref<256x128xf32, #tpu.memory_space<vmem>>, vector<160x128xf32>
    %96 = arith.addf %94, %95 : vector<160x128xf32>
    %c0_90 = arith.constant 0 : index
    %c0_91 = arith.constant 0 : index
    %c0_92 = arith.constant 0 : index
    %97 = vector.load %arg9[%c0_90, %c0_91, %c0_92] : memref<1x160x128xf32, #tpu.memory_space<vmem>>, vector<1x160x128xf32>
    %98 = vector.shape_cast %97 : vector<1x160x128xf32> to vector<160x128xf32>
    %99 = vector.shape_cast %96 : vector<160x128xf32> to vector<1x160x128xf32>
    tpu.vector_store %arg9[%c0_90, %c0_91, %c0_92], %99 {strides = array<i32>} : memref<1x160x128xf32, #tpu.memory_space<vmem>>, vector<1x160x128xf32>,
    return
  }
  func.func @transform_1(%arg0: i32, %arg1: i32) -> (i32, i32) {
    %c0_i32 = arith.constant 0 : i32
    %c0_i32_0 = arith.constant 0 : i32
    %c0_i32_1 = arith.constant 0 : i32
    return %c0_i32, %c0_i32_0 : i32, i32
  }
  func.func @transform_2(%arg0: i32, %arg1: i32) -> (i32, i32) {
    %c0_i32 = arith.constant 0 : i32
    %c0_i32_0 = arith.constant 0 : i32
    %c0_i32_1 = arith.constant 0 : i32
    return %c0_i32, %c0_i32_0 : i32, i32
  }
  func.func @transform_3(%arg0: i32, %arg1: i32) -> (i32, i32) {
    %c0_i32 = arith.constant 0 : i32
    %c0_i32_0 = arith.constant 0 : i32
    %c0_i32_1 = arith.constant 0 : i32
    return %c0_i32, %c0_i32_0 : i32, i32
  }
  func.func @transform_4(%arg0: i32, %arg1: i32) -> (i32, i32) {
    %c0_i32 = arith.constant 0 : i32
    %c0_i32_0 = arith.constant 0 : i32
    %c0_i32_1 = arith.constant 0 : i32
    return %c0_i32, %c0_i32_0 : i32, i32
  }
  func.func @transform_5(%arg0: i32, %arg1: i32) -> (i32, i32) {
    %c0_i32 = arith.constant 0 : i32
    %c0_i32_0 = arith.constant 0 : i32
    %c0_i32_1 = arith.constant 0 : i32
    return %c0_i32, %c0_i32_0 : i32, i32
  }
  func.func @transform_6(%arg0: i32, %arg1: i32) -> (i32, i32) {
    %c0_i32 = arith.constant 0 : i32
    %c0_i32_0 = arith.constant 0 : i32
    %c0_i32_1 = arith.constant 0 : i32
    return %c0_i32, %c0_i32_0 : i32, i32
  }
  func.func @transform_7(%arg0: i32, %arg1: i32) -> (i32, i32, i32) {
    %c0_i32 = arith.constant 0 : i32
    %c0_i32_0 = arith.constant 0 : i32
    return %arg0, %arg1, %c0_i32 : i32, i32, i32
  }
}

</mosaic_0001>

<llo_original>
// kernel: tpu_custom_call.1
$region0: #{tpu_custom_call.1}
  #allocation0 [shape = 'u32[]', space=smem, size = 0x4, offset = 0x4, fixed_abs, tag = 'smem constant byte address 0x4 - core index']
  #allocation1 [shape = 'u32[72,128]{1,0:T(1,128)}', space=vmem, size = 0x9000, scoped, tag = 'internal scratch']
  #allocation2 [shape = 'f32[256,128]{1,0:T(8,128)}', space=vmem, size = 0x20000, scoped, tag = 'scratch operand']
  #allocation3 [shape = 'f32[216,128]{1,0:T(8,128)}', space=vmem, size = 0x1b000, scoped, tag = 'scratch operand']
  #allocation4 [shape = 's32[1]{0}', space=sflag, size = 0x4, scoped, tag = 'scratch operand']
  #allocation11 [shape = 's32[]', space=sflag, size = 0x4, offset = 0, fixed_abs, tag = 'sflag constant byte address 0x0 - dummy sync flag']
  #allocation12 [shape = 's32[]', space=sflag, size = 0x4, offset = 0, fixed_abs, tag = 'sflag constant byte address 0x0 - dummy sync flag']
  #allocation13 [shape = 'u32[]', space=smem, size = 0x4, offset = 0x44, fixed_abs, tag = 'smem constant byte address 0x44 - assertion arg 0']
  #allocation14 [shape = 'u32[]', space=smem, size = 0x4, offset = 0x48, fixed_abs, tag = 'smem constant byte address 0x48 - assertion arg 1']
  %s0 = inlined_call_operand.hbm [shape: f32[2,400,128], index: 0, kind: input, shape index: {}]
  %s1 = inlined_call_operand.hbm [shape: f32[1152,128], index: 1, kind: input, shape index: {}]
  %s2 = inlined_call_operand.vmem [shape: f32[1,128], index: 2, kind: input, shape index: {}]
  %s3 = inlined_call_operand.vmem [shape: f32[1,128], index: 3, kind: input, shape index: {}]
  %s4 = inlined_call_operand.hbm [shape: f32[1152,128], index: 4, kind: input, shape index: {}]
  %s5 = inlined_call_operand.vmem [shape: f32[1,128], index: 5, kind: input, shape index: {}]
  %s6 = inlined_call_operand.vmem [shape: f32[1,128], index: 6, kind: input, shape index: {}]
  %s7 = inlined_call_operand.hbm [shape: f32[2,320,128], index: 7, kind: output, shape index: {}]
  %s8 = sld [smem:[#allocation0]]
  $region77: #{tpu_custom_call.1} parent=0
    _
  %s10 = ssub.s32 1, %s8
  %s11 = scalar_select 0, %s10, %s8
  $region1: #{tpu_custom_call.1} parent=0
    #allocation5 [shape = 'u8[589824]{0}', space=vmem, size = 0x90000, scoped, tag = 'input window, operand 1, single buffered']
    #allocation6 [shape = 's32[2]{0}', space=sflag, size = 0x8, scoped, tag = 'scoped memory for tpu_custom_call.1']
    #allocation7 [shape = 's32[2]{0}', space=sflag, size = 0x8, scoped, tag = 'scoped memory for tpu_custom_call.1']
    #allocation8 [shape = 'u8[589824]{0}', space=vmem, size = 0x90000, scoped, tag = 'input window, operand 4, single buffered']
    #allocation9 [shape = 's32[1]{0}', space=sflag, size = 0x4, scoped, tag = 'scoped memory for tpu_custom_call.1']
    #allocation10 [shape = 'u8[163840]{0}', space=vmem, size = 0x28000, scoped, tag = 'output window, operand 0']
    %12 = vsyncpa [#allocation6], 0
    %13 = vsyncpa [#allocation9], 0
    %14 = vsyncpa [#allocation7], 0
    %s15 = scalar_lea.sflag [#allocation7], 1
    %16 = vsyncpa %s15, 0
    loop: start=0, step=1, limit=6
    $region2: #{tpu_custom_call.1} parent=1 // loop_pre_header
      _
    $region3: #{tpu_custom_call.1} parent=1 // loop_header
      %s18 = sphi 0, %s22
      %p19 = scmp.ge.s32.totalorder %s18, 6
      %s25 = sphi 0, %s37
      %s26 = sphi 0, %s33
      %s27 = sphi 0, %s25
      %s28 = sphi 0, %s26
      %s29 = sphi 0, %s27
      %s30 = sphi 0, %s28
      %s38 = sphi 0, %s38
      %s40 = sphi 0, %s38
      %s41 = sphi 0, %s40
      %s55 = sphi 0, %s41
      %s59 = sphi 0, %s59
      %s61 = sphi 0, %s59
      %s62 = sphi 0, %s61
      %s76 = sphi 0, %s62
      %s80 = sphi 0, %s80
      %s82 = sphi 0, %s80
      %s83 = sphi 0, %s82
      %s97 = sphi 0, %s83
      %s101 = sphi 0, %s101
      %s103 = sphi 0, %s101
      %s104 = sphi 0, %s103
      %s118 = sphi 0, %s104
      %s122 = sphi 0, %s122
      %s124 = sphi 0, %s122
      %s125 = sphi 0, %s124
      %s139 = sphi 0, %s125
      %s143 = sphi 0, %s143
      %s145 = sphi 0, %s143
      %s146 = sphi 0, %s145
      %s160 = sphi 0, %s146
      %s168 = sphi 0, %s170
      %s171 = sphi 0, %s168
      %s172 = sphi 0, %s171
      %s188 = sphi 0, %s172
    $region4: #{tpu_custom_call.1} parent=1 // loop_header_branch
      %21 = sbr.rel (%p19) target = $region8
    $region5: #{tpu_custom_call.1} parent=1 // loop_body
      %s23 = ssub.s32 %s18, 1
      %s24 = ssub.s32 %s18, 2
      %s31 = sadd.s32 1, %s26
      %p32 = scmp.ge.s32.totalorder %s31, 2
      %s33 = scalar_select %p32, 0, %s31
      %s34 = sadd.s32 1, %s25
      %s35 = scalar_select %p32, %s34, %s25
      %p36 = scmp.ge.s32.totalorder %s35, 2
      %s37 = scalar_select %p36, 0, %s35
      %s39 = sadd.s32 %s38, 1
      %p42 = scmp.eq.s32.totalorder %s18, 3
      %p43 = scmp.ne.s32.totalorder %s38, %s40
      %p44 = scmp.eq.s32.totalorder %s18, 0
      %p45 = por %p43, %p44
      %p46 = scmp.ne.s32.totalorder %s38, %s40
      %p47 = scmp.eq.s32.totalorder %s23, 3
      %p48 = por %p46, %p47
      %p49 = scmp.ne.s32.totalorder %s40, %s41
      %p50 = scmp.eq.s32.totalorder %s23, 0
      %p51 = por %p49, %p50
      %p52 = scmp.ne.s32.totalorder %s40, %s41
      %p53 = scmp.eq.s32.totalorder %s24, 3
      %p54 = por %p52, %p53
      %p56 = scmp.ne.s32.totalorder %s41, %s55
      %p57 = scmp.eq.s32.totalorder %s24, 0
      %p58 = por %p56, %p57
      %s60 = sadd.s32 %s59, 1
      %p63 = scmp.eq.s32.totalorder %s18, 3
      %p64 = scmp.ne.s32.totalorder %s59, %s61
      %p65 = scmp.eq.s32.totalorder %s18, 0
      %p66 = por %p64, %p65
      %p67 = scmp.ne.s32.totalorder %s59, %s61
      %p68 = scmp.eq.s32.totalorder %s23, 3
      %p69 = por %p67, %p68
      %p70 = scmp.ne.s32.totalorder %s61, %s62
      %p71 = scmp.eq.s32.totalorder %s23, 0
      %p72 = por %p70, %p71
      %p73 = scmp.ne.s32.totalorder %s61, %s62
      %p74 = scmp.eq.s32.totalorder %s24, 3
      %p75 = por %p73, %p74
      %p77 = scmp.ne.s32.totalorder %s62, %s76
      %p78 = scmp.eq.s32.totalorder %s24, 0
      %p79 = por %p77, %p78
      %s81 = sadd.s32 %s80, 1
      %p84 = scmp.eq.s32.totalorder %s18, 3
      %p85 = scmp.ne.s32.totalorder %s80, %s82
      %p86 = scmp.eq.s32.totalorder %s18, 0
      %p87 = por %p85, %p86
      %p88 = scmp.ne.s32.totalorder %s80, %s82
      %p89 = scmp.eq.s32.totalorder %s23, 3
      %p90 = por %p88, %p89
      %p91 = scmp.ne.s32.totalorder %s82, %s83
      %p92 = scmp.eq.s32.totalorder %s23, 0
      %p93 = por %p91, %p92
      %p94 = scmp.ne.s32.totalorder %s82, %s83
      %p95 = scmp.eq.s32.totalorder %s24, 3
      %p96 = por %p94, %p95
      %p98 = scmp.ne.s32.totalorder %s83, %s97
      %p99 = scmp.eq.s32.totalorder %s24, 0
      %p100 = por %p98, %p99
      %s102 = sadd.s32 %s101, 1
      %p105 = scmp.eq.s32.totalorder %s18, 3
      %p106 = scmp.ne.s32.totalorder %s101, %s103
      %p107 = scmp.eq.s32.totalorder %s18, 0
      %p108 = por %p106, %p107
      %p109 = scmp.ne.s32.totalorder %s101, %s103
      %p110 = scmp.eq.s32.totalorder %s23, 3
      %p111 = por %p109, %p110
      %p112 = scmp.ne.s32.totalorder %s103, %s104
      %p113 = scmp.eq.s32.totalorder %s23, 0
      %p114 = por %p112, %p113
      %p115 = scmp.ne.s32.totalorder %s103, %s104
      %p116 = scmp.eq.s32.totalorder %s24, 3
      %p117 = por %p115, %p116
      %p119 = scmp.ne.s32.totalorder %s104, %s118
      %p120 = scmp.eq.s32.totalorder %s24, 0
      %p121 = por %p119, %p120
      %s123 = sadd.s32 %s122, 1
      %p126 = scmp.eq.s32.totalorder %s18, 3
      %p127 = scmp.ne.s32.totalorder %s122, %s124
      %p128 = scmp.eq.s32.totalorder %s18, 0
      %p129 = por %p127, %p128
      %p130 = scmp.ne.s32.totalorder %s122, %s124
      %p131 = scmp.eq.s32.totalorder %s23, 3
      %p132 = por %p130, %p131
      %p133 = scmp.ne.s32.totalorder %s124, %s125
      %p134 = scmp.eq.s32.totalorder %s23, 0
      %p135 = por %p133, %p134
      %p136 = scmp.ne.s32.totalorder %s124, %s125
      %p137 = scmp.eq.s32.totalorder %s24, 3
      %p138 = por %p136, %p137
      %p140 = scmp.ne.s32.totalorder %s125, %s139
      %p141 = scmp.eq.s32.totalorder %s24, 0
      %p142 = por %p140, %p141
      %s144 = sadd.s32 %s143, 1
      %p147 = scmp.eq.s32.totalorder %s18, 3
      %p148 = scmp.ne.s32.totalorder %s143, %s145
      %p149 = scmp.eq.s32.totalorder %s18, 0
      %p150 = por %p148, %p149
      %p151 = scmp.ne.s32.totalorder %s143, %s145
      %p152 = scmp.eq.s32.totalorder %s23, 3
      %p153 = por %p151, %p152
      %p154 = scmp.ne.s32.totalorder %s145, %s146
      %p155 = scmp.eq.s32.totalorder %s23, 0
      %p156 = por %p154, %p155
      %p157 = scmp.ne.s32.totalorder %s145, %s146
      %p158 = scmp.eq.s32.totalorder %s24, 3
      %p159 = por %p157, %p158
      %p161 = scmp.ne.s32.totalorder %s146, %s160
      %p162 = scmp.eq.s32.totalorder %s24, 0
      %p163 = por %p161, %p162
      %s164 = ssub.s32 %s25, %s37
      %s165 = ssub.s32 %s26, %s33
      %s166 = sor.u32 %s164, %s165
      %p167 = scmp.eq.s32.totalorder %s166, 0
      %s169 = sadd.s32 %s168, 1
      %s170 = scalar_select %p167, %s168, %s169
      %p173 = pneg %p167
      %p174 = scmp.eq.s32.totalorder %s18, 3
      %p175 = por %p173, %p174
      %p176 = scmp.ne.s32.totalorder %s168, %s171
      %p177 = scmp.eq.s32.totalorder %s18, 0
      %p178 = por %p176, %p177
      %p179 = scmp.ne.s32.totalorder %s168, %s171
      %p180 = scmp.eq.s32.totalorder %s23, 3
      %p181 = por %p179, %p180
      %p182 = scmp.ne.s32.totalorder %s171, %s172
      %p183 = scmp.eq.s32.totalorder %s23, 0
      %p184 = por %p182, %p183
      %p185 = scmp.ne.s32.totalorder %s171, %s172
      %p186 = scmp.eq.s32.totalorder %s24, 3
      %p187 = por %p185, %p186
      %p189 = scmp.ne.s32.totalorder %s172, %s188
      %p190 = scmp.eq.s32.totalorder %s24, 0
      %p191 = por %p189, %p190
      %p192 = scmp.le.s32.totalorder 1, %s18
      %p193 = scmp.lt.s32.totalorder %s18, 5
      %p194 = pnand %p192, %p193
      %p195 = pneg %p194
      // Predicated region
      $region9: #{tpu_custom_call.1} parent=5 // pred_check
        _
      $region10: #{tpu_custom_call.1} parent=5 // pred_check_branch
        %197 = sbr.rel (%p194) target = $region12
      $region11: #{tpu_custom_call.1} parent=5 // pred_region
        %s198 = ssub.s32 %s18, 1
        // Predicated region
        $region13: #{tpu_custom_call.1} parent=11 // pred_check
          %p199 = pneg %p51
        $region14: #{tpu_custom_call.1} parent=11 // pred_check_branch
          %201 = sbr.rel (%p199) target = $region16
        $region15: #{tpu_custom_call.1} parent=11 // pred_region
          %203 = vsyncadd [#allocation6], 0
          %s204 = sshll.u32 %s1, 4
          %s205 = int_to_ptr.hbm [resolvable:$true] %s204
          %s206 = sshll.u32 [#allocation5], 4
          %s207 = int_to_ptr.vmem [resolvable:$true] %s206
          %212 = dma.hbm_to_vmem [thread:$0]  %s205, 18432, %s207, [#allocation6], 128, 128, 8
        $region16: #{tpu_custom_call.1} parent=11 // pred_fallthru
          _
        // Predicated region
        $region17: #{tpu_custom_call.1} parent=11 // pred_check
          %p213 = pneg %p72
        $region18: #{tpu_custom_call.1} parent=11 // pred_check_branch
          %215 = sbr.rel (%p213) target = $region20
        $region19: #{tpu_custom_call.1} parent=11 // pred_region
          _
        $region20: #{tpu_custom_call.1} parent=11 // pred_fallthru
          _
        // Predicated region
        $region21: #{tpu_custom_call.1} parent=11 // pred_check
          %p216 = pneg %p93
        $region22: #{tpu_custom_call.1} parent=11 // pred_check_branch
          %218 = sbr.rel (%p216) target = $region24
        $region23: #{tpu_custom_call.1} parent=11 // pred_region
          _
        $region24: #{tpu_custom_call.1} parent=11 // pred_fallthru
          _
        // Predicated region
        $region25: #{tpu_custom_call.1} parent=11 // pred_check
          %p219 = pneg %p114
        $region26: #{tpu_custom_call.1} parent=11 // pred_check_branch
          %221 = sbr.rel (%p219) target = $region28
        $region27: #{tpu_custom_call.1} parent=11 // pred_region
          %223 = vsyncadd [#allocation9], 0
          %s224 = sshll.u32 %s4, 4
          %s225 = int_to_ptr.hbm [resolvable:$true] %s224
          %s226 = sshll.u32 [#allocation8], 4
          %s227 = int_to_ptr.vmem [resolvable:$true] %s226
          %232 = dma.hbm_to_vmem [thread:$0]  %s225, 18432, %s227, [#allocation9], 128, 128, 8
        $region28: #{tpu_custom_call.1} parent=11 // pred_fallthru
          _
        // Predicated region
        $region29: #{tpu_custom_call.1} parent=11 // pred_check
          %p233 = pneg %p135
        $region30: #{tpu_custom_call.1} parent=11 // pred_check_branch
          %235 = sbr.rel (%p233) target = $region32
        $region31: #{tpu_custom_call.1} parent=11 // pred_region
          _
        $region32: #{tpu_custom_call.1} parent=11 // pred_fallthru
          _
        // Predicated region
        $region33: #{tpu_custom_call.1} parent=11 // pred_check
          %p236 = pneg %p156
        $region34: #{tpu_custom_call.1} parent=11 // pred_check_branch
          %238 = sbr.rel (%p236) target = $region36
        $region35: #{tpu_custom_call.1} parent=11 // pred_region
          _
        $region36: #{tpu_custom_call.1} parent=11 // pred_fallthru
          _
      $region12: #{tpu_custom_call.1} parent=5 // pred_fallthru
        _
      %p239 = scmp.lt.s32.totalorder %s18, 4
      // Predicated region
      $region37: #{tpu_custom_call.1} parent=5 // pred_check
        %p240 = pneg %p239
      $region38: #{tpu_custom_call.1} parent=5 // pred_check_branch
        %242 = sbr.rel (%p240) target = $region40
      $region39: #{tpu_custom_call.1} parent=5 // pred_region
        _
      $region40: #{tpu_custom_call.1} parent=5 // pred_fallthru
        _
      %p243 = scmp.le.s32.totalorder 1, %s18
      %p244 = scmp.lt.s32.totalorder %s18, 5
      %p245 = pnand %p243, %p244
      %p246 = pneg %p245
      // Predicated region
      $region41: #{tpu_custom_call.1} parent=5 // pred_check
        _
      $region42: #{tpu_custom_call.1} parent=5 // pred_check_branch
        %248 = sbr.rel (%p245) target = $region44
      $region43: #{tpu_custom_call.1} parent=5 // pred_region
        %s249 = ssub.s32 %s18, 1
        // Predicated region
        $region45: #{tpu_custom_call.1} parent=43 // pred_check
          %p250 = pneg %p51
        $region46: #{tpu_custom_call.1} parent=43 // pred_check_branch
          %252 = sbr.rel (%p250) target = $region48
        $region47: #{tpu_custom_call.1} parent=43 // pred_region
          %254 = dma.done [#allocation6], 18432
        $region48: #{tpu_custom_call.1} parent=43 // pred_fallthru
          _
        // Predicated region
        $region49: #{tpu_custom_call.1} parent=43 // pred_check
          %p255 = pneg %p114
        $region50: #{tpu_custom_call.1} parent=43 // pred_check_branch
          %257 = sbr.rel (%p255) target = $region52
        $region51: #{tpu_custom_call.1} parent=43 // pred_region
          %259 = dma.done [#allocation9], 18432
        $region52: #{tpu_custom_call.1} parent=43 // pred_fallthru
          _
        %p260 = pneg %p51
        %p261 = pneg %p48
        %p262 = pneg %p72
        %p263 = pneg %p69
        %p264 = pneg %p93
        %p265 = pneg %p90
        %p266 = pneg %p114
        %p267 = pneg %p111
        %p268 = pneg %p135
        %p269 = pneg %p132
        %p270 = pneg %p156
        %p271 = pneg %p153
        %p272 = pneg %p184
        %p273 = pneg %p181
        %s274 = sand.u32 %s171, 1
        %s275 = scalar_lea.sflag [#allocation7], %s274
        %s276 = sand.u32 %s171, 1
        %s277 = smul.addr %s276, 160
        %s278 = scalar_lea.vmem [#allocation10], %s277
        %s279 = smul.u32 20, %s28
        %s280 = smul.u32 %s28, 160
        %s281 = smul.u32 %s27, 400
        %s282 = sadd.s32 %s280, %s281
        %s283 = scalar_lea.hbm %s0, %s282
        %s284 = scalar_lea.vmem [#allocation2], 8
        // Predicated region
        $region53: #{tpu_custom_call.1} parent=43 // pred_check
          _
        $region54: #{tpu_custom_call.1} parent=43 // pred_check_branch
          %286 = sbr.rel target = $region56
        $region55: #{tpu_custom_call.1} parent=43 // pred_region
          %287 = sst [smem:[#allocation13]] [#allocation12]
          %288 = sst [smem:[#allocation14]] [#allocation11]
        $region56: #{tpu_custom_call.1} parent=43 // pred_fallthru
          _
        %290 = shalt.err (0)
        %s292 = sshll.u32 %s283, 4
        %s293 = int_to_ptr.hbm [resolvable:$true] %s292
        %s294 = sshll.u32 %s284, 4
        %s295 = int_to_ptr.vmem [resolvable:$true] %s294
        %297 = dma.hbm_to_vmem [thread:$0]  %s293, 3840, %s295, [#allocation4]
        %298 = vst [vmem:[#allocation2] sm:$0xff] 0.0
        %299 = vst [vmem:[#allocation2 + $0xf8] sm:$0xff] 0.0
        %300 = vst [vmem:[#allocation3] sm:$0xff] 0.0
        %301 = vst [vmem:[#allocation3 + $0xd0] sm:$0xff] 0.0
        %s302 = smul.u32 240, 1
        %s303 = sshll.u32 %s302, 4
        %304 = dma.done [#allocation4], %s303
        %v305 = vld [vmem:[#allocation2 + $0x7] sm:$0xff]
        %v306 = vld [vmem:[#allocation2 + $0xf] sm:$0xff]
        %v307 = vld [vmem:[#allocation2 + $0x17] sm:$0xff]
        %v308 = vld [vmem:[#allocation2 + $0x1f] sm:$0xff]
        %v309 = vld [vmem:[#allocation2 + $0x27] sm:$0xff]
        %v310 = vld [vmem:[#allocation2 + $0x2f] sm:$0xff]
        %v311 = vld [vmem:[#allocation2 + $0x37] sm:$0xff]
        %v312 = vld [vmem:[#allocation2 + $0x3f] sm:$0xff]
        %v313 = vld [vmem:[#allocation2 + $0x47] sm:$0xff]
        %v314 = vld [vmem:[#allocation2 + $0x4f] sm:$0xff]
        %v315 = vld [vmem:[#allocation2 + $0x57] sm:$0xff]
        %v316 = vld [vmem:[#allocation2 + $0x5f] sm:$0xff]
        %v317 = vld [vmem:[#allocation2 + $0x67] sm:$0xff]
        %v318 = vld [vmem:[#allocation2 + $0x6f] sm:$0xff]
        %v319 = vld [vmem:[#allocation2 + $0x77] sm:$0xff]
        %v320 = vld [vmem:[#allocation2 + $0x7f] sm:$0xff]
        %v321 = vld [vmem:[#allocation2 + $0x87] sm:$0xff]
        %v322 = vld [vmem:[#allocation2 + $0x8f] sm:$0xff]
        %v323 = vld [vmem:[#allocation2 + $0x97] sm:$0xff]
        %v324 = vld [vmem:[#allocation2 + $0x9f] sm:$0xff]
        %v325 = vld [vmem:[#allocation2 + $0xa7] sm:$0xff]
        %v326 = vld [vmem:[#allocation2 + $0xaf] sm:$0xff]
        %v327 = vld [vmem:[#allocation2 + $0xb7] sm:$0xff]
        %v328 = vld [vmem:[#allocation2 + $0xbf] sm:$0xff]
        %v329 = vld [vmem:[#allocation2 + $0xc7] sm:$0xff]
        %v330 = vld [vmem:[#allocation2 + $0x8] sm:$0xff]
        %v331 = vld [vmem:[#allocation2 + $0x10] sm:$0xff]
        %v332 = vld [vmem:[#allocation2 + $0x18] sm:$0xff]
        %v333 = vld [vmem:[#allocation2 + $0x20] sm:$0xff]
        %v334 = vld [vmem:[#allocation2 + $0x28] sm:$0xff]
        %v335 = vld [vmem:[#allocation2 + $0x30] sm:$0xff]
        %v336 = vld [vmem:[#allocation2 + $0x38] sm:$0xff]
        %v337 = vld [vmem:[#allocation2 + $0x40] sm:$0xff]
        %v338 = vld [vmem:[#allocation2 + $0x48] sm:$0xff]
        %v339 = vld [vmem:[#allocation2 + $0x50] sm:$0xff]
        %v340 = vld [vmem:[#allocation2 + $0x58] sm:$0xff]
        %v341 = vld [vmem:[#allocation2 + $0x60] sm:$0xff]
        %v342 = vld [vmem:[#allocation2 + $0x68] sm:$0xff]
        %v343 = vld [vmem:[#allocation2 + $0x70] sm:$0xff]
        %v344 = vld [vmem:[#allocation2 + $0x78] sm:$0xff]
        %v345 = vld [vmem:[#allocation2 + $0x80] sm:$0xff]
        %v346 = vld [vmem:[#allocation2 + $0x88] sm:$0xff]
        %v347 = vld [vmem:[#allocation2 + $0x90] sm:$0xff]
        %v348 = vld [vmem:[#allocation2 + $0x98] sm:$0xff]
        %v349 = vld [vmem:[#allocation2 + $0xa0] sm:$0xff]
        %v350 = vld [vmem:[#allocation2 + $0xa8] sm:$0xff]
        %v351 = vld [vmem:[#allocation2 + $0xb0] sm:$0xff]
        %v352 = vld [vmem:[#allocation2 + $0xb8] sm:$0xff]
        %v353 = vld [vmem:[#allocation2 + $0xc0] sm:$0xff]
        %v354 = vld [vmem:[#allocation2 + $0xc8] sm:$0xff]
        %v355 = vld [vmem:[#allocation2 + $0x9] sm:$0xff]
        %v356 = vld [vmem:[#allocation2 + $0x11] sm:$0xff]
        %v357 = vld [vmem:[#allocation2 + $0x19] sm:$0xff]
        %v358 = vld [vmem:[#allocation2 + $0x21] sm:$0xff]
        %v359 = vld [vmem:[#allocation2 + $0x29] sm:$0xff]
        %v360 = vld [vmem:[#allocation2 + $0x31] sm:$0xff]
        %v361 = vld [vmem:[#allocation2 + $0x39] sm:$0xff]
        %v362 = vld [vmem:[#allocation2 + $0x41] sm:$0xff]
        %v363 = vld [vmem:[#allocation2 + $0x49] sm:$0xff]
        %v364 = vld [vmem:[#allocation2 + $0x51] sm:$0xff]
        %v365 = vld [vmem:[#allocation2 + $0x59] sm:$0xff]
        %v366 = vld [vmem:[#allocation2 + $0x61] sm:$0xff]
        %v367 = vld [vmem:[#allocation2 + $0x69] sm:$0xff]
        %v368 = vld [vmem:[#allocation2 + $0x71] sm:$0xff]
        %v369 = vld [vmem:[#allocation2 + $0x79] sm:$0xff]
        %v370 = vld [vmem:[#allocation2 + $0x81] sm:$0xff]
        %v371 = vld [vmem:[#allocation2 + $0x89] sm:$0xff]
        %v372 = vld [vmem:[#allocation2 + $0x91] sm:$0xff]
        %v373 = vld [vmem:[#allocation2 + $0x99] sm:$0xff]
        %v374 = vld [vmem:[#allocation2 + $0xa1] sm:$0xff]
        %v375 = vld [vmem:[#allocation2 + $0xa9] sm:$0xff]
        %v376 = vld [vmem:[#allocation2 + $0xb1] sm:$0xff]
        %v377 = vld [vmem:[#allocation2 + $0xb9] sm:$0xff]
        %v378 = vld [vmem:[#allocation2 + $0xc1] sm:$0xff]
        %v379 = vld [vmem:[#allocation2 + $0xc9] sm:$0xff]
        %v380 = vld [vmem:[#allocation2 + $0x1b] sm:$0xff]
        %v381 = vld [vmem:[#allocation2 + $0x23] sm:$0xff]
        %v382 = vld [vmem:[#allocation2 + $0x2b] sm:$0xff]
        %v383 = vld [vmem:[#allocation2 + $0x33] sm:$0xff]
        %v384 = vld [vmem:[#allocation2 + $0x3b] sm:$0xff]
        %v385 = vld [vmem:[#allocation2 + $0x43] sm:$0xff]
        %v386 = vld [vmem:[#allocation2 + $0x4b] sm:$0xff]
        %v387 = vld [vmem:[#allocation2 + $0x53] sm:$0xff]
        %v388 = vld [vmem:[#allocation2 + $0x5b] sm:$0xff]
        %v389 = vld [vmem:[#allocation2 + $0x63] sm:$0xff]
        %v390 = vld [vmem:[#allocation2 + $0x6b] sm:$0xff]
        %v391 = vld [vmem:[#allocation2 + $0x73] sm:$0xff]
        %v392 = vld [vmem:[#allocation2 + $0x7b] sm:$0xff]
        %v393 = vld [vmem:[#allocation2 + $0x83] sm:$0xff]
        %v394 = vld [vmem:[#allocation2 + $0x8b] sm:$0xff]
        %v395 = vld [vmem:[#allocation2 + $0x93] sm:$0xff]
        %v396 = vld [vmem:[#allocation2 + $0x9b] sm:$0xff]
        %v397 = vld [vmem:[#allocation2 + $0xa3] sm:$0xff]
        %v398 = vld [vmem:[#allocation2 + $0xab] sm:$0xff]
        %v399 = vld [vmem:[#allocation2 + $0xb3] sm:$0xff]
        %v400 = vld [vmem:[#allocation2 + $0xbb] sm:$0xff]
        %v401 = vld [vmem:[#allocation2 + $0xc3] sm:$0xff]
        %v402 = vld [vmem:[#allocation2 + $0xcb] sm:$0xff]
        %v403 = vld [vmem:[#allocation2 + $0xd3] sm:$0xff]
        %v404 = vld [vmem:[#allocation2 + $0xdb] sm:$0xff]
        %v405 = vld [vmem:[#allocation2 + $0x1c] sm:$0xff]
        %v406 = vld [vmem:[#allocation2 + $0x24] sm:$0xff]
        %v407 = vld [vmem:[#allocation2 + $0x2c] sm:$0xff]
        %v408 = vld [vmem:[#allocation2 + $0x34] sm:$0xff]
        %v409 = vld [vmem:[#allocation2 + $0x3c] sm:$0xff]
        %v410 = vld [vmem:[#allocation2 + $0x44] sm:$0xff]
        %v411 = vld [vmem:[#allocation2 + $0x4c] sm:$0xff]
        %v412 = vld [vmem:[#allocation2 + $0x54] sm:$0xff]
        %v413 = vld [vmem:[#allocation2 + $0x5c] sm:$0xff]
        %v414 = vld [vmem:[#allocation2 + $0x64] sm:$0xff]
        %v415 = vld [vmem:[#allocation2 + $0x6c] sm:$0xff]
        %v416 = vld [vmem:[#allocation2 + $0x74] sm:$0xff]
        %v417 = vld [vmem:[#allocation2 + $0x7c] sm:$0xff]
        %v418 = vld [vmem:[#allocation2 + $0x84] sm:$0xff]
        %v419 = vld [vmem:[#allocation2 + $0x8c] sm:$0xff]
        %v420 = vld [vmem:[#allocation2 + $0x94] sm:$0xff]
        %v421 = vld [vmem:[#allocation2 + $0x9c] sm:$0xff]
        %v422 = vld [vmem:[#allocation2 + $0xa4] sm:$0xff]
        %v423 = vld [vmem:[#allocation2 + $0xac] sm:$0xff]
        %v424 = vld [vmem:[#allocation2 + $0xb4] sm:$0xff]
        %v425 = vld [vmem:[#allocation2 + $0xbc] sm:$0xff]
        %v426 = vld [vmem:[#allocation2 + $0xc4] sm:$0xff]
        %v427 = vld [vmem:[#allocation2 + $0xcc] sm:$0xff]
        %v428 = vld [vmem:[#allocation2 + $0xd4] sm:$0xff]
        %v429 = vld [vmem:[#allocation2 + $0xdc] sm:$0xff]
        %v430 = vld [vmem:[#allocation2 + $0x1d] sm:$0xff]
        %v431 = vld [vmem:[#allocation2 + $0x25] sm:$0xff]
        %v432 = vld [vmem:[#allocation2 + $0x2d] sm:$0xff]
        %v433 = vld [vmem:[#allocation2 + $0x35] sm:$0xff]
        %v434 = vld [vmem:[#allocation2 + $0x3d] sm:$0xff]
        %v435 = vld [vmem:[#allocation2 + $0x45] sm:$0xff]
        %v436 = vld [vmem:[#allocation2 + $0x4d] sm:$0xff]
        %v437 = vld [vmem:[#allocation2 + $0x55] sm:$0xff]
        %v438 = vld [vmem:[#allocation2 + $0x5d] sm:$0xff]
        %v439 = vld [vmem:[#allocation2 + $0x65] sm:$0xff]
        %v440 = vld [vmem:[#allocation2 + $0x6d] sm:$0xff]
        %v441 = vld [vmem:[#allocation2 + $0x75] sm:$0xff]
        %v442 = vld [vmem:[#allocation2 + $0x7d] sm:$0xff]
        %v443 = vld [vmem:[#allocation2 + $0x85] sm:$0xff]
        %v444 = vld [vmem:[#allocation2 + $0x8d] sm:$0xff]
        %v445 = vld [vmem:[#allocation2 + $0x95] sm:$0xff]
        %v446 = vld [vmem:[#allocation2 + $0x9d] sm:$0xff]
        %v447 = vld [vmem:[#allocation2 + $0xa5] sm:$0xff]
        %v448 = vld [vmem:[#allocation2 + $0xad] sm:$0xff]
        %v449 = vld [vmem:[#allocation2 + $0xb5] sm:$0xff]
        %v450 = vld [vmem:[#allocation2 + $0xbd] sm:$0xff]
        %v451 = vld [vmem:[#allocation2 + $0xc5] sm:$0xff]
        %v452 = vld [vmem:[#allocation2 + $0xcd] sm:$0xff]
        %v453 = vld [vmem:[#allocation2 + $0xd5] sm:$0xff]
        %v454 = vld [vmem:[#allocation2 + $0xdd] sm:$0xff]
        %v455 = vld [vmem:[#allocation2 + $0xcf] sm:$0xff]
        %v456 = vld [vmem:[#allocation2 + $0xd7] sm:$0xff]
        %v457 = vld [vmem:[#allocation2 + $0xdf] sm:$0xff]
        %v458 = vld [vmem:[#allocation2 + $0xe7] sm:$0xff]
        %v459 = vld [vmem:[#allocation2 + $0xef] sm:$0xff]
        %v460 = vld [vmem:[#allocation2 + $0xd0] sm:$0xff]
        %v461 = vld [vmem:[#allocation2 + $0xd8] sm:$0xff]
        %v462 = vld [vmem:[#allocation2 + $0xe0] sm:$0xff]
        %v463 = vld [vmem:[#allocation2 + $0xe8] sm:$0xff]
        %v464 = vld [vmem:[#allocation2 + $0xf0] sm:$0xff]
        %v465 = vld [vmem:[#allocation2 + $0xd1] sm:$0xff]
        %v466 = vld [vmem:[#allocation2 + $0xd9] sm:$0xff]
        %v467 = vld [vmem:[#allocation2 + $0xe1] sm:$0xff]
        %v468 = vld [vmem:[#allocation2 + $0xe9] sm:$0xff]
        %v469 = vld [vmem:[#allocation2 + $0xf1] sm:$0xff]
        %v470 = vld [vmem:[#allocation5] sm:$0xff]
        %v471 = vld [vmem:[#allocation5 + $0x8] sm:$0xff]
        %v472 = vld [vmem:[#allocation5 + $0x10] sm:$0xff]
        %v473 = vld [vmem:[#allocation5 + $0x18] sm:$0xff]
        %v474 = vld [vmem:[#allocation5 + $0x20] sm:$0xff]
        %v475 = vld [vmem:[#allocation5 + $0x28] sm:$0xff]
        %v476 = vld [vmem:[#allocation5 + $0x30] sm:$0xff]
        %v477 = vld [vmem:[#allocation5 + $0x38] sm:$0xff]
        %v478 = vld [vmem:[#allocation5 + $0x40] sm:$0xff]
        %v479 = vld [vmem:[#allocation5 + $0x48] sm:$0xff]
        %v480 = vld [vmem:[#allocation5 + $0x50] sm:$0xff]
        %v481 = vld [vmem:[#allocation5 + $0x58] sm:$0xff]
        %v482 = vld [vmem:[#allocation5 + $0x60] sm:$0xff]
        %v483 = vld [vmem:[#allocation5 + $0x68] sm:$0xff]
        %v484 = vld [vmem:[#allocation5 + $0x70] sm:$0xff]
        %v485 = vld [vmem:[#allocation5 + $0x78] sm:$0xff]
        %v486 = vld [vmem:[#allocation5 + $0x80] sm:$0xff]
        %v487 = vld [vmem:[#allocation5 + $0x88] sm:$0xff]
        %v488 = vld [vmem:[#allocation5 + $0x90] sm:$0xff]
        %v489 = vld [vmem:[#allocation5 + $0x98] sm:$0xff]
        %v490 = vld [vmem:[#allocation5 + $0xa0] sm:$0xff]
        %v491 = vld [vmem:[#allocation5 + $0xa8] sm:$0xff]
        %v492 = vld [vmem:[#allocation5 + $0xb0] sm:$0xff]
        %v493 = vld [vmem:[#allocation5 + $0xb8] sm:$0xff]
        %v494 = vld [vmem:[#allocation5 + $0xc0] sm:$0xff]
        %v495 = vld [vmem:[#allocation5 + $0xc8] sm:$0xff]
        %v496 = vld [vmem:[#allocation5 + $0xd0] sm:$0xff]
        %v497 = vld [vmem:[#allocation5 + $0xd8] sm:$0xff]
        %v498 = vld [vmem:[#allocation5 + $0xe0] sm:$0xff]
        %v499 = vld [vmem:[#allocation5 + $0xe8] sm:$0xff]
        %v500 = vld [vmem:[#allocation5 + $0xf0] sm:$0xff]
        %v501 = vld [vmem:[#allocation5 + $0xf8] sm:$0xff]
        %v502 = vld [vmem:[#allocation5 + $0x100] sm:$0xff]
        %v503 = vld [vmem:[#allocation5 + $0x108] sm:$0xff]
        %v504 = vld [vmem:[#allocation5 + $0x110] sm:$0xff]
        %v505 = vld [vmem:[#allocation5 + $0x118] sm:$0xff]
        %v506 = vld [vmem:[#allocation5 + $0x120] sm:$0xff]
        %v507 = vld [vmem:[#allocation5 + $0x128] sm:$0xff]
        %v508 = vld [vmem:[#allocation5 + $0x130] sm:$0xff]
        %v509 = vld [vmem:[#allocation5 + $0x138] sm:$0xff]
        %v510 = vld [vmem:[#allocation5 + $0x140] sm:$0xff]
        %v511 = vld [vmem:[#allocation5 + $0x148] sm:$0xff]
        %v512 = vld [vmem:[#allocation5 + $0x150] sm:$0xff]
        %v513 = vld [vmem:[#allocation5 + $0x158] sm:$0xff]
        %v514 = vld [vmem:[#allocation5 + $0x160] sm:$0xff]
        %v515 = vld [vmem:[#allocation5 + $0x168] sm:$0xff]
        %v516 = vld [vmem:[#allocation5 + $0x170] sm:$0xff]
        %v517 = vld [vmem:[#allocation5 + $0x178] sm:$0xff]
        %v518 = vld [vmem:[#allocation5 + $0x180] sm:$0xff]
        %v519 = vld [vmem:[#allocation5 + $0x188] sm:$0xff]
        %v520 = vld [vmem:[#allocation5 + $0x190] sm:$0xff]
        %v521 = vld [vmem:[#allocation5 + $0x198] sm:$0xff]
        %v522 = vld [vmem:[#allocation5 + $0x1a0] sm:$0xff]
        %v523 = vld [vmem:[#allocation5 + $0x1a8] sm:$0xff]
        %v524 = vld [vmem:[#allocation5 + $0x1b0] sm:$0xff]
        %v525 = vld [vmem:[#allocation5 + $0x1b8] sm:$0xff]
        %v526 = vld [vmem:[#allocation5 + $0x1c0] sm:$0xff]
        %v527 = vld [vmem:[#allocation5 + $0x1c8] sm:$0xff]
        %v528 = vld [vmem:[#allocation5 + $0x1d0] sm:$0xff]
        %v529 = vld [vmem:[#allocation5 + $0x1d8] sm:$0xff]
        %v530 = vld [vmem:[#allocation5 + $0x1e0] sm:$0xff]
        %v531 = vld [vmem:[#allocation5 + $0x1e8] sm:$0xff]
        %v532 = vld [vmem:[#allocation5 + $0x1f0] sm:$0xff]
        %v533 = vld [vmem:[#allocation5 + $0x1f8] sm:$0xff]
        %v534 = vld [vmem:[#allocation5 + $0x200] sm:$0xff]
        %v535 = vld [vmem:[#allocation5 + $0x208] sm:$0xff]
        %v536 = vld [vmem:[#allocation5 + $0x210] sm:$0xff]
        %v537 = vld [vmem:[#allocation5 + $0x218] sm:$0xff]
        %v538 = vld [vmem:[#allocation5 + $0x220] sm:$0xff]
        %v539 = vld [vmem:[#allocation5 + $0x228] sm:$0xff]
        %v540 = vld [vmem:[#allocation5 + $0x230] sm:$0xff]
        %v541 = vld [vmem:[#allocation5 + $0x238] sm:$0xff]
        %v542 = vld [vmem:[#allocation5 + $0x240] sm:$0xff]
        %v543 = vld [vmem:[#allocation5 + $0x248] sm:$0xff]
        %v544 = vld [vmem:[#allocation5 + $0x250] sm:$0xff]
        %v545 = vld [vmem:[#allocation5 + $0x258] sm:$0xff]
        %v546 = vld [vmem:[#allocation5 + $0x260] sm:$0xff]
        %v547 = vld [vmem:[#allocation5 + $0x268] sm:$0xff]
        %v548 = vld [vmem:[#allocation5 + $0x270] sm:$0xff]
        %v549 = vld [vmem:[#allocation5 + $0x278] sm:$0xff]
        %v550 = vld [vmem:[#allocation5 + $0x280] sm:$0xff]
        %v551 = vld [vmem:[#allocation5 + $0x288] sm:$0xff]
        %v552 = vld [vmem:[#allocation5 + $0x290] sm:$0xff]
        %v553 = vld [vmem:[#allocation5 + $0x298] sm:$0xff]
        %v554 = vld [vmem:[#allocation5 + $0x2a0] sm:$0xff]
        %v555 = vld [vmem:[#allocation5 + $0x2a8] sm:$0xff]
        %v556 = vld [vmem:[#allocation5 + $0x2b0] sm:$0xff]
        %v557 = vld [vmem:[#allocation5 + $0x2b8] sm:$0xff]
        %v558 = vld [vmem:[#allocation5 + $0x2c0] sm:$0xff]
        %v559 = vld [vmem:[#allocation5 + $0x2c8] sm:$0xff]
        %v560 = vld [vmem:[#allocation5 + $0x2d0] sm:$0xff]
        %v561 = vld [vmem:[#allocation5 + $0x2d8] sm:$0xff]
        %v562 = vld [vmem:[#allocation5 + $0x2e0] sm:$0xff]
        %v563 = vld [vmem:[#allocation5 + $0x2e8] sm:$0xff]
        %v564 = vld [vmem:[#allocation5 + $0x2f0] sm:$0xff]
        %v565 = vld [vmem:[#allocation5 + $0x2f8] sm:$0xff]
        %v566 = vld [vmem:[#allocation5 + $0x300] sm:$0xff]
        %v567 = vld [vmem:[#allocation5 + $0x308] sm:$0xff]
        %v568 = vld [vmem:[#allocation5 + $0x310] sm:$0xff]
        %v569 = vld [vmem:[#allocation5 + $0x318] sm:$0xff]
        %v570 = vld [vmem:[#allocation5 + $0x320] sm:$0xff]
        %v571 = vld [vmem:[#allocation5 + $0x328] sm:$0xff]
        %v572 = vld [vmem:[#allocation5 + $0x330] sm:$0xff]
        %v573 = vld [vmem:[#allocation5 + $0x338] sm:$0xff]
        %v574 = vld [vmem:[#allocation5 + $0x340] sm:$0xff]
        %v575 = vld [vmem:[#allocation5 + $0x348] sm:$0xff]
        %v576 = vld [vmem:[#allocation5 + $0x350] sm:$0xff]
        %v577 = vld [vmem:[#allocation5 + $0x358] sm:$0xff]
        %v578 = vld [vmem:[#allocation5 + $0x360] sm:$0xff]
        %v579 = vld [vmem:[#allocation5 + $0x368] sm:$0xff]
        %v580 = vld [vmem:[#allocation5 + $0x370] sm:$0xff]
        %v581 = vld [vmem:[#allocation5 + $0x378] sm:$0xff]
        %v582 = vld [vmem:[#allocation5 + $0x380] sm:$0xff]
        %v583 = vld [vmem:[#allocation5 + $0x388] sm:$0xff]
        %v584 = vld [vmem:[#allocation5 + $0x390] sm:$0xff]
        %v585 = vld [vmem:[#allocation5 + $0x398] sm:$0xff]
        %v586 = vld [vmem:[#allocation5 + $0x3a0] sm:$0xff]
        %v587 = vld [vmem:[#allocation5 + $0x3a8] sm:$0xff]
        %v588 = vld [vmem:[#allocation5 + $0x3b0] sm:$0xff]
        %v589 = vld [vmem:[#allocation5 + $0x3b8] sm:$0xff]
        %v590 = vld [vmem:[#allocation5 + $0x3c0] sm:$0xff]
        %v591 = vld [vmem:[#allocation5 + $0x3c8] sm:$0xff]
        %v592 = vld [vmem:[#allocation5 + $0x3d0] sm:$0xff]
        %v593 = vld [vmem:[#allocation5 + $0x3d8] sm:$0xff]
        %v594 = vld [vmem:[#allocation5 + $0x3e0] sm:$0xff]
        %v595 = vld [vmem:[#allocation5 + $0x3e8] sm:$0xff]
        %v596 = vld [vmem:[#allocation5 + $0x3f0] sm:$0xff]
        %v597 = vld [vmem:[#allocation5 + $0x3f8] sm:$0xff]
        %v598 = vld [vmem:[#allocation5 + $0x400] sm:$0xff]
        %v599 = vld [vmem:[#allocation5 + $0x408] sm:$0xff]
        %v600 = vld [vmem:[#allocation5 + $0x410] sm:$0xff]
        %v601 = vld [vmem:[#allocation5 + $0x418] sm:$0xff]
        %v602 = vld [vmem:[#allocation5 + $0x420] sm:$0xff]
        %v603 = vld [vmem:[#allocation5 + $0x428] sm:$0xff]
        %v604 = vld [vmem:[#allocation5 + $0x430] sm:$0xff]
        %v605 = vld [vmem:[#allocation5 + $0x438] sm:$0xff]
        %v606 = vld [vmem:[#allocation5 + $0x440] sm:$0xff]
        %v607 = vld [vmem:[#allocation5 + $0x448] sm:$0xff]
        %v608 = vld [vmem:[#allocation5 + $0x450] sm:$0xff]
        %v609 = vld [vmem:[#allocation5 + $0x458] sm:$0xff]
        %v610 = vld [vmem:[#allocation5 + $0x460] sm:$0xff]
        %v611 = vld [vmem:[#allocation5 + $0x468] sm:$0xff]
        %v612 = vld [vmem:[#allocation5 + $0x470] sm:$0xff]
        %v613 = vld [vmem:[#allocation5 + $0x478] sm:$0xff]
        %614 = vmatpush.msra.mxu0 %v485
        %615 = vmatpush.msra.mxu0 %v484
        %616 = vmatpush.msra.mxu0 %v483
        %617 = vmatpush.msra.mxu0 %v482
        %618 = vmatpush.msra.mxu0 %v481
        %619 = vmatpush.msra.mxu0 %v480
        %620 = vmatpush.msra.mxu0 %v479
        %621 = vmatpush.msra.mxu0 %v478
        %622 = vmatpush.msra.mxu0 %v477
        %623 = vmatpush.msra.mxu0 %v476
        %624 = vmatpush.msra.mxu0 %v475
        %625 = vmatpush.msra.mxu0 %v474
        %626 = vmatpush.msra.mxu0 %v473
        %627 = vmatpush.msra.mxu0 %v472
        %628 = vmatpush.msra.mxu0 %v471
        %629 = vmatpush.msra.mxu0 %v470
        %630 = vmatmul.f32.gmra.mxu0 %v305
        %v631 = vpop.f32.mrf.mxu0
        %v632 = vadd.f32 0.0, %v631
        %633 = vmatmul.f32.gmra.mxu0 %v306
        %v634 = vpop.f32.mrf.mxu0
        %v635 = vadd.f32 0.0, %v634
        %636 = vmatmul.f32.gmra.mxu0 %v307
        %v637 = vpop.f32.mrf.mxu0
        %v638 = vadd.f32 0.0, %v637
        %639 = vmatmul.f32.gmra.mxu0 %v308
        %v640 = vpop.f32.mrf.mxu0
        %v641 = vadd.f32 0.0, %v640
        %642 = vmatmul.f32.gmra.mxu0 %v309
        %v643 = vpop.f32.mrf.mxu0
        %v644 = vadd.f32 0.0, %v643
        %645 = vmatmul.f32.gmra.mxu0 %v310
        %v646 = vpop.f32.mrf.mxu0
        %v647 = vadd.f32 0.0, %v646
        %648 = vmatmul.f32.gmra.mxu0 %v311
        %v649 = vpop.f32.mrf.mxu0
        %v650 = vadd.f32 0.0, %v649
        %651 = vmatmul.f32.gmra.mxu0 %v312
        %v652 = vpop.f32.mrf.mxu0
        %v653 = vadd.f32 0.0, %v652
        %654 = vmatmul.f32.gmra.mxu0 %v313
        %v655 = vpop.f32.mrf.mxu0
        %v656 = vadd.f32 0.0, %v655
        %657 = vmatmul.f32.gmra.mxu0 %v314
        %v658 = vpop.f32.mrf.mxu0
        %v659 = vadd.f32 0.0, %v658
        %660 = vmatmul.f32.gmra.mxu0 %v315
        %v661 = vpop.f32.mrf.mxu0
        %v662 = vadd.f32 0.0, %v661
        %663 = vmatmul.f32.gmra.mxu0 %v316
        %v664 = vpop.f32.mrf.mxu0
        %v665 = vadd.f32 0.0, %v664
        %666 = vmatmul.f32.gmra.mxu0 %v317
        %v667 = vpop.f32.mrf.mxu0
        %v668 = vadd.f32 0.0, %v667
        %669 = vmatmul.f32.gmra.mxu0 %v318
        %v670 = vpop.f32.mrf.mxu0
        %v671 = vadd.f32 0.0, %v670
        %672 = vmatmul.f32.gmra.mxu0 %v319
        %v673 = vpop.f32.mrf.mxu0
        %v674 = vadd.f32 0.0, %v673
        %675 = vmatmul.f32.gmra.mxu0 %v320
        %v676 = vpop.f32.mrf.mxu0
        %v677 = vadd.f32 0.0, %v676
        %678 = vmatmul.f32.gmra.mxu0 %v321
        %v679 = vpop.f32.mrf.mxu0
        %v680 = vadd.f32 0.0, %v679
        %681 = vmatmul.f32.gmra.mxu0 %v322
        %v682 = vpop.f32.mrf.mxu0
        %v683 = vadd.f32 0.0, %v682
        %684 = vmatmul.f32.gmra.mxu0 %v323
        %v685 = vpop.f32.mrf.mxu0
        %v686 = vadd.f32 0.0, %v685
        %687 = vmatmul.f32.gmra.mxu0 %v324
        %v688 = vpop.f32.mrf.mxu0
        %v689 = vadd.f32 0.0, %v688
        %690 = vmatmul.f32.gmra.mxu0 %v325
        %v691 = vpop.f32.mrf.mxu0
        %v692 = vadd.f32 0.0, %v691
        %693 = vmatmul.f32.gmra.mxu0 %v326
        %v694 = vpop.f32.mrf.mxu0
        %v695 = vadd.f32 0.0, %v694
        %696 = vmatmul.f32.gmra.mxu0 %v327
        %v697 = vpop.f32.mrf.mxu0
        %v698 = vadd.f32 0.0, %v697
        %699 = vmatmul.f32.gmra.mxu0 %v328
        %v700 = vpop.f32.mrf.mxu0
        %v701 = vadd.f32 0.0, %v700
        %702 = vmatmul.f32.gmra.mxu0 %v329
        %v703 = vpop.f32.mrf.mxu0
        %v704 = vadd.f32 0.0, %v703
        %705 = vdwg.mxu0
        %706 = vmatpush.msra.mxu0 %v501
        %707 = vmatpush.msra.mxu0 %v500
        %708 = vmatpush.msra.mxu0 %v499
        %709 = vmatpush.msra.mxu0 %v498
        %710 = vmatpush.msra.mxu0 %v497
        %711 = vmatpush.msra.mxu0 %v496
        %712 = vmatpush.msra.mxu0 %v495
        %713 = vmatpush.msra.mxu0 %v494
        %714 = vmatpush.msra.mxu0 %v493
        %715 = vmatpush.msra.mxu0 %v492
        %716 = vmatpush.msra.mxu0 %v491
        %717 = vmatpush.msra.mxu0 %v490
        %718 = vmatpush.msra.mxu0 %v489
        %719 = vmatpush.msra.mxu0 %v488
        %720 = vmatpush.msra.mxu0 %v487
        %721 = vmatpush.msra.mxu0 %v486
        %722 = vmatmul.f32.gmra.mxu0 %v330
        %v723 = vpop.f32.mrf.mxu0
        %v724 = vadd.f32 %v632, %v723
        %725 = vmatmul.f32.gmra.mxu0 %v331
        %v726 = vpop.f32.mrf.mxu0
        %v727 = vadd.f32 %v635, %v726
        %728 = vmatmul.f32.gmra.mxu0 %v332
        %v729 = vpop.f32.mrf.mxu0
        %v730 = vadd.f32 %v638, %v729
        %731 = vmatmul.f32.gmra.mxu0 %v333
        %v732 = vpop.f32.mrf.mxu0
        %v733 = vadd.f32 %v641, %v732
        %734 = vmatmul.f32.gmra.mxu0 %v334
        %v735 = vpop.f32.mrf.mxu0
        %v736 = vadd.f32 %v644, %v735
        %737 = vmatmul.f32.gmra.mxu0 %v335
        %v738 = vpop.f32.mrf.mxu0
        %v739 = vadd.f32 %v647, %v738
        %740 = vmatmul.f32.gmra.mxu0 %v336
        %v741 = vpop.f32.mrf.mxu0
        %v742 = vadd.f32 %v650, %v741
        %743 = vmatmul.f32.gmra.mxu0 %v337
        %v744 = vpop.f32.mrf.mxu0
        %v745 = vadd.f32 %v653, %v744
        %746 = vmatmul.f32.gmra.mxu0 %v338
        %v747 = vpop.f32.mrf.mxu0
        %v748 = vadd.f32 %v656, %v747
        %749 = vmatmul.f32.gmra.mxu0 %v339
        %v750 = vpop.f32.mrf.mxu0
        %v751 = vadd.f32 %v659, %v750
        %752 = vmatmul.f32.gmra.mxu0 %v340
        %v753 = vpop.f32.mrf.mxu0
        %v754 = vadd.f32 %v662, %v753
        %755 = vmatmul.f32.gmra.mxu0 %v341
        %v756 = vpop.f32.mrf.mxu0
        %v757 = vadd.f32 %v665, %v756
        %758 = vmatmul.f32.gmra.mxu0 %v342
        %v759 = vpop.f32.mrf.mxu0
        %v760 = vadd.f32 %v668, %v759
        %761 = vmatmul.f32.gmra.mxu0 %v343
        %v762 = vpop.f32.mrf.mxu0
        %v763 = vadd.f32 %v671, %v762
        %764 = vmatmul.f32.gmra.mxu0 %v344
        %v765 = vpop.f32.mrf.mxu0
        %v766 = vadd.f32 %v674, %v765
        %767 = vmatmul.f32.gmra.mxu0 %v345
        %v768 = vpop.f32.mrf.mxu0
        %v769 = vadd.f32 %v677, %v768
        %770 = vmatmul.f32.gmra.mxu0 %v346
        %v771 = vpop.f32.mrf.mxu0
        %v772 = vadd.f32 %v680, %v771
        %773 = vmatmul.f32.gmra.mxu0 %v347
        %v774 = vpop.f32.mrf.mxu0
        %v775 = vadd.f32 %v683, %v774
        %776 = vmatmul.f32.gmra.mxu0 %v348
        %v777 = vpop.f32.mrf.mxu0
        %v778 = vadd.f32 %v686, %v777
        %779 = vmatmul.f32.gmra.mxu0 %v349
        %v780 = vpop.f32.mrf.mxu0
        %v781 = vadd.f32 %v689, %v780
        %782 = vmatmul.f32.gmra.mxu0 %v350
        %v783 = vpop.f32.mrf.mxu0
        %v784 = vadd.f32 %v692, %v783
        %785 = vmatmul.f32.gmra.mxu0 %v351
        %v786 = vpop.f32.mrf.mxu0
        %v787 = vadd.f32 %v695, %v786
        %788 = vmatmul.f32.gmra.mxu0 %v352
        %v789 = vpop.f32.mrf.mxu0
        %v790 = vadd.f32 %v698, %v789
        %791 = vmatmul.f32.gmra.mxu0 %v353
        %v792 = vpop.f32.mrf.mxu0
        %v793 = vadd.f32 %v701, %v792
        %794 = vmatmul.f32.gmra.mxu0 %v354
        %v795 = vpop.f32.mrf.mxu0
        %v796 = vadd.f32 %v704, %v795
        %797 = vdwg.mxu0
        %798 = vmatpush.msra.mxu0 %v517
        %799 = vmatpush.msra.mxu0 %v516
        %800 = vmatpush.msra.mxu0 %v515
        %801 = vmatpush.msra.mxu0 %v514
        %802 = vmatpush.msra.mxu0 %v513
        %803 = vmatpush.msra.mxu0 %v512
        %804 = vmatpush.msra.mxu0 %v511
        %805 = vmatpush.msra.mxu0 %v510
        %806 = vmatpush.msra.mxu0 %v509
        %807 = vmatpush.msra.mxu0 %v508
        %808 = vmatpush.msra.mxu0 %v507
        %809 = vmatpush.msra.mxu0 %v506
        %810 = vmatpush.msra.mxu0 %v505
        %811 = vmatpush.msra.mxu0 %v504
        %812 = vmatpush.msra.mxu0 %v503
        %813 = vmatpush.msra.mxu0 %v502
        %814 = vmatmul.f32.gmra.mxu0 %v355
        %v815 = vpop.f32.mrf.mxu0
        %v816 = vadd.f32 %v724, %v815
        %817 = vmatmul.f32.gmra.mxu0 %v356
        %v818 = vpop.f32.mrf.mxu0
        %v819 = vadd.f32 %v727, %v818
        %820 = vmatmul.f32.gmra.mxu0 %v357
        %v821 = vpop.f32.mrf.mxu0
        %v822 = vadd.f32 %v730, %v821
        %823 = vmatmul.f32.gmra.mxu0 %v358
        %v824 = vpop.f32.mrf.mxu0
        %v825 = vadd.f32 %v733, %v824
        %826 = vmatmul.f32.gmra.mxu0 %v359
        %v827 = vpop.f32.mrf.mxu0
        %v828 = vadd.f32 %v736, %v827
        %829 = vmatmul.f32.gmra.mxu0 %v360
        %v830 = vpop.f32.mrf.mxu0
        %v831 = vadd.f32 %v739, %v830
        %832 = vmatmul.f32.gmra.mxu0 %v361
        %v833 = vpop.f32.mrf.mxu0
        %v834 = vadd.f32 %v742, %v833
        %835 = vmatmul.f32.gmra.mxu0 %v362
        %v836 = vpop.f32.mrf.mxu0
        %v837 = vadd.f32 %v745, %v836
        %838 = vmatmul.f32.gmra.mxu0 %v363
        %v839 = vpop.f32.mrf.mxu0
        %v840 = vadd.f32 %v748, %v839
        %841 = vmatmul.f32.gmra.mxu0 %v364
        %v842 = vpop.f32.mrf.mxu0
        %v843 = vadd.f32 %v751, %v842
        %844 = vmatmul.f32.gmra.mxu0 %v365
        %v845 = vpop.f32.mrf.mxu0
        %v846 = vadd.f32 %v754, %v845
        %847 = vmatmul.f32.gmra.mxu0 %v366
        %v848 = vpop.f32.mrf.mxu0
        %v849 = vadd.f32 %v757, %v848
        %850 = vmatmul.f32.gmra.mxu0 %v367
        %v851 = vpop.f32.mrf.mxu0
        %v852 = vadd.f32 %v760, %v851
        %853 = vmatmul.f32.gmra.mxu0 %v368
        %v854 = vpop.f32.mrf.mxu0
        %v855 = vadd.f32 %v763, %v854
        %856 = vmatmul.f32.gmra.mxu0 %v369
        %v857 = vpop.f32.mrf.mxu0
        %v858 = vadd.f32 %v766, %v857
        %859 = vmatmul.f32.gmra.mxu0 %v370
        %v860 = vpop.f32.mrf.mxu0
        %v861 = vadd.f32 %v769, %v860
        %862 = vmatmul.f32.gmra.mxu0 %v371
        %v863 = vpop.f32.mrf.mxu0
        %v864 = vadd.f32 %v772, %v863
        %865 = vmatmul.f32.gmra.mxu0 %v372
        %v866 = vpop.f32.mrf.mxu0
        %v867 = vadd.f32 %v775, %v866
        %868 = vmatmul.f32.gmra.mxu0 %v373
        %v869 = vpop.f32.mrf.mxu0
        %v870 = vadd.f32 %v778, %v869
        %871 = vmatmul.f32.gmra.mxu0 %v374
        %v872 = vpop.f32.mrf.mxu0
        %v873 = vadd.f32 %v781, %v872
        %874 = vmatmul.f32.gmra.mxu0 %v375
        %v875 = vpop.f32.mrf.mxu0
        %v876 = vadd.f32 %v784, %v875
        %877 = vmatmul.f32.gmra.mxu0 %v376
        %v878 = vpop.f32.mrf.mxu0
        %v879 = vadd.f32 %v787, %v878
        %880 = vmatmul.f32.gmra.mxu0 %v377
        %v881 = vpop.f32.mrf.mxu0
        %v882 = vadd.f32 %v790, %v881
        %883 = vmatmul.f32.gmra.mxu0 %v378
        %v884 = vpop.f32.mrf.mxu0
        %v885 = vadd.f32 %v793, %v884
        %886 = vmatmul.f32.gmra.mxu0 %v379
        %v887 = vpop.f32.mrf.mxu0
        %v888 = vadd.f32 %v796, %v887
        %889 = vdwg.mxu0
        %890 = vmatpush.msra.mxu0 %v533
        %891 = vmatpush.msra.mxu0 %v532
        %892 = vmatpush.msra.mxu0 %v531
        %893 = vmatpush.msra.mxu0 %v530
        %894 = vmatpush.msra.mxu0 %v529
        %895 = vmatpush.msra.mxu0 %v528
        %896 = vmatpush.msra.mxu0 %v527
        %897 = vmatpush.msra.mxu0 %v526
        %898 = vmatpush.msra.mxu0 %v525
        %899 = vmatpush.msra.mxu0 %v524
        %900 = vmatpush.msra.mxu0 %v523
        %901 = vmatpush.msra.mxu0 %v522
        %902 = vmatpush.msra.mxu0 %v521
        %903 = vmatpush.msra.mxu0 %v520
        %904 = vmatpush.msra.mxu0 %v519
        %905 = vmatpush.msra.mxu0 %v518
        %906 = vmatmul.f32.gmra.mxu0 %v380
        %v907 = vpop.f32.mrf.mxu0
        %v908 = vadd.f32 %v816, %v907
        %909 = vmatmul.f32.gmra.mxu0 %v381
        %v910 = vpop.f32.mrf.mxu0
        %v911 = vadd.f32 %v819, %v910
        %912 = vmatmul.f32.gmra.mxu0 %v382
        %v913 = vpop.f32.mrf.mxu0
        %v914 = vadd.f32 %v822, %v913
        %915 = vmatmul.f32.gmra.mxu0 %v383
        %v916 = vpop.f32.mrf.mxu0
        %v917 = vadd.f32 %v825, %v916
        %918 = vmatmul.f32.gmra.mxu0 %v384
        %v919 = vpop.f32.mrf.mxu0
        %v920 = vadd.f32 %v828, %v919
        %921 = vmatmul.f32.gmra.mxu0 %v385
        %v922 = vpop.f32.mrf.mxu0
        %v923 = vadd.f32 %v831, %v922
        %924 = vmatmul.f32.gmra.mxu0 %v386
        %v925 = vpop.f32.mrf.mxu0
        %v926 = vadd.f32 %v834, %v925
        %927 = vmatmul.f32.gmra.mxu0 %v387
        %v928 = vpop.f32.mrf.mxu0
        %v929 = vadd.f32 %v837, %v928
        %930 = vmatmul.f32.gmra.mxu0 %v388
        %v931 = vpop.f32.mrf.mxu0
        %v932 = vadd.f32 %v840, %v931
        %933 = vmatmul.f32.gmra.mxu0 %v389
        %v934 = vpop.f32.mrf.mxu0
        %v935 = vadd.f32 %v843, %v934
        %936 = vmatmul.f32.gmra.mxu0 %v390
        %v937 = vpop.f32.mrf.mxu0
        %v938 = vadd.f32 %v846, %v937
        %939 = vmatmul.f32.gmra.mxu0 %v391
        %v940 = vpop.f32.mrf.mxu0
        %v941 = vadd.f32 %v849, %v940
        %942 = vmatmul.f32.gmra.mxu0 %v392
        %v943 = vpop.f32.mrf.mxu0
        %v944 = vadd.f32 %v852, %v943
        %945 = vmatmul.f32.gmra.mxu0 %v393
        %v946 = vpop.f32.mrf.mxu0
        %v947 = vadd.f32 %v855, %v946
        %948 = vmatmul.f32.gmra.mxu0 %v394
        %v949 = vpop.f32.mrf.mxu0
        %v950 = vadd.f32 %v858, %v949
        %951 = vmatmul.f32.gmra.mxu0 %v395
        %v952 = vpop.f32.mrf.mxu0
        %v953 = vadd.f32 %v861, %v952
        %954 = vmatmul.f32.gmra.mxu0 %v396
        %v955 = vpop.f32.mrf.mxu0
        %v956 = vadd.f32 %v864, %v955
        %957 = vmatmul.f32.gmra.mxu0 %v397
        %v958 = vpop.f32.mrf.mxu0
        %v959 = vadd.f32 %v867, %v958
        %960 = vmatmul.f32.gmra.mxu0 %v398
        %v961 = vpop.f32.mrf.mxu0
        %v962 = vadd.f32 %v870, %v961
        %963 = vmatmul.f32.gmra.mxu0 %v399
        %v964 = vpop.f32.mrf.mxu0
        %v965 = vadd.f32 %v873, %v964
        %966 = vmatmul.f32.gmra.mxu0 %v400
        %v967 = vpop.f32.mrf.mxu0
        %v968 = vadd.f32 %v876, %v967
        %969 = vmatmul.f32.gmra.mxu0 %v401
        %v970 = vpop.f32.mrf.mxu0
        %v971 = vadd.f32 %v879, %v970
        %972 = vmatmul.f32.gmra.mxu0 %v402
        %v973 = vpop.f32.mrf.mxu0
        %v974 = vadd.f32 %v882, %v973
        %975 = vmatmul.f32.gmra.mxu0 %v403
        %v976 = vpop.f32.mrf.mxu0
        %v977 = vadd.f32 %v885, %v976
        %978 = vmatmul.f32.gmra.mxu0 %v404
        %v979 = vpop.f32.mrf.mxu0
        %v980 = vadd.f32 %v888, %v979
        %981 = vdwg.mxu0
        %982 = vmatpush.msra.mxu0 %v549
        %983 = vmatpush.msra.mxu0 %v548
        %984 = vmatpush.msra.mxu0 %v547
        %985 = vmatpush.msra.mxu0 %v546
        %986 = vmatpush.msra.mxu0 %v545
        %987 = vmatpush.msra.mxu0 %v544
        %988 = vmatpush.msra.mxu0 %v543
        %989 = vmatpush.msra.mxu0 %v542
        %990 = vmatpush.msra.mxu0 %v541
        %991 = vmatpush.msra.mxu0 %v540
        %992 = vmatpush.msra.mxu0 %v539
        %993 = vmatpush.msra.mxu0 %v538
        %994 = vmatpush.msra.mxu0 %v537
        %995 = vmatpush.msra.mxu0 %v536
        %996 = vmatpush.msra.mxu0 %v535
        %997 = vmatpush.msra.mxu0 %v534
        %998 = vmatmul.f32.gmra.mxu0 %v405
        %v999 = vpop.f32.mrf.mxu0
        %v1000 = vadd.f32 %v908, %v999
        %1001 = vmatmul.f32.gmra.mxu0 %v406
        %v1002 = vpop.f32.mrf.mxu0
        %v1003 = vadd.f32 %v911, %v1002
        %1004 = vmatmul.f32.gmra.mxu0 %v407
        %v1005 = vpop.f32.mrf.mxu0
        %v1006 = vadd.f32 %v914, %v1005
        %1007 = vmatmul.f32.gmra.mxu0 %v408
        %v1008 = vpop.f32.mrf.mxu0
        %v1009 = vadd.f32 %v917, %v1008
        %1010 = vmatmul.f32.gmra.mxu0 %v409
        %v1011 = vpop.f32.mrf.mxu0
        %v1012 = vadd.f32 %v920, %v1011
        %1013 = vmatmul.f32.gmra.mxu0 %v410
        %v1014 = vpop.f32.mrf.mxu0
        %v1015 = vadd.f32 %v923, %v1014
        %1016 = vmatmul.f32.gmra.mxu0 %v411
        %v1017 = vpop.f32.mrf.mxu0
        %v1018 = vadd.f32 %v926, %v1017
        %1019 = vmatmul.f32.gmra.mxu0 %v412
        %v1020 = vpop.f32.mrf.mxu0
        %v1021 = vadd.f32 %v929, %v1020
        %1022 = vmatmul.f32.gmra.mxu0 %v413
        %v1023 = vpop.f32.mrf.mxu0
        %v1024 = vadd.f32 %v932, %v1023
        %1025 = vmatmul.f32.gmra.mxu0 %v414
        %v1026 = vpop.f32.mrf.mxu0
        %v1027 = vadd.f32 %v935, %v1026
        %1028 = vmatmul.f32.gmra.mxu0 %v415
        %v1029 = vpop.f32.mrf.mxu0
        %v1030 = vadd.f32 %v938, %v1029
        %1031 = vmatmul.f32.gmra.mxu0 %v416
        %v1032 = vpop.f32.mrf.mxu0
        %v1033 = vadd.f32 %v941, %v1032
        %1034 = vmatmul.f32.gmra.mxu0 %v417
        %v1035 = vpop.f32.mrf.mxu0
        %v1036 = vadd.f32 %v944, %v1035
        %1037 = vmatmul.f32.gmra.mxu0 %v418
        %v1038 = vpop.f32.mrf.mxu0
        %v1039 = vadd.f32 %v947, %v1038
        %1040 = vmatmul.f32.gmra.mxu0 %v419
        %v1041 = vpop.f32.mrf.mxu0
        %v1042 = vadd.f32 %v950, %v1041
        %1043 = vmatmul.f32.gmra.mxu0 %v420
        %v1044 = vpop.f32.mrf.mxu0
        %v1045 = vadd.f32 %v953, %v1044
        %1046 = vmatmul.f32.gmra.mxu0 %v421
        %v1047 = vpop.f32.mrf.mxu0
        %v1048 = vadd.f32 %v956, %v1047
        %1049 = vmatmul.f32.gmra.mxu0 %v422
        %v1050 = vpop.f32.mrf.mxu0
        %v1051 = vadd.f32 %v959, %v1050
        %1052 = vmatmul.f32.gmra.mxu0 %v423
        %v1053 = vpop.f32.mrf.mxu0
        %v1054 = vadd.f32 %v962, %v1053
        %1055 = vmatmul.f32.gmra.mxu0 %v424
        %v1056 = vpop.f32.mrf.mxu0
        %v1057 = vadd.f32 %v965, %v1056
        %1058 = vmatmul.f32.gmra.mxu0 %v425
        %v1059 = vpop.f32.mrf.mxu0
        %v1060 = vadd.f32 %v968, %v1059
        %1061 = vmatmul.f32.gmra.mxu0 %v426
        %v1062 = vpop.f32.mrf.mxu0
        %v1063 = vadd.f32 %v971, %v1062
        %1064 = vmatmul.f32.gmra.mxu0 %v427
        %v1065 = vpop.f32.mrf.mxu0
        %v1066 = vadd.f32 %v974, %v1065
        %1067 = vmatmul.f32.gmra.mxu0 %v428
        %v1068 = vpop.f32.mrf.mxu0
        %v1069 = vadd.f32 %v977, %v1068
        %1070 = vmatmul.f32.gmra.mxu0 %v429
        %v1071 = vpop.f32.mrf.mxu0
        %v1072 = vadd.f32 %v980, %v1071
        %1073 = vdwg.mxu0
        %1074 = vmatpush.msra.mxu0 %v565
        %1075 = vmatpush.msra.mxu0 %v564
        %1076 = vmatpush.msra.mxu0 %v563
        %1077 = vmatpush.msra.mxu0 %v562
        %1078 = vmatpush.msra.mxu0 %v561
        %1079 = vmatpush.msra.mxu0 %v560
        %1080 = vmatpush.msra.mxu0 %v559
        %1081 = vmatpush.msra.mxu0 %v558
        %1082 = vmatpush.msra.mxu0 %v557
        %1083 = vmatpush.msra.mxu0 %v556
        %1084 = vmatpush.msra.mxu0 %v555
        %1085 = vmatpush.msra.mxu0 %v554
        %1086 = vmatpush.msra.mxu0 %v553
        %1087 = vmatpush.msra.mxu0 %v552
        %1088 = vmatpush.msra.mxu0 %v551
        %1089 = vmatpush.msra.mxu0 %v550
        %1090 = vmatmul.f32.gmra.mxu0 %v430
        %v1091 = vpop.f32.mrf.mxu0
        %v1092 = vadd.f32 %v1000, %v1091
        %1093 = vmatmul.f32.gmra.mxu0 %v431
        %v1094 = vpop.f32.mrf.mxu0
        %v1095 = vadd.f32 %v1003, %v1094
        %1096 = vmatmul.f32.gmra.mxu0 %v432
        %v1097 = vpop.f32.mrf.mxu0
        %v1098 = vadd.f32 %v1006, %v1097
        %1099 = vmatmul.f32.gmra.mxu0 %v433
        %v1100 = vpop.f32.mrf.mxu0
        %v1101 = vadd.f32 %v1009, %v1100
        %1102 = vmatmul.f32.gmra.mxu0 %v434
        %v1103 = vpop.f32.mrf.mxu0
        %v1104 = vadd.f32 %v1012, %v1103
        %1105 = vmatmul.f32.gmra.mxu0 %v435
        %v1106 = vpop.f32.mrf.mxu0
        %v1107 = vadd.f32 %v1015, %v1106
        %1108 = vmatmul.f32.gmra.mxu0 %v436
        %v1109 = vpop.f32.mrf.mxu0
        %v1110 = vadd.f32 %v1018, %v1109
        %1111 = vmatmul.f32.gmra.mxu0 %v437
        %v1112 = vpop.f32.mrf.mxu0
        %v1113 = vadd.f32 %v1021, %v1112
        %1114 = vmatmul.f32.gmra.mxu0 %v438
        %v1115 = vpop.f32.mrf.mxu0
        %v1116 = vadd.f32 %v1024, %v1115
        %1117 = vmatmul.f32.gmra.mxu0 %v439
        %v1118 = vpop.f32.mrf.mxu0
        %v1119 = vadd.f32 %v1027, %v1118
        %1120 = vmatmul.f32.gmra.mxu0 %v440
        %v1121 = vpop.f32.mrf.mxu0
        %v1122 = vadd.f32 %v1030, %v1121
        %1123 = vmatmul.f32.gmra.mxu0 %v441
        %v1124 = vpop.f32.mrf.mxu0
        %v1125 = vadd.f32 %v1033, %v1124
        %1126 = vmatmul.f32.gmra.mxu0 %v442
        %v1127 = vpop.f32.mrf.mxu0
        %v1128 = vadd.f32 %v1036, %v1127
        %1129 = vmatmul.f32.gmra.mxu0 %v443
        %v1130 = vpop.f32.mrf.mxu0
        %v1131 = vadd.f32 %v1039, %v1130
        %1132 = vmatmul.f32.gmra.mxu0 %v444
        %v1133 = vpop.f32.mrf.mxu0
        %v1134 = vadd.f32 %v1042, %v1133
        %1135 = vmatmul.f32.gmra.mxu0 %v445
        %v1136 = vpop.f32.mrf.mxu0
        %v1137 = vadd.f32 %v1045, %v1136
        %1138 = vmatmul.f32.gmra.mxu0 %v446
        %v1139 = vpop.f32.mrf.mxu0
        %v1140 = vadd.f32 %v1048, %v1139
        %1141 = vmatmul.f32.gmra.mxu0 %v447
        %v1142 = vpop.f32.mrf.mxu0
        %v1143 = vadd.f32 %v1051, %v1142
        %1144 = vmatmul.f32.gmra.mxu0 %v448
        %v1145 = vpop.f32.mrf.mxu0
        %v1146 = vadd.f32 %v1054, %v1145
        %1147 = vmatmul.f32.gmra.mxu0 %v449
        %v1148 = vpop.f32.mrf.mxu0
        %v1149 = vadd.f32 %v1057, %v1148
        %1150 = vmatmul.f32.gmra.mxu0 %v450
        %v1151 = vpop.f32.mrf.mxu0
        %v1152 = vadd.f32 %v1060, %v1151
        %1153 = vmatmul.f32.gmra.mxu0 %v451
        %v1154 = vpop.f32.mrf.mxu0
        %v1155 = vadd.f32 %v1063, %v1154
        %1156 = vmatmul.f32.gmra.mxu0 %v452
        %v1157 = vpop.f32.mrf.mxu0
        %v1158 = vadd.f32 %v1066, %v1157
        %1159 = vmatmul.f32.gmra.mxu0 %v453
        %v1160 = vpop.f32.mrf.mxu0
        %v1161 = vadd.f32 %v1069, %v1160
        %1162 = vmatmul.f32.gmra.mxu0 %v454
        %v1163 = vpop.f32.mrf.mxu0
        %v1164 = vadd.f32 %v1072, %v1163
        %1165 = vdwg.mxu0
        %1166 = vmatpush.msra.mxu0 %v581
        %1167 = vmatpush.msra.mxu0 %v580
        %1168 = vmatpush.msra.mxu0 %v579
        %1169 = vmatpush.msra.mxu0 %v578
        %1170 = vmatpush.msra.mxu0 %v577
        %1171 = vmatpush.msra.mxu0 %v576
        %1172 = vmatpush.msra.mxu0 %v575
        %1173 = vmatpush.msra.mxu0 %v574
        %1174 = vmatpush.msra.mxu0 %v573
        %1175 = vmatpush.msra.mxu0 %v572
        %1176 = vmatpush.msra.mxu0 %v571
        %1177 = vmatpush.msra.mxu0 %v570
        %1178 = vmatpush.msra.mxu0 %v569
        %1179 = vmatpush.msra.mxu0 %v568
        %1180 = vmatpush.msra.mxu0 %v567
        %1181 = vmatpush.msra.mxu0 %v566
        %1182 = vmatmul.f32.gmra.mxu0 %v310
        %v1183 = vpop.f32.mrf.mxu0
        %v1184 = vadd.f32 %v1092, %v1183
        %1185 = vmatmul.f32.gmra.mxu0 %v311
        %v1186 = vpop.f32.mrf.mxu0
        %v1187 = vadd.f32 %v1095, %v1186
        %1188 = vmatmul.f32.gmra.mxu0 %v312
        %v1189 = vpop.f32.mrf.mxu0
        %v1190 = vadd.f32 %v1098, %v1189
        %1191 = vmatmul.f32.gmra.mxu0 %v313
        %v1192 = vpop.f32.mrf.mxu0
        %v1193 = vadd.f32 %v1101, %v1192
        %1194 = vmatmul.f32.gmra.mxu0 %v314
        %v1195 = vpop.f32.mrf.mxu0
        %v1196 = vadd.f32 %v1104, %v1195
        %1197 = vmatmul.f32.gmra.mxu0 %v315
        %v1198 = vpop.f32.mrf.mxu0
        %v1199 = vadd.f32 %v1107, %v1198
        %1200 = vmatmul.f32.gmra.mxu0 %v316
        %v1201 = vpop.f32.mrf.mxu0
        %v1202 = vadd.f32 %v1110, %v1201
        %1203 = vmatmul.f32.gmra.mxu0 %v317
        %v1204 = vpop.f32.mrf.mxu0
        %v1205 = vadd.f32 %v1113, %v1204
        %1206 = vmatmul.f32.gmra.mxu0 %v318
        %v1207 = vpop.f32.mrf.mxu0
        %v1208 = vadd.f32 %v1116, %v1207
        %1209 = vmatmul.f32.gmra.mxu0 %v319
        %v1210 = vpop.f32.mrf.mxu0
        %v1211 = vadd.f32 %v1119, %v1210
        %1212 = vmatmul.f32.gmra.mxu0 %v320
        %v1213 = vpop.f32.mrf.mxu0
        %v1214 = vadd.f32 %v1122, %v1213
        %1215 = vmatmul.f32.gmra.mxu0 %v321
        %v1216 = vpop.f32.mrf.mxu0
        %v1217 = vadd.f32 %v1125, %v1216
        %1218 = vmatmul.f32.gmra.mxu0 %v322
        %v1219 = vpop.f32.mrf.mxu0
        %v1220 = vadd.f32 %v1128, %v1219
        %1221 = vmatmul.f32.gmra.mxu0 %v323
        %v1222 = vpop.f32.mrf.mxu0
        %v1223 = vadd.f32 %v1131, %v1222
        %1224 = vmatmul.f32.gmra.mxu0 %v324
        %v1225 = vpop.f32.mrf.mxu0
        %v1226 = vadd.f32 %v1134, %v1225
        %1227 = vmatmul.f32.gmra.mxu0 %v325
        %v1228 = vpop.f32.mrf.mxu0
        %v1229 = vadd.f32 %v1137, %v1228
        %1230 = vmatmul.f32.gmra.mxu0 %v326
        %v1231 = vpop.f32.mrf.mxu0
        %v1232 = vadd.f32 %v1140, %v1231
        %1233 = vmatmul.f32.gmra.mxu0 %v327
        %v1234 = vpop.f32.mrf.mxu0
        %v1235 = vadd.f32 %v1143, %v1234
        %1236 = vmatmul.f32.gmra.mxu0 %v328
        %v1237 = vpop.f32.mrf.mxu0
        %v1238 = vadd.f32 %v1146, %v1237
        %1239 = vmatmul.f32.gmra.mxu0 %v329
        %v1240 = vpop.f32.mrf.mxu0
        %v1241 = vadd.f32 %v1149, %v1240
        %1242 = vmatmul.f32.gmra.mxu0 %v455
        %v1243 = vpop.f32.mrf.mxu0
        %v1244 = vadd.f32 %v1152, %v1243
        %1245 = vmatmul.f32.gmra.mxu0 %v456
        %v1246 = vpop.f32.mrf.mxu0
        %v1247 = vadd.f32 %v1155, %v1246
        %1248 = vmatmul.f32.gmra.mxu0 %v457
        %v1249 = vpop.f32.mrf.mxu0
        %v1250 = vadd.f32 %v1158, %v1249
        %1251 = vmatmul.f32.gmra.mxu0 %v458
        %v1252 = vpop.f32.mrf.mxu0
        %v1253 = vadd.f32 %v1161, %v1252
        %1254 = vmatmul.f32.gmra.mxu0 %v459
        %v1255 = vpop.f32.mrf.mxu0
        %v1256 = vadd.f32 %v1164, %v1255
        %1257 = vdwg.mxu0
        %1258 = vmatpush.msra.mxu0 %v597
        %1259 = vmatpush.msra.mxu0 %v596
        %1260 = vmatpush.msra.mxu0 %v595
        %1261 = vmatpush.msra.mxu0 %v594
        %1262 = vmatpush.msra.mxu0 %v593
        %1263 = vmatpush.msra.mxu0 %v592
        %1264 = vmatpush.msra.mxu0 %v591
        %1265 = vmatpush.msra.mxu0 %v590
        %1266 = vmatpush.msra.mxu0 %v589
        %1267 = vmatpush.msra.mxu0 %v588
        %1268 = vmatpush.msra.mxu0 %v587
        %1269 = vmatpush.msra.mxu0 %v586
        %1270 = vmatpush.msra.mxu0 %v585
        %1271 = vmatpush.msra.mxu0 %v584
        %1272 = vmatpush.msra.mxu0 %v583
        %1273 = vmatpush.msra.mxu0 %v582
        %1274 = vmatmul.f32.gmra.mxu0 %v335
        %v1275 = vpop.f32.mrf.mxu0
        %v1276 = vadd.f32 %v1184, %v1275
        %1277 = vmatmul.f32.gmra.mxu0 %v336
        %v1278 = vpop.f32.mrf.mxu0
        %v1279 = vadd.f32 %v1187, %v1278
        %1280 = vmatmul.f32.gmra.mxu0 %v337
        %v1281 = vpop.f32.mrf.mxu0
        %v1282 = vadd.f32 %v1190, %v1281
        %1283 = vmatmul.f32.gmra.mxu0 %v338
        %v1284 = vpop.f32.mrf.mxu0
        %v1285 = vadd.f32 %v1193, %v1284
        %1286 = vmatmul.f32.gmra.mxu0 %v339
        %v1287 = vpop.f32.mrf.mxu0
        %v1288 = vadd.f32 %v1196, %v1287
        %1289 = vmatmul.f32.gmra.mxu0 %v340
        %v1290 = vpop.f32.mrf.mxu0
        %v1291 = vadd.f32 %v1199, %v1290
        %1292 = vmatmul.f32.gmra.mxu0 %v341
        %v1293 = vpop.f32.mrf.mxu0
        %v1294 = vadd.f32 %v1202, %v1293
        %1295 = vmatmul.f32.gmra.mxu0 %v342
        %v1296 = vpop.f32.mrf.mxu0
        %v1297 = vadd.f32 %v1205, %v1296
        %1298 = vmatmul.f32.gmra.mxu0 %v343
        %v1299 = vpop.f32.mrf.mxu0
        %v1300 = vadd.f32 %v1208, %v1299
        %1301 = vmatmul.f32.gmra.mxu0 %v344
        %v1302 = vpop.f32.mrf.mxu0
        %v1303 = vadd.f32 %v1211, %v1302
        %1304 = vmatmul.f32.gmra.mxu0 %v345
        %v1305 = vpop.f32.mrf.mxu0
        %v1306 = vadd.f32 %v1214, %v1305
        %1307 = vmatmul.f32.gmra.mxu0 %v346
        %v1308 = vpop.f32.mrf.mxu0
        %v1309 = vadd.f32 %v1217, %v1308
        %1310 = vmatmul.f32.gmra.mxu0 %v347
        %v1311 = vpop.f32.mrf.mxu0
        %v1312 = vadd.f32 %v1220, %v1311
        %1313 = vmatmul.f32.gmra.mxu0 %v348
        %v1314 = vpop.f32.mrf.mxu0
        %v1315 = vadd.f32 %v1223, %v1314
        %1316 = vmatmul.f32.gmra.mxu0 %v349
        %v1317 = vpop.f32.mrf.mxu0
        %v1318 = vadd.f32 %v1226, %v1317
        %1319 = vmatmul.f32.gmra.mxu0 %v350
        %v1320 = vpop.f32.mrf.mxu0
        %v1321 = vadd.f32 %v1229, %v1320
        %1322 = vmatmul.f32.gmra.mxu0 %v351
        %v1323 = vpop.f32.mrf.mxu0
        %v1324 = vadd.f32 %v1232, %v1323
        %1325 = vmatmul.f32.gmra.mxu0 %v352
        %v1326 = vpop.f32.mrf.mxu0
        %v1327 = vadd.f32 %v1235, %v1326
        %1328 = vmatmul.f32.gmra.mxu0 %v353
        %v1329 = vpop.f32.mrf.mxu0
        %v1330 = vadd.f32 %v1238, %v1329
        %1331 = vmatmul.f32.gmra.mxu0 %v354
        %v1332 = vpop.f32.mrf.mxu0
        %v1333 = vadd.f32 %v1241, %v1332
        %1334 = vmatmul.f32.gmra.mxu0 %v460
        %v1335 = vpop.f32.mrf.mxu0
        %v1336 = vadd.f32 %v1244, %v1335
        %1337 = vmatmul.f32.gmra.mxu0 %v461
        %v1338 = vpop.f32.mrf.mxu0
        %v1339 = vadd.f32 %v1247, %v1338
        %1340 = vmatmul.f32.gmra.mxu0 %v462
        %v1341 = vpop.f32.mrf.mxu0
        %v1342 = vadd.f32 %v1250, %v1341
        %1343 = vmatmul.f32.gmra.mxu0 %v463
        %v1344 = vpop.f32.mrf.mxu0
        %v1345 = vadd.f32 %v1253, %v1344
        %1346 = vmatmul.f32.gmra.mxu0 %v464
        %v1347 = vpop.f32.mrf.mxu0
        %v1348 = vadd.f32 %v1256, %v1347
        %1349 = vdwg.mxu0
        %1350 = vmatpush.msra.mxu0 %v613
        %1351 = vmatpush.msra.mxu0 %v612
        %1352 = vmatpush.msra.mxu0 %v611
        %1353 = vmatpush.msra.mxu0 %v610
        %1354 = vmatpush.msra.mxu0 %v609
        %1355 = vmatpush.msra.mxu0 %v608
        %1356 = vmatpush.msra.mxu0 %v607
        %1357 = vmatpush.msra.mxu0 %v606
        %1358 = vmatpush.msra.mxu0 %v605
        %1359 = vmatpush.msra.mxu0 %v604
        %1360 = vmatpush.msra.mxu0 %v603
        %1361 = vmatpush.msra.mxu0 %v602
        %1362 = vmatpush.msra.mxu0 %v601
        %1363 = vmatpush.msra.mxu0 %v600
        %1364 = vmatpush.msra.mxu0 %v599
        %1365 = vmatpush.msra.mxu0 %v598
        %1366 = vmatmul.f32.gmra.mxu0 %v360
        %v1367 = vpop.f32.mrf.mxu0
        %v1368 = vadd.f32 %v1276, %v1367
        %1369 = vmatmul.f32.gmra.mxu0 %v361
        %v1370 = vpop.f32.mrf.mxu0
        %v1371 = vadd.f32 %v1279, %v1370
        %1372 = vmatmul.f32.gmra.mxu0 %v362
        %v1373 = vpop.f32.mrf.mxu0
        %v1374 = vadd.f32 %v1282, %v1373
        %1375 = vmatmul.f32.gmra.mxu0 %v363
        %v1376 = vpop.f32.mrf.mxu0
        %v1377 = vadd.f32 %v1285, %v1376
        %1378 = vmatmul.f32.gmra.mxu0 %v364
        %v1379 = vpop.f32.mrf.mxu0
        %v1380 = vadd.f32 %v1288, %v1379
        %1381 = vmatmul.f32.gmra.mxu0 %v365
        %v1382 = vpop.f32.mrf.mxu0
        %v1383 = vadd.f32 %v1291, %v1382
        %1384 = vmatmul.f32.gmra.mxu0 %v366
        %v1385 = vpop.f32.mrf.mxu0
        %v1386 = vadd.f32 %v1294, %v1385
        %1387 = vmatmul.f32.gmra.mxu0 %v367
        %v1388 = vpop.f32.mrf.mxu0
        %v1389 = vadd.f32 %v1297, %v1388
        %1390 = vmatmul.f32.gmra.mxu0 %v368
        %v1391 = vpop.f32.mrf.mxu0
        %v1392 = vadd.f32 %v1300, %v1391
        %1393 = vmatmul.f32.gmra.mxu0 %v369
        %v1394 = vpop.f32.mrf.mxu0
        %v1395 = vadd.f32 %v1303, %v1394
        %1396 = vmatmul.f32.gmra.mxu0 %v370
        %v1397 = vpop.f32.mrf.mxu0
        %v1398 = vadd.f32 %v1306, %v1397
        %1399 = vmatmul.f32.gmra.mxu0 %v371
        %v1400 = vpop.f32.mrf.mxu0
        %v1401 = vadd.f32 %v1309, %v1400
        %1402 = vmatmul.f32.gmra.mxu0 %v372
        %v1403 = vpop.f32.mrf.mxu0
        %v1404 = vadd.f32 %v1312, %v1403
        %1405 = vmatmul.f32.gmra.mxu0 %v373
        %v1406 = vpop.f32.mrf.mxu0
        %v1407 = vadd.f32 %v1315, %v1406
        %1408 = vmatmul.f32.gmra.mxu0 %v374
        %v1409 = vpop.f32.mrf.mxu0
        %v1410 = vadd.f32 %v1318, %v1409
        %1411 = vmatmul.f32.gmra.mxu0 %v375
        %v1412 = vpop.f32.mrf.mxu0
        %v1413 = vadd.f32 %v1321, %v1412
        %1414 = vmatmul.f32.gmra.mxu0 %v376
        %v1415 = vpop.f32.mrf.mxu0
        %v1416 = vadd.f32 %v1324, %v1415
        %1417 = vmatmul.f32.gmra.mxu0 %v377
        %v1418 = vpop.f32.mrf.mxu0
        %v1419 = vadd.f32 %v1327, %v1418
        %1420 = vmatmul.f32.gmra.mxu0 %v378
        %v1421 = vpop.f32.mrf.mxu0
        %v1422 = vadd.f32 %v1330, %v1421
        %1423 = vmatmul.f32.gmra.mxu0 %v379
        %v1424 = vpop.f32.mrf.mxu0
        %v1425 = vadd.f32 %v1333, %v1424
        %1426 = vmatmul.f32.gmra.mxu0 %v465
        %v1427 = vpop.f32.mrf.mxu0
        %v1428 = vadd.f32 %v1336, %v1427
        %1429 = vmatmul.f32.gmra.mxu0 %v466
        %v1430 = vpop.f32.mrf.mxu0
        %v1431 = vadd.f32 %v1339, %v1430
        %1432 = vmatmul.f32.gmra.mxu0 %v467
        %v1433 = vpop.f32.mrf.mxu0
        %v1434 = vadd.f32 %v1342, %v1433
        %1435 = vmatmul.f32.gmra.mxu0 %v468
        %v1436 = vpop.f32.mrf.mxu0
        %v1437 = vadd.f32 %v1345, %v1436
        %1438 = vmatmul.f32.gmra.mxu0 %v469
        %v1439 = vpop.f32.mrf.mxu0
        %v1440 = vadd.f32 %v1348, %v1439
        %1441 = vdwg.mxu0
        %v1442 = vld [vmem:[%s2] sm:$0x1]
        %v1444 = vperm.slane %v1442, 0
        %v1446 = vmul.f32 %v1368, %v1444
        %v1447 = vmul.f32 %v1371, %v1444
        %v1448 = vmul.f32 %v1374, %v1444
        %v1449 = vmul.f32 %v1377, %v1444
        %v1450 = vmul.f32 %v1380, %v1444
        %v1451 = vmul.f32 %v1383, %v1444
        %v1452 = vmul.f32 %v1386, %v1444
        %v1453 = vmul.f32 %v1389, %v1444
        %v1454 = vmul.f32 %v1392, %v1444
        %v1455 = vmul.f32 %v1395, %v1444
        %v1456 = vmul.f32 %v1398, %v1444
        %v1457 = vmul.f32 %v1401, %v1444
        %v1458 = vmul.f32 %v1404, %v1444
        %v1459 = vmul.f32 %v1407, %v1444
        %v1460 = vmul.f32 %v1410, %v1444
        %v1461 = vmul.f32 %v1413, %v1444
        %v1462 = vmul.f32 %v1416, %v1444
        %v1463 = vmul.f32 %v1419, %v1444
        %v1464 = vmul.f32 %v1422, %v1444
        %v1465 = vmul.f32 %v1425, %v1444
        %v1466 = vmul.f32 %v1428, %v1444
        %v1467 = vmul.f32 %v1431, %v1444
        %v1468 = vmul.f32 %v1434, %v1444
        %v1469 = vmul.f32 %v1437, %v1444
        %v1470 = vmul.f32 %v1440, %v1444
        %v1471 = vld [vmem:[%s3] sm:$0x1]
        %v1473 = vperm.slane %v1471, 0
        %v1475 = vadd.f32 %v1446, %v1473
        %v1476 = vadd.f32 %v1447, %v1473
        %v1477 = vadd.f32 %v1448, %v1473
        %v1478 = vadd.f32 %v1449, %v1473
        %v1479 = vadd.f32 %v1450, %v1473
        %v1480 = vadd.f32 %v1451, %v1473
        %v1481 = vadd.f32 %v1452, %v1473
        %v1482 = vadd.f32 %v1453, %v1473
        %v1483 = vadd.f32 %v1454, %v1473
        %v1484 = vadd.f32 %v1455, %v1473
        %v1485 = vadd.f32 %v1456, %v1473
        %v1486 = vadd.f32 %v1457, %v1473
        %v1487 = vadd.f32 %v1458, %v1473
        %v1488 = vadd.f32 %v1459, %v1473
        %v1489 = vadd.f32 %v1460, %v1473
        %v1490 = vadd.f32 %v1461, %v1473
        %v1491 = vadd.f32 %v1462, %v1473
        %v1492 = vadd.f32 %v1463, %v1473
        %v1493 = vadd.f32 %v1464, %v1473
        %v1494 = vadd.f32 %v1465, %v1473
        %v1495 = vadd.f32 %v1466, %v1473
        %v1496 = vadd.f32 %v1467, %v1473
        %v1497 = vadd.f32 %v1468, %v1473
        %v1498 = vadd.f32 %v1469, %v1473
        %v1499 = vadd.f32 %v1470, %v1473
        %v1500 = vsub.f32 0.0, %v1475
        %v1501 = vsub.f32 0.0, %v1476
        %v1502 = vsub.f32 0.0, %v1477
        %v1503 = vsub.f32 0.0, %v1478
        %v1504 = vsub.f32 0.0, %v1479
        %v1505 = vsub.f32 0.0, %v1480
        %v1506 = vsub.f32 0.0, %v1481
        %v1507 = vsub.f32 0.0, %v1482
        %v1508 = vsub.f32 0.0, %v1483
        %v1509 = vsub.f32 0.0, %v1484
        %v1510 = vsub.f32 0.0, %v1485
        %v1511 = vsub.f32 0.0, %v1486
        %v1512 = vsub.f32 0.0, %v1487
        %v1513 = vsub.f32 0.0, %v1488
        %v1514 = vsub.f32 0.0, %v1489
        %v1515 = vsub.f32 0.0, %v1490
        %v1516 = vsub.f32 0.0, %v1491
        %v1517 = vsub.f32 0.0, %v1492
        %v1518 = vsub.f32 0.0, %v1493
        %v1519 = vsub.f32 0.0, %v1494
        %v1520 = vsub.f32 0.0, %v1495
        %v1521 = vsub.f32 0.0, %v1496
        %v1522 = vsub.f32 0.0, %v1497
        %v1523 = vsub.f32 0.0, %v1498
        %v1524 = vsub.f32 0.0, %v1499
        %v1525 = vmul.f32 %v1500, 1.442695
        %v1526 = vpow.pop %v1525
        %v1527 = vmul.f32 %v1501, 1.442695
        %v1528 = vpow.pop %v1527
        %v1529 = vmul.f32 %v1502, 1.442695
        %v1530 = vpow.pop %v1529
        %v1531 = vmul.f32 %v1503, 1.442695
        %v1532 = vpow.pop %v1531
        %v1533 = vmul.f32 %v1504, 1.442695
        %v1534 = vpow.pop %v1533
        %v1535 = vmul.f32 %v1505, 1.442695
        %v1536 = vpow.pop %v1535
        %v1537 = vmul.f32 %v1506, 1.442695
        %v1538 = vpow.pop %v1537
        %v1539 = vmul.f32 %v1507, 1.442695
        %v1540 = vpow.pop %v1539
        %v1541 = vmul.f32 %v1508, 1.442695
        %v1542 = vpow.pop %v1541
        %v1543 = vmul.f32 %v1509, 1.442695
        %v1544 = vpow.pop %v1543
        %v1545 = vmul.f32 %v1510, 1.442695
        %v1546 = vpow.pop %v1545
        %v1547 = vmul.f32 %v1511, 1.442695
        %v1548 = vpow.pop %v1547
        %v1549 = vmul.f32 %v1512, 1.442695
        %v1550 = vpow.pop %v1549
        %v1551 = vmul.f32 %v1513, 1.442695
        %v1552 = vpow.pop %v1551
        %v1553 = vmul.f32 %v1514, 1.442695
        %v1554 = vpow.pop %v1553
        %v1555 = vmul.f32 %v1515, 1.442695
        %v1556 = vpow.pop %v1555
        %v1557 = vmul.f32 %v1516, 1.442695
        %v1558 = vpow.pop %v1557
        %v1559 = vmul.f32 %v1517, 1.442695
        %v1560 = vpow.pop %v1559
        %v1561 = vmul.f32 %v1518, 1.442695
        %v1562 = vpow.pop %v1561
        %v1563 = vmul.f32 %v1519, 1.442695
        %v1564 = vpow.pop %v1563
        %v1565 = vmul.f32 %v1520, 1.442695
        %v1566 = vpow.pop %v1565
        %v1567 = vmul.f32 %v1521, 1.442695
        %v1568 = vpow.pop %v1567
        %v1569 = vmul.f32 %v1522, 1.442695
        %v1570 = vpow.pop %v1569
        %v1571 = vmul.f32 %v1523, 1.442695
        %v1572 = vpow.pop %v1571
        %v1573 = vmul.f32 %v1524, 1.442695
        %v1574 = vpow.pop %v1573
        %v1575 = vadd.f32 %v1526, 1.0
        %v1576 = vadd.f32 %v1528, 1.0
        %v1577 = vadd.f32 %v1530, 1.0
        %v1578 = vadd.f32 %v1532, 1.0
        %v1579 = vadd.f32 %v1534, 1.0
        %v1580 = vadd.f32 %v1536, 1.0
        %v1581 = vadd.f32 %v1538, 1.0
        %v1582 = vadd.f32 %v1540, 1.0
        %v1583 = vadd.f32 %v1542, 1.0
        %v1584 = vadd.f32 %v1544, 1.0
        %v1585 = vadd.f32 %v1546, 1.0
        %v1586 = vadd.f32 %v1548, 1.0
        %v1587 = vadd.f32 %v1550, 1.0
        %v1588 = vadd.f32 %v1552, 1.0
        %v1589 = vadd.f32 %v1554, 1.0
        %v1590 = vadd.f32 %v1556, 1.0
        %v1591 = vadd.f32 %v1558, 1.0
        %v1592 = vadd.f32 %v1560, 1.0
        %v1593 = vadd.f32 %v1562, 1.0
        %v1594 = vadd.f32 %v1564, 1.0
        %v1595 = vadd.f32 %v1566, 1.0
        %v1596 = vadd.f32 %v1568, 1.0
        %v1597 = vadd.f32 %v1570, 1.0
        %v1598 = vadd.f32 %v1572, 1.0
        %v1599 = vadd.f32 %v1574, 1.0
        %v1600 = vrcp.pop %v1575
        %v1601 = vmul.f32 %v1575, %v1600
        %v1602 = vsub.f32 1.0, %v1601
        %v1603 = vmul.f32 %v1600, %v1602
        %v1604 = vadd.f32 %v1600, %v1603
        %vm1605 = vweird.f32 %v1575
        %vm1606 = vweird.f32 %v1600
        %vm1607 = vmor %vm1605, %vm1606
        %v1608 = vsel %vm1607, %v1600, %v1604
        %v1609 = vand.u32 2147483647, %v1575
        %vm1610 = vcmp.eq.f32.partialorder %v1609, 8.507059e+37
        %v1611 = vand.u32 %v1575, 2147483648
        %v1612 = vor.u32 1.1754944e-38, %v1611
        %v1613 = vsel %vm1610, %v1612, %v1608
        %v1614 = vmul.f32 1.0, %v1613
        %v1615 = vrcp.pop %v1576
        %v1616 = vmul.f32 %v1576, %v1615
        %v1617 = vsub.f32 1.0, %v1616
        %v1618 = vmul.f32 %v1615, %v1617
        %v1619 = vadd.f32 %v1615, %v1618
        %vm1620 = vweird.f32 %v1576
        %vm1621 = vweird.f32 %v1615
        %vm1622 = vmor %vm1620, %vm1621
        %v1623 = vsel %vm1622, %v1615, %v1619
        %v1624 = vand.u32 2147483647, %v1576
        %vm1625 = vcmp.eq.f32.partialorder %v1624, 8.507059e+37
        %v1626 = vand.u32 %v1576, 2147483648
        %v1627 = vor.u32 1.1754944e-38, %v1626
        %v1628 = vsel %vm1625, %v1627, %v1623
        %v1629 = vmul.f32 1.0, %v1628
        %v1630 = vrcp.pop %v1577
        %v1631 = vmul.f32 %v1577, %v1630
        %v1632 = vsub.f32 1.0, %v1631
        %v1633 = vmul.f32 %v1630, %v1632
        %v1634 = vadd.f32 %v1630, %v1633
        %vm1635 = vweird.f32 %v1577
        %vm1636 = vweird.f32 %v1630
        %vm1637 = vmor %vm1635, %vm1636
        %v1638 = vsel %vm1637, %v1630, %v1634
        %v1639 = vand.u32 2147483647, %v1577
        %vm1640 = vcmp.eq.f32.partialorder %v1639, 8.507059e+37
        %v1641 = vand.u32 %v1577, 2147483648
        %v1642 = vor.u32 1.1754944e-38, %v1641
        %v1643 = vsel %vm1640, %v1642, %v1638
        %v1644 = vmul.f32 1.0, %v1643
        %v1645 = vrcp.pop %v1578
        %v1646 = vmul.f32 %v1578, %v1645
        %v1647 = vsub.f32 1.0, %v1646
        %v1648 = vmul.f32 %v1645, %v1647
        %v1649 = vadd.f32 %v1645, %v1648
        %vm1650 = vweird.f32 %v1578
        %vm1651 = vweird.f32 %v1645
        %vm1652 = vmor %vm1650, %vm1651
        %v1653 = vsel %vm1652, %v1645, %v1649
        %v1654 = vand.u32 2147483647, %v1578
        %vm1655 = vcmp.eq.f32.partialorder %v1654, 8.507059e+37
        %v1656 = vand.u32 %v1578, 2147483648
        %v1657 = vor.u32 1.1754944e-38, %v1656
        %v1658 = vsel %vm1655, %v1657, %v1653
        %v1659 = vmul.f32 1.0, %v1658
        %v1660 = vrcp.pop %v1579
        %v1661 = vmul.f32 %v1579, %v1660
        %v1662 = vsub.f32 1.0, %v1661
        %v1663 = vmul.f32 %v1660, %v1662
        %v1664 = vadd.f32 %v1660, %v1663
        %vm1665 = vweird.f32 %v1579
        %vm1666 = vweird.f32 %v1660
        %vm1667 = vmor %vm1665, %vm1666
        %v1668 = vsel %vm1667, %v1660, %v1664
        %v1669 = vand.u32 2147483647, %v1579
        %vm1670 = vcmp.eq.f32.partialorder %v1669, 8.507059e+37
        %v1671 = vand.u32 %v1579, 2147483648
        %v1672 = vor.u32 1.1754944e-38, %v1671
        %v1673 = vsel %vm1670, %v1672, %v1668
        %v1674 = vmul.f32 1.0, %v1673
        %v1675 = vrcp.pop %v1580
        %v1676 = vmul.f32 %v1580, %v1675
        %v1677 = vsub.f32 1.0, %v1676
        %v1678 = vmul.f32 %v1675, %v1677
        %v1679 = vadd.f32 %v1675, %v1678
        %vm1680 = vweird.f32 %v1580
        %vm1681 = vweird.f32 %v1675
        %vm1682 = vmor %vm1680, %vm1681
        %v1683 = vsel %vm1682, %v1675, %v1679
        %v1684 = vand.u32 2147483647, %v1580
        %vm1685 = vcmp.eq.f32.partialorder %v1684, 8.507059e+37
        %v1686 = vand.u32 %v1580, 2147483648
        %v1687 = vor.u32 1.1754944e-38, %v1686
        %v1688 = vsel %vm1685, %v1687, %v1683
        %v1689 = vmul.f32 1.0, %v1688
        %v1690 = vrcp.pop %v1581
        %v1691 = vmul.f32 %v1581, %v1690
        %v1692 = vsub.f32 1.0, %v1691
        %v1693 = vmul.f32 %v1690, %v1692
        %v1694 = vadd.f32 %v1690, %v1693
        %vm1695 = vweird.f32 %v1581
        %vm1696 = vweird.f32 %v1690
        %vm1697 = vmor %vm1695, %vm1696
        %v1698 = vsel %vm1697, %v1690, %v1694
        %v1699 = vand.u32 2147483647, %v1581
        %vm1700 = vcmp.eq.f32.partialorder %v1699, 8.507059e+37
        %v1701 = vand.u32 %v1581, 2147483648
        %v1702 = vor.u32 1.1754944e-38, %v1701
        %v1703 = vsel %vm1700, %v1702, %v1698
        %v1704 = vmul.f32 1.0, %v1703
        %v1705 = vrcp.pop %v1582
        %v1706 = vmul.f32 %v1582, %v1705
        %v1707 = vsub.f32 1.0, %v1706
        %v1708 = vmul.f32 %v1705, %v1707
        %v1709 = vadd.f32 %v1705, %v1708
        %vm1710 = vweird.f32 %v1582
        %vm1711 = vweird.f32 %v1705
        %vm1712 = vmor %vm1710, %vm1711
        %v1713 = vsel %vm1712, %v1705, %v1709
        %v1714 = vand.u32 2147483647, %v1582
        %vm1715 = vcmp.eq.f32.partialorder %v1714, 8.507059e+37
        %v1716 = vand.u32 %v1582, 2147483648
        %v1717 = vor.u32 1.1754944e-38, %v1716
        %v1718 = vsel %vm1715, %v1717, %v1713
        %v1719 = vmul.f32 1.0, %v1718
        %v1720 = vrcp.pop %v1583
        %v1721 = vmul.f32 %v1583, %v1720
        %v1722 = vsub.f32 1.0, %v1721
        %v1723 = vmul.f32 %v1720, %v1722
        %v1724 = vadd.f32 %v1720, %v1723
        %vm1725 = vweird.f32 %v1583
        %vm1726 = vweird.f32 %v1720
        %vm1727 = vmor %vm1725, %vm1726
        %v1728 = vsel %vm1727, %v1720, %v1724
        %v1729 = vand.u32 2147483647, %v1583
        %vm1730 = vcmp.eq.f32.partialorder %v1729, 8.507059e+37
        %v1731 = vand.u32 %v1583, 2147483648
        %v1732 = vor.u32 1.1754944e-38, %v1731
        %v1733 = vsel %vm1730, %v1732, %v1728
        %v1734 = vmul.f32 1.0, %v1733
        %v1735 = vrcp.pop %v1584
        %v1736 = vmul.f32 %v1584, %v1735
        %v1737 = vsub.f32 1.0, %v1736
        %v1738 = vmul.f32 %v1735, %v1737
        %v1739 = vadd.f32 %v1735, %v1738
        %vm1740 = vweird.f32 %v1584
        %vm1741 = vweird.f32 %v1735
        %vm1742 = vmor %vm1740, %vm1741
        %v1743 = vsel %vm1742, %v1735, %v1739
        %v1744 = vand.u32 2147483647, %v1584
        %vm1745 = vcmp.eq.f32.partialorder %v1744, 8.507059e+37
        %v1746 = vand.u32 %v1584, 2147483648
        %v1747 = vor.u32 1.1754944e-38, %v1746
        %v1748 = vsel %vm1745, %v1747, %v1743
        %v1749 = vmul.f32 1.0, %v1748
        %v1750 = vrcp.pop %v1585
        %v1751 = vmul.f32 %v1585, %v1750
        %v1752 = vsub.f32 1.0, %v1751
        %v1753 = vmul.f32 %v1750, %v1752
        %v1754 = vadd.f32 %v1750, %v1753
        %vm1755 = vweird.f32 %v1585
        %vm1756 = vweird.f32 %v1750
        %vm1757 = vmor %vm1755, %vm1756
        %v1758 = vsel %vm1757, %v1750, %v1754
        %v1759 = vand.u32 2147483647, %v1585
        %vm1760 = vcmp.eq.f32.partialorder %v1759, 8.507059e+37
        %v1761 = vand.u32 %v1585, 2147483648
        %v1762 = vor.u32 1.1754944e-38, %v1761
        %v1763 = vsel %vm1760, %v1762, %v1758
        %v1764 = vmul.f32 1.0, %v1763
        %v1765 = vrcp.pop %v1586
        %v1766 = vmul.f32 %v1586, %v1765
        %v1767 = vsub.f32 1.0, %v1766
        %v1768 = vmul.f32 %v1765, %v1767
        %v1769 = vadd.f32 %v1765, %v1768
        %vm1770 = vweird.f32 %v1586
        %vm1771 = vweird.f32 %v1765
        %vm1772 = vmor %vm1770, %vm1771
        %v1773 = vsel %vm1772, %v1765, %v1769
        %v1774 = vand.u32 2147483647, %v1586
        %vm1775 = vcmp.eq.f32.partialorder %v1774, 8.507059e+37
        %v1776 = vand.u32 %v1586, 2147483648
        %v1777 = vor.u32 1.1754944e-38, %v1776
        %v1778 = vsel %vm1775, %v1777, %v1773
        %v1779 = vmul.f32 1.0, %v1778
        %v1780 = vrcp.pop %v1587
        %v1781 = vmul.f32 %v1587, %v1780
        %v1782 = vsub.f32 1.0, %v1781
        %v1783 = vmul.f32 %v1780, %v1782
        %v1784 = vadd.f32 %v1780, %v1783
        %vm1785 = vweird.f32 %v1587
        %vm1786 = vweird.f32 %v1780
        %vm1787 = vmor %vm1785, %vm1786
        %v1788 = vsel %vm1787, %v1780, %v1784
        %v1789 = vand.u32 2147483647, %v1587
        %vm1790 = vcmp.eq.f32.partialorder %v1789, 8.507059e+37
        %v1791 = vand.u32 %v1587, 2147483648
        %v1792 = vor.u32 1.1754944e-38, %v1791
        %v1793 = vsel %vm1790, %v1792, %v1788
        %v1794 = vmul.f32 1.0, %v1793
        %v1795 = vrcp.pop %v1588
        %v1796 = vmul.f32 %v1588, %v1795
        %v1797 = vsub.f32 1.0, %v1796
        %v1798 = vmul.f32 %v1795, %v1797
        %v1799 = vadd.f32 %v1795, %v1798
        %vm1800 = vweird.f32 %v1588
        %vm1801 = vweird.f32 %v1795
        %vm1802 = vmor %vm1800, %vm1801
        %v1803 = vsel %vm1802, %v1795, %v1799
        %v1804 = vand.u32 2147483647, %v1588
        %vm1805 = vcmp.eq.f32.partialorder %v1804, 8.507059e+37
        %v1806 = vand.u32 %v1588, 2147483648
        %v1807 = vor.u32 1.1754944e-38, %v1806
        %v1808 = vsel %vm1805, %v1807, %v1803
        %v1809 = vmul.f32 1.0, %v1808
        %v1810 = vrcp.pop %v1589
        %v1811 = vmul.f32 %v1589, %v1810
        %v1812 = vsub.f32 1.0, %v1811
        %v1813 = vmul.f32 %v1810, %v1812
        %v1814 = vadd.f32 %v1810, %v1813
        %vm1815 = vweird.f32 %v1589
        %vm1816 = vweird.f32 %v1810
        %vm1817 = vmor %vm1815, %vm1816
        %v1818 = vsel %vm1817, %v1810, %v1814
        %v1819 = vand.u32 2147483647, %v1589
        %vm1820 = vcmp.eq.f32.partialorder %v1819, 8.507059e+37
        %v1821 = vand.u32 %v1589, 2147483648
        %v1822 = vor.u32 1.1754944e-38, %v1821
        %v1823 = vsel %vm1820, %v1822, %v1818
        %v1824 = vmul.f32 1.0, %v1823
        %v1825 = vrcp.pop %v1590
        %v1826 = vmul.f32 %v1590, %v1825
        %v1827 = vsub.f32 1.0, %v1826
        %v1828 = vmul.f32 %v1825, %v1827
        %v1829 = vadd.f32 %v1825, %v1828
        %vm1830 = vweird.f32 %v1590
        %vm1831 = vweird.f32 %v1825
        %vm1832 = vmor %vm1830, %vm1831
        %v1833 = vsel %vm1832, %v1825, %v1829
        %v1834 = vand.u32 2147483647, %v1590
        %vm1835 = vcmp.eq.f32.partialorder %v1834, 8.507059e+37
        %v1836 = vand.u32 %v1590, 2147483648
        %v1837 = vor.u32 1.1754944e-38, %v1836
        %v1838 = vsel %vm1835, %v1837, %v1833
        %v1839 = vmul.f32 1.0, %v1838
        %v1840 = vrcp.pop %v1591
        %v1841 = vmul.f32 %v1591, %v1840
        %v1842 = vsub.f32 1.0, %v1841
        %v1843 = vmul.f32 %v1840, %v1842
        %v1844 = vadd.f32 %v1840, %v1843
        %vm1845 = vweird.f32 %v1591
        %vm1846 = vweird.f32 %v1840
        %vm1847 = vmor %vm1845, %vm1846
        %v1848 = vsel %vm1847, %v1840, %v1844
        %v1849 = vand.u32 2147483647, %v1591
        %vm1850 = vcmp.eq.f32.partialorder %v1849, 8.507059e+37
        %v1851 = vand.u32 %v1591, 2147483648
        %v1852 = vor.u32 1.1754944e-38, %v1851
        %v1853 = vsel %vm1850, %v1852, %v1848
        %v1854 = vmul.f32 1.0, %v1853
        %v1855 = vrcp.pop %v1592
        %v1856 = vmul.f32 %v1592, %v1855
        %v1857 = vsub.f32 1.0, %v1856
        %v1858 = vmul.f32 %v1855, %v1857
        %v1859 = vadd.f32 %v1855, %v1858
        %vm1860 = vweird.f32 %v1592
        %vm1861 = vweird.f32 %v1855
        %vm1862 = vmor %vm1860, %vm1861
        %v1863 = vsel %vm1862, %v1855, %v1859
        %v1864 = vand.u32 2147483647, %v1592
        %vm1865 = vcmp.eq.f32.partialorder %v1864, 8.507059e+37
        %v1866 = vand.u32 %v1592, 2147483648
        %v1867 = vor.u32 1.1754944e-38, %v1866
        %v1868 = vsel %vm1865, %v1867, %v1863
        %v1869 = vmul.f32 1.0, %v1868
        %v1870 = vrcp.pop %v1593
        %v1871 = vmul.f32 %v1593, %v1870
        %v1872 = vsub.f32 1.0, %v1871
        %v1873 = vmul.f32 %v1870, %v1872
        %v1874 = vadd.f32 %v1870, %v1873
        %vm1875 = vweird.f32 %v1593
        %vm1876 = vweird.f32 %v1870
        %vm1877 = vmor %vm1875, %vm1876
        %v1878 = vsel %vm1877, %v1870, %v1874
        %v1879 = vand.u32 2147483647, %v1593
        %vm1880 = vcmp.eq.f32.partialorder %v1879, 8.507059e+37
        %v1881 = vand.u32 %v1593, 2147483648
        %v1882 = vor.u32 1.1754944e-38, %v1881
        %v1883 = vsel %vm1880, %v1882, %v1878
        %v1884 = vmul.f32 1.0, %v1883
        %v1885 = vrcp.pop %v1594
        %v1886 = vmul.f32 %v1594, %v1885
        %v1887 = vsub.f32 1.0, %v1886
        %v1888 = vmul.f32 %v1885, %v1887
        %v1889 = vadd.f32 %v1885, %v1888
        %vm1890 = vweird.f32 %v1594
        %vm1891 = vweird.f32 %v1885
        %vm1892 = vmor %vm1890, %vm1891
        %v1893 = vsel %vm1892, %v1885, %v1889
        %v1894 = vand.u32 2147483647, %v1594
        %vm1895 = vcmp.eq.f32.partialorder %v1894, 8.507059e+37
        %v1896 = vand.u32 %v1594, 2147483648
        %v1897 = vor.u32 1.1754944e-38, %v1896
        %v1898 = vsel %vm1895, %v1897, %v1893
        %v1899 = vmul.f32 1.0, %v1898
        %v1900 = vrcp.pop %v1595
        %v1901 = vmul.f32 %v1595, %v1900
        %v1902 = vsub.f32 1.0, %v1901
        %v1903 = vmul.f32 %v1900, %v1902
        %v1904 = vadd.f32 %v1900, %v1903
        %vm1905 = vweird.f32 %v1595
        %vm1906 = vweird.f32 %v1900
        %vm1907 = vmor %vm1905, %vm1906
        %v1908 = vsel %vm1907, %v1900, %v1904
        %v1909 = vand.u32 2147483647, %v1595
        %vm1910 = vcmp.eq.f32.partialorder %v1909, 8.507059e+37
        %v1911 = vand.u32 %v1595, 2147483648
        %v1912 = vor.u32 1.1754944e-38, %v1911
        %v1913 = vsel %vm1910, %v1912, %v1908
        %v1914 = vmul.f32 1.0, %v1913
        %v1915 = vrcp.pop %v1596
        %v1916 = vmul.f32 %v1596, %v1915
        %v1917 = vsub.f32 1.0, %v1916
        %v1918 = vmul.f32 %v1915, %v1917
        %v1919 = vadd.f32 %v1915, %v1918
        %vm1920 = vweird.f32 %v1596
        %vm1921 = vweird.f32 %v1915
        %vm1922 = vmor %vm1920, %vm1921
        %v1923 = vsel %vm1922, %v1915, %v1919
        %v1924 = vand.u32 2147483647, %v1596
        %vm1925 = vcmp.eq.f32.partialorder %v1924, 8.507059e+37
        %v1926 = vand.u32 %v1596, 2147483648
        %v1927 = vor.u32 1.1754944e-38, %v1926
        %v1928 = vsel %vm1925, %v1927, %v1923
        %v1929 = vmul.f32 1.0, %v1928
        %v1930 = vrcp.pop %v1597
        %v1931 = vmul.f32 %v1597, %v1930
        %v1932 = vsub.f32 1.0, %v1931
        %v1933 = vmul.f32 %v1930, %v1932
        %v1934 = vadd.f32 %v1930, %v1933
        %vm1935 = vweird.f32 %v1597
        %vm1936 = vweird.f32 %v1930
        %vm1937 = vmor %vm1935, %vm1936
        %v1938 = vsel %vm1937, %v1930, %v1934
        %v1939 = vand.u32 2147483647, %v1597
        %vm1940 = vcmp.eq.f32.partialorder %v1939, 8.507059e+37
        %v1941 = vand.u32 %v1597, 2147483648
        %v1942 = vor.u32 1.1754944e-38, %v1941
        %v1943 = vsel %vm1940, %v1942, %v1938
        %v1944 = vmul.f32 1.0, %v1943
        %v1945 = vrcp.pop %v1598
        %v1946 = vmul.f32 %v1598, %v1945
        %v1947 = vsub.f32 1.0, %v1946
        %v1948 = vmul.f32 %v1945, %v1947
        %v1949 = vadd.f32 %v1945, %v1948
        %vm1950 = vweird.f32 %v1598
        %vm1951 = vweird.f32 %v1945
        %vm1952 = vmor %vm1950, %vm1951
        %v1953 = vsel %vm1952, %v1945, %v1949
        %v1954 = vand.u32 2147483647, %v1598
        %vm1955 = vcmp.eq.f32.partialorder %v1954, 8.507059e+37
        %v1956 = vand.u32 %v1598, 2147483648
        %v1957 = vor.u32 1.1754944e-38, %v1956
        %v1958 = vsel %vm1955, %v1957, %v1953
        %v1959 = vmul.f32 1.0, %v1958
        %v1960 = vrcp.pop %v1599
        %v1961 = vmul.f32 %v1599, %v1960
        %v1962 = vsub.f32 1.0, %v1961
        %v1963 = vmul.f32 %v1960, %v1962
        %v1964 = vadd.f32 %v1960, %v1963
        %vm1965 = vweird.f32 %v1599
        %vm1966 = vweird.f32 %v1960
        %vm1967 = vmor %vm1965, %vm1966
        %v1968 = vsel %vm1967, %v1960, %v1964
        %v1969 = vand.u32 2147483647, %v1599
        %vm1970 = vcmp.eq.f32.partialorder %v1969, 8.507059e+37
        %v1971 = vand.u32 %v1599, 2147483648
        %v1972 = vor.u32 1.1754944e-38, %v1971
        %v1973 = vsel %vm1970, %v1972, %v1968
        %v1974 = vmul.f32 1.0, %v1973
        %v1975 = vmul.f32 %v1475, %v1614
        %v1976 = vmul.f32 %v1476, %v1629
        %v1977 = vmul.f32 %v1477, %v1644
        %v1978 = vmul.f32 %v1478, %v1659
        %v1979 = vmul.f32 %v1479, %v1674
        %v1980 = vmul.f32 %v1480, %v1689
        %v1981 = vmul.f32 %v1481, %v1704
        %v1982 = vmul.f32 %v1482, %v1719
        %v1983 = vmul.f32 %v1483, %v1734
        %v1984 = vmul.f32 %v1484, %v1749
        %v1985 = vmul.f32 %v1485, %v1764
        %v1986 = vmul.f32 %v1486, %v1779
        %v1987 = vmul.f32 %v1487, %v1794
        %v1988 = vmul.f32 %v1488, %v1809
        %v1989 = vmul.f32 %v1489, %v1824
        %v1990 = vmul.f32 %v1490, %v1839
        %v1991 = vmul.f32 %v1491, %v1854
        %v1992 = vmul.f32 %v1492, %v1869
        %v1993 = vmul.f32 %v1493, %v1884
        %v1994 = vmul.f32 %v1494, %v1899
        %v1995 = vmul.f32 %v1495, %v1914
        %v1996 = vmul.f32 %v1496, %v1929
        %v1997 = vmul.f32 %v1497, %v1944
        %v1998 = vmul.f32 %v1498, %v1959
        %v1999 = vmul.f32 %v1499, %v1974
        %2000 = vst [vmem:[#allocation3 + $0x8] sm:$0xff] %v1975
        %2001 = vst [vmem:[#allocation3 + $0x10] sm:$0xff] %v1976
        %2002 = vst [vmem:[#allocation3 + $0x18] sm:$0xff] %v1977
        %2003 = vst [vmem:[#allocation3 + $0x20] sm:$0xff] %v1978
        %2004 = vst [vmem:[#allocation3 + $0x28] sm:$0xff] %v1979
        %2005 = vst [vmem:[#allocation3 + $0x30] sm:$0xff] %v1980
        %2006 = vst [vmem:[#allocation3 + $0x38] sm:$0xff] %v1981
        %2007 = vst [vmem:[#allocation3 + $0x40] sm:$0xff] %v1982
        %2008 = vst [vmem:[#allocation3 + $0x48] sm:$0xff] %v1983
        %2009 = vst [vmem:[#allocation3 + $0x50] sm:$0xff] %v1984
        %2010 = vst [vmem:[#allocation3 + $0x58] sm:$0xff] %v1985
        %2011 = vst [vmem:[#allocation3 + $0x60] sm:$0xff] %v1986
        %2012 = vst [vmem:[#allocation3 + $0x68] sm:$0xff] %v1987
        %2013 = vst [vmem:[#allocation3 + $0x70] sm:$0xff] %v1988
        %2014 = vst [vmem:[#allocation3 + $0x78] sm:$0xff] %v1989
        %2015 = vst [vmem:[#allocation3 + $0x80] sm:$0xff] %v1990
        %2016 = vst [vmem:[#allocation3 + $0x88] sm:$0xff] %v1991
        %2017 = vst [vmem:[#allocation3 + $0x90] sm:$0xff] %v1992
        %2018 = vst [vmem:[#allocation3 + $0x98] sm:$0xff] %v1993
        %2019 = vst [vmem:[#allocation3 + $0xa0] sm:$0xff] %v1994
        %2020 = vst [vmem:[#allocation3 + $0xa8] sm:$0xff] %v1995
        %2021 = vst [vmem:[#allocation3 + $0xb0] sm:$0xff] %v1996
        %2022 = vst [vmem:[#allocation3 + $0xb8] sm:$0xff] %v1997
        %2023 = vst [vmem:[#allocation3 + $0xc0] sm:$0xff] %v1998
        %2024 = vst [vmem:[#allocation3 + $0xc8] sm:$0xff] %v1999
        %2025 = vst [vmem:[#allocation3 + $0x9] sm:$0x1] 0.0
        %2026 = vst [vmem:[#allocation3 + $0x1a] sm:$0x1] 0.0
        %2027 = vst [vmem:[#allocation3 + $0x1d] sm:$0x1] 0.0
        %2028 = vst [vmem:[#allocation3 + $0x2e] sm:$0x1] 0.0
        %2029 = vst [vmem:[#allocation3 + $0x31] sm:$0x1] 0.0
        %2030 = vst [vmem:[#allocation3 + $0x42] sm:$0x1] 0.0
        %2031 = vst [vmem:[#allocation3 + $0x45] sm:$0x1] 0.0
        %2032 = vst [vmem:[#allocation3 + $0x56] sm:$0x1] 0.0
        %2033 = vst [vmem:[#allocation3 + $0x59] sm:$0x1] 0.0
        %2034 = vst [vmem:[#allocation3 + $0x6a] sm:$0x1] 0.0
        %2035 = vst [vmem:[#allocation3 + $0x6d] sm:$0x1] 0.0
        %2036 = vst [vmem:[#allocation3 + $0x7e] sm:$0x1] 0.0
        %2037 = vst [vmem:[#allocation3 + $0x81] sm:$0x1] 0.0
        %2038 = vst [vmem:[#allocation3 + $0x92] sm:$0x1] 0.0
        %2039 = vst [vmem:[#allocation3 + $0x95] sm:$0x1] 0.0
        %2040 = vst [vmem:[#allocation3 + $0xa6] sm:$0x1] 0.0
        %2041 = vst [vmem:[#allocation3 + $0xa9] sm:$0x1] 0.0
        %2042 = vst [vmem:[#allocation3 + $0xba] sm:$0x1] 0.0
        %2043 = vst [vmem:[#allocation3 + $0xbd] sm:$0x1] 0.0
        %2044 = vst [vmem:[#allocation3 + $0xce] sm:$0x1] 0.0
        %p2045 = scmp.eq.s32.totalorder %s28, 0
        // Predicated region
        $region57: #{tpu_custom_call.1} parent=43 // pred_check
          %p2046 = pneg %p2045
        $region58: #{tpu_custom_call.1} parent=43 // pred_check_branch
          %2048 = sbr.rel (%p2046) target = $region60
        $region59: #{tpu_custom_call.1} parent=43 // pred_region
          %2049 = vst [vmem:[#allocation3 + $0x8] sm:$0xff] 0.0
          %2050 = vst [vmem:[#allocation3 + $0x10] sm:$0xff] 0.0
          %2051 = vst [vmem:[#allocation3 + $0x18] sm:$0xf] 0.0
        $region60: #{tpu_custom_call.1} parent=43 // pred_fallthru
          _
        %p2052 = scmp.eq.s32.totalorder %s28, 1
        // Predicated region
        $region61: #{tpu_custom_call.1} parent=43 // pred_check
          %p2053 = pneg %p2052
        $region62: #{tpu_custom_call.1} parent=43 // pred_check_branch
          %2055 = sbr.rel (%p2053) target = $region64
        $region63: #{tpu_custom_call.1} parent=43 // pred_region
          %2056 = vst [vmem:[#allocation3 + $0xbc] sm:$0xff] 0.0
          %2057 = vst [vmem:[#allocation3 + $0xc4] sm:$0xff] 0.0
          %2058 = vst [vmem:[#allocation3 + $0xcc] sm:$0xf] 0.0
        $region64: #{tpu_custom_call.1} parent=43 // pred_fallthru
          _
        %v2059 = vld [vmem:[#allocation3 + $0x7] sm:$0xff]
        %v2060 = vld [vmem:[#allocation3 + $0xf] sm:$0xff]
        %v2061 = vld [vmem:[#allocation3 + $0x17] sm:$0xff]
        %v2062 = vld [vmem:[#allocation3 + $0x1f] sm:$0xff]
        %v2063 = vld [vmem:[#allocation3 + $0x27] sm:$0xff]
        %v2064 = vld [vmem:[#allocation3 + $0x2f] sm:$0xff]
        %v2065 = vld [vmem:[#allocation3 + $0x37] sm:$0xff]
        %v2066 = vld [vmem:[#allocation3 + $0x3f] sm:$0xff]
        %v2067 = vld [vmem:[#allocation3 + $0x47] sm:$0xff]
        %v2068 = vld [vmem:[#allocation3 + $0x4f] sm:$0xff]
        %v2069 = vld [vmem:[#allocation3 + $0x57] sm:$0xff]
        %v2070 = vld [vmem:[#allocation3 + $0x5f] sm:$0xff]
        %v2071 = vld [vmem:[#allocation3 + $0x67] sm:$0xff]
        %v2072 = vld [vmem:[#allocation3 + $0x6f] sm:$0xff]
        %v2073 = vld [vmem:[#allocation3 + $0x77] sm:$0xff]
        %v2074 = vld [vmem:[#allocation3 + $0x7f] sm:$0xff]
        %v2075 = vld [vmem:[#allocation3 + $0x87] sm:$0xff]
        %v2076 = vld [vmem:[#allocation3 + $0x8f] sm:$0xff]
        %v2077 = vld [vmem:[#allocation3 + $0x97] sm:$0xff]
        %v2078 = vld [vmem:[#allocation3 + $0x9f] sm:$0xff]
        %v2079 = vld [vmem:[#allocation3 + $0x8] sm:$0xff]
        %v2080 = vld [vmem:[#allocation3 + $0x10] sm:$0xff]
        %v2081 = vld [vmem:[#allocation3 + $0x18] sm:$0xff]
        %v2082 = vld [vmem:[#allocation3 + $0x20] sm:$0xff]
        %v2083 = vld [vmem:[#allocation3 + $0x28] sm:$0xff]
        %v2084 = vld [vmem:[#allocation3 + $0x30] sm:$0xff]
        %v2085 = vld [vmem:[#allocation3 + $0x38] sm:$0xff]
        %v2086 = vld [vmem:[#allocation3 + $0x40] sm:$0xff]
        %v2087 = vld [vmem:[#allocation3 + $0x48] sm:$0xff]
        %v2088 = vld [vmem:[#allocation3 + $0x50] sm:$0xff]
        %v2089 = vld [vmem:[#allocation3 + $0x58] sm:$0xff]
        %v2090 = vld [vmem:[#allocation3 + $0x60] sm:$0xff]
        %v2091 = vld [vmem:[#allocation3 + $0x68] sm:$0xff]
        %v2092 = vld [vmem:[#allocation3 + $0x70] sm:$0xff]
        %v2093 = vld [vmem:[#allocation3 + $0x78] sm:$0xff]
        %v2094 = vld [vmem:[#allocation3 + $0x80] sm:$0xff]
        %v2095 = vld [vmem:[#allocation3 + $0x88] sm:$0xff]
        %v2096 = vld [vmem:[#allocation3 + $0x90] sm:$0xff]
        %v2097 = vld [vmem:[#allocation3 + $0x98] sm:$0xff]
        %v2098 = vld [vmem:[#allocation3 + $0xa0] sm:$0xff]
        %v2099 = vld [vmem:[#allocation3 + $0x9] sm:$0xff]
        %v2100 = vld [vmem:[#allocation3 + $0x11] sm:$0xff]
        %v2101 = vld [vmem:[#allocation3 + $0x19] sm:$0xff]
        %v2102 = vld [vmem:[#allocation3 + $0x21] sm:$0xff]
        %v2103 = vld [vmem:[#allocation3 + $0x29] sm:$0xff]
        %v2104 = vld [vmem:[#allocation3 + $0x31] sm:$0xff]
        %v2105 = vld [vmem:[#allocation3 + $0x39] sm:$0xff]
        %v2106 = vld [vmem:[#allocation3 + $0x41] sm:$0xff]
        %v2107 = vld [vmem:[#allocation3 + $0x49] sm:$0xff]
        %v2108 = vld [vmem:[#allocation3 + $0x51] sm:$0xff]
        %v2109 = vld [vmem:[#allocation3 + $0x59] sm:$0xff]
        %v2110 = vld [vmem:[#allocation3 + $0x61] sm:$0xff]
        %v2111 = vld [vmem:[#allocation3 + $0x69] sm:$0xff]
        %v2112 = vld [vmem:[#allocation3 + $0x71] sm:$0xff]
        %v2113 = vld [vmem:[#allocation3 + $0x79] sm:$0xff]
        %v2114 = vld [vmem:[#allocation3 + $0x81] sm:$0xff]
        %v2115 = vld [vmem:[#allocation3 + $0x89] sm:$0xff]
        %v2116 = vld [vmem:[#allocation3 + $0x91] sm:$0xff]
        %v2117 = vld [vmem:[#allocation3 + $0x99] sm:$0xff]
        %v2118 = vld [vmem:[#allocation3 + $0xa1] sm:$0xff]
        %v2119 = vld [vmem:[#allocation3 + $0x1b] sm:$0xff]
        %v2120 = vld [vmem:[#allocation3 + $0x23] sm:$0xff]
        %v2121 = vld [vmem:[#allocation3 + $0x2b] sm:$0xff]
        %v2122 = vld [vmem:[#allocation3 + $0x33] sm:$0xff]
        %v2123 = vld [vmem:[#allocation3 + $0x3b] sm:$0xff]
        %v2124 = vld [vmem:[#allocation3 + $0x43] sm:$0xff]
        %v2125 = vld [vmem:[#allocation3 + $0x4b] sm:$0xff]
        %v2126 = vld [vmem:[#allocation3 + $0x53] sm:$0xff]
        %v2127 = vld [vmem:[#allocation3 + $0x5b] sm:$0xff]
        %v2128 = vld [vmem:[#allocation3 + $0x63] sm:$0xff]
        %v2129 = vld [vmem:[#allocation3 + $0x6b] sm:$0xff]
        %v2130 = vld [vmem:[#allocation3 + $0x73] sm:$0xff]
        %v2131 = vld [vmem:[#allocation3 + $0x7b] sm:$0xff]
        %v2132 = vld [vmem:[#allocation3 + $0x83] sm:$0xff]
        %v2133 = vld [vmem:[#allocation3 + $0x8b] sm:$0xff]
        %v2134 = vld [vmem:[#allocation3 + $0x93] sm:$0xff]
        %v2135 = vld [vmem:[#allocation3 + $0x9b] sm:$0xff]
        %v2136 = vld [vmem:[#allocation3 + $0xa3] sm:$0xff]
        %v2137 = vld [vmem:[#allocation3 + $0xab] sm:$0xff]
        %v2138 = vld [vmem:[#allocation3 + $0xb3] sm:$0xff]
        %v2139 = vld [vmem:[#allocation3 + $0x1c] sm:$0xff]
        %v2140 = vld [vmem:[#allocation3 + $0x24] sm:$0xff]
        %v2141 = vld [vmem:[#allocation3 + $0x2c] sm:$0xff]
        %v2142 = vld [vmem:[#allocation3 + $0x34] sm:$0xff]
        %v2143 = vld [vmem:[#allocation3 + $0x3c] sm:$0xff]
        %v2144 = vld [vmem:[#allocation3 + $0x44] sm:$0xff]
        %v2145 = vld [vmem:[#allocation3 + $0x4c] sm:$0xff]
        %v2146 = vld [vmem:[#allocation3 + $0x54] sm:$0xff]
        %v2147 = vld [vmem:[#allocation3 + $0x5c] sm:$0xff]
        %v2148 = vld [vmem:[#allocation3 + $0x64] sm:$0xff]
        %v2149 = vld [vmem:[#allocation3 + $0x6c] sm:$0xff]
        %v2150 = vld [vmem:[#allocation3 + $0x74] sm:$0xff]
        %v2151 = vld [vmem:[#allocation3 + $0x7c] sm:$0xff]
        %v2152 = vld [vmem:[#allocation3 + $0x84] sm:$0xff]
        %v2153 = vld [vmem:[#allocation3 + $0x8c] sm:$0xff]
        %v2154 = vld [vmem:[#allocation3 + $0x94] sm:$0xff]
        %v2155 = vld [vmem:[#allocation3 + $0x9c] sm:$0xff]
        %v2156 = vld [vmem:[#allocation3 + $0xa4] sm:$0xff]
        %v2157 = vld [vmem:[#allocation3 + $0xac] sm:$0xff]
        %v2158 = vld [vmem:[#allocation3 + $0xb4] sm:$0xff]
        %v2159 = vld [vmem:[#allocation3 + $0x1d] sm:$0xff]
        %v2160 = vld [vmem:[#allocation3 + $0x25] sm:$0xff]
        %v2161 = vld [vmem:[#allocation3 + $0x2d] sm:$0xff]
        %v2162 = vld [vmem:[#allocation3 + $0x35] sm:$0xff]
        %v2163 = vld [vmem:[#allocation3 + $0x3d] sm:$0xff]
        %v2164 = vld [vmem:[#allocation3 + $0x45] sm:$0xff]
        %v2165 = vld [vmem:[#allocation3 + $0x4d] sm:$0xff]
        %v2166 = vld [vmem:[#allocation3 + $0x55] sm:$0xff]
        %v2167 = vld [vmem:[#allocation3 + $0x5d] sm:$0xff]
        %v2168 = vld [vmem:[#allocation3 + $0x65] sm:$0xff]
        %v2169 = vld [vmem:[#allocation3 + $0x6d] sm:$0xff]
        %v2170 = vld [vmem:[#allocation3 + $0x75] sm:$0xff]
        %v2171 = vld [vmem:[#allocation3 + $0x7d] sm:$0xff]
        %v2172 = vld [vmem:[#allocation3 + $0x85] sm:$0xff]
        %v2173 = vld [vmem:[#allocation3 + $0x8d] sm:$0xff]
        %v2174 = vld [vmem:[#allocation3 + $0x95] sm:$0xff]
        %v2175 = vld [vmem:[#allocation3 + $0x9d] sm:$0xff]
        %v2176 = vld [vmem:[#allocation3 + $0xa5] sm:$0xff]
        %v2177 = vld [vmem:[#allocation3 + $0xad] sm:$0xff]
        %v2178 = vld [vmem:[#allocation3 + $0xb5] sm:$0xff]
        %v2179 = vld [vmem:[#allocation3 + $0xa7] sm:$0xff]
        %v2180 = vld [vmem:[#allocation3 + $0xaf] sm:$0xff]
        %v2181 = vld [vmem:[#allocation3 + $0xb7] sm:$0xff]
        %v2182 = vld [vmem:[#allocation3 + $0xbf] sm:$0xff]
        %v2183 = vld [vmem:[#allocation3 + $0xc7] sm:$0xff]
        %v2184 = vld [vmem:[#allocation3 + $0xa8] sm:$0xff]
        %v2185 = vld [vmem:[#allocation3 + $0xb0] sm:$0xff]
        %v2186 = vld [vmem:[#allocation3 + $0xb8] sm:$0xff]
        %v2187 = vld [vmem:[#allocation3 + $0xc0] sm:$0xff]
        %v2188 = vld [vmem:[#allocation3 + $0xc8] sm:$0xff]
        %v2189 = vld [vmem:[#allocation3 + $0xa9] sm:$0xff]
        %v2190 = vld [vmem:[#allocation3 + $0xb1] sm:$0xff]
        %v2191 = vld [vmem:[#allocation3 + $0xb9] sm:$0xff]
        %v2192 = vld [vmem:[#allocation3 + $0xc1] sm:$0xff]
        %v2193 = vld [vmem:[#allocation3 + $0xc9] sm:$0xff]
        %v2194 = vld [vmem:[#allocation8] sm:$0xff]
        %v2195 = vld [vmem:[#allocation8 + $0x8] sm:$0xff]
        %v2196 = vld [vmem:[#allocation8 + $0x10] sm:$0xff]
        %v2197 = vld [vmem:[#allocation8 + $0x18] sm:$0xff]
        %v2198 = vld [vmem:[#allocation8 + $0x20] sm:$0xff]
        %v2199 = vld [vmem:[#allocation8 + $0x28] sm:$0xff]
        %v2200 = vld [vmem:[#allocation8 + $0x30] sm:$0xff]
        %v2201 = vld [vmem:[#allocation8 + $0x38] sm:$0xff]
        %v2202 = vld [vmem:[#allocation8 + $0x40] sm:$0xff]
        %v2203 = vld [vmem:[#allocation8 + $0x48] sm:$0xff]
        %v2204 = vld [vmem:[#allocation8 + $0x50] sm:$0xff]
        %v2205 = vld [vmem:[#allocation8 + $0x58] sm:$0xff]
        %v2206 = vld [vmem:[#allocation8 + $0x60] sm:$0xff]
        %v2207 = vld [vmem:[#allocation8 + $0x68] sm:$0xff]
        %v2208 = vld [vmem:[#allocation8 + $0x70] sm:$0xff]
        %v2209 = vld [vmem:[#allocation8 + $0x78] sm:$0xff]
        %v2210 = vld [vmem:[#allocation8 + $0x80] sm:$0xff]
        %v2211 = vld [vmem:[#allocation8 + $0x88] sm:$0xff]
        %v2212 = vld [vmem:[#allocation8 + $0x90] sm:$0xff]
        %v2213 = vld [vmem:[#allocation8 + $0x98] sm:$0xff]
        %v2214 = vld [vmem:[#allocation8 + $0xa0] sm:$0xff]
        %v2215 = vld [vmem:[#allocation8 + $0xa8] sm:$0xff]
        %v2216 = vld [vmem:[#allocation8 + $0xb0] sm:$0xff]
        %v2217 = vld [vmem:[#allocation8 + $0xb8] sm:$0xff]
        %v2218 = vld [vmem:[#allocation8 + $0xc0] sm:$0xff]
        %v2219 = vld [vmem:[#allocation8 + $0xc8] sm:$0xff]
        %v2220 = vld [vmem:[#allocation8 + $0xd0] sm:$0xff]
        %v2221 = vld [vmem:[#allocation8 + $0xd8] sm:$0xff]
        %v2222 = vld [vmem:[#allocation8 + $0xe0] sm:$0xff]
        %v2223 = vld [vmem:[#allocation8 + $0xe8] sm:$0xff]
        %v2224 = vld [vmem:[#allocation8 + $0xf0] sm:$0xff]
        %v2225 = vld [vmem:[#allocation8 + $0xf8] sm:$0xff]
        %v2226 = vld [vmem:[#allocation8 + $0x100] sm:$0xff]
        %v2227 = vld [vmem:[#allocation8 + $0x108] sm:$0xff]
        %v2228 = vld [vmem:[#allocation8 + $0x110] sm:$0xff]
        %v2229 = vld [vmem:[#allocation8 + $0x118] sm:$0xff]
        %v2230 = vld [vmem:[#allocation8 + $0x120] sm:$0xff]
        %v2231 = vld [vmem:[#allocation8 + $0x128] sm:$0xff]
        %v2232 = vld [vmem:[#allocation8 + $0x130] sm:$0xff]
        %v2233 = vld [vmem:[#allocation8 + $0x138] sm:$0xff]
        %v2234 = vld [vmem:[#allocation8 + $0x140] sm:$0xff]
        %v2235 = vld [vmem:[#allocation8 + $0x148] sm:$0xff]
        %v2236 = vld [vmem:[#allocation8 + $0x150] sm:$0xff]
        %v2237 = vld [vmem:[#allocation8 + $0x158] sm:$0xff]
        %v2238 = vld [vmem:[#allocation8 + $0x160] sm:$0xff]
        %v2239 = vld [vmem:[#allocation8 + $0x168] sm:$0xff]
        %v2240 = vld [vmem:[#allocation8 + $0x170] sm:$0xff]
        %v2241 = vld [vmem:[#allocation8 + $0x178] sm:$0xff]
        %v2242 = vld [vmem:[#allocation8 + $0x180] sm:$0xff]
        %v2243 = vld [vmem:[#allocation8 + $0x188] sm:$0xff]
        %v2244 = vld [vmem:[#allocation8 + $0x190] sm:$0xff]
        %v2245 = vld [vmem:[#allocation8 + $0x198] sm:$0xff]
        %v2246 = vld [vmem:[#allocation8 + $0x1a0] sm:$0xff]
        %v2247 = vld [vmem:[#allocation8 + $0x1a8] sm:$0xff]
        %v2248 = vld [vmem:[#allocation8 + $0x1b0] sm:$0xff]
        %v2249 = vld [vmem:[#allocation8 + $0x1b8] sm:$0xff]
        %v2250 = vld [vmem:[#allocation8 + $0x1c0] sm:$0xff]
        %v2251 = vld [vmem:[#allocation8 + $0x1c8] sm:$0xff]
        %v2252 = vld [vmem:[#allocation8 + $0x1d0] sm:$0xff]
        %v2253 = vld [vmem:[#allocation8 + $0x1d8] sm:$0xff]
        %v2254 = vld [vmem:[#allocation8 + $0x1e0] sm:$0xff]
        %v2255 = vld [vmem:[#allocation8 + $0x1e8] sm:$0xff]
        %v2256 = vld [vmem:[#allocation8 + $0x1f0] sm:$0xff]
        %v2257 = vld [vmem:[#allocation8 + $0x1f8] sm:$0xff]
        %v2258 = vld [vmem:[#allocation8 + $0x200] sm:$0xff]
        %v2259 = vld [vmem:[#allocation8 + $0x208] sm:$0xff]
        %v2260 = vld [vmem:[#allocation8 + $0x210] sm:$0xff]
        %v2261 = vld [vmem:[#allocation8 + $0x218] sm:$0xff]
        %v2262 = vld [vmem:[#allocation8 + $0x220] sm:$0xff]
        %v2263 = vld [vmem:[#allocation8 + $0x228] sm:$0xff]
        %v2264 = vld [vmem:[#allocation8 + $0x230] sm:$0xff]
        %v2265 = vld [vmem:[#allocation8 + $0x238] sm:$0xff]
        %v2266 = vld [vmem:[#allocation8 + $0x240] sm:$0xff]
        %v2267 = vld [vmem:[#allocation8 + $0x248] sm:$0xff]
        %v2268 = vld [vmem:[#allocation8 + $0x250] sm:$0xff]
        %v2269 = vld [vmem:[#allocation8 + $0x258] sm:$0xff]
        %v2270 = vld [vmem:[#allocation8 + $0x260] sm:$0xff]
        %v2271 = vld [vmem:[#allocation8 + $0x268] sm:$0xff]
        %v2272 = vld [vmem:[#allocation8 + $0x270] sm:$0xff]
        %v2273 = vld [vmem:[#allocation8 + $0x278] sm:$0xff]
        %v2274 = vld [vmem:[#allocation8 + $0x280] sm:$0xff]
        %v2275 = vld [vmem:[#allocation8 + $0x288] sm:$0xff]
        %v2276 = vld [vmem:[#allocation8 + $0x290] sm:$0xff]
        %v2277 = vld [vmem:[#allocation8 + $0x298] sm:$0xff]
        %v2278 = vld [vmem:[#allocation8 + $0x2a0] sm:$0xff]
        %v2279 = vld [vmem:[#allocation8 + $0x2a8] sm:$0xff]
        %v2280 = vld [vmem:[#allocation8 + $0x2b0] sm:$0xff]
        %v2281 = vld [vmem:[#allocation8 + $0x2b8] sm:$0xff]
        %v2282 = vld [vmem:[#allocation8 + $0x2c0] sm:$0xff]
        %v2283 = vld [vmem:[#allocation8 + $0x2c8] sm:$0xff]
        %v2284 = vld [vmem:[#allocation8 + $0x2d0] sm:$0xff]
        %v2285 = vld [vmem:[#allocation8 + $0x2d8] sm:$0xff]
        %v2286 = vld [vmem:[#allocation8 + $0x2e0] sm:$0xff]
        %v2287 = vld [vmem:[#allocation8 + $0x2e8] sm:$0xff]
        %v2288 = vld [vmem:[#allocation8 + $0x2f0] sm:$0xff]
        %v2289 = vld [vmem:[#allocation8 + $0x2f8] sm:$0xff]
        %v2290 = vld [vmem:[#allocation8 + $0x300] sm:$0xff]
        %v2291 = vld [vmem:[#allocation8 + $0x308] sm:$0xff]
        %v2292 = vld [vmem:[#allocation8 + $0x310] sm:$0xff]
        %v2293 = vld [vmem:[#allocation8 + $0x318] sm:$0xff]
        %v2294 = vld [vmem:[#allocation8 + $0x320] sm:$0xff]
        %v2295 = vld [vmem:[#allocation8 + $0x328] sm:$0xff]
        %v2296 = vld [vmem:[#allocation8 + $0x330] sm:$0xff]
        %v2297 = vld [vmem:[#allocation8 + $0x338] sm:$0xff]
        %v2298 = vld [vmem:[#allocation8 + $0x340] sm:$0xff]
        %v2299 = vld [vmem:[#allocation8 + $0x348] sm:$0xff]
        %v2300 = vld [vmem:[#allocation8 + $0x350] sm:$0xff]
        %v2301 = vld [vmem:[#allocation8 + $0x358] sm:$0xff]
        %v2302 = vld [vmem:[#allocation8 + $0x360] sm:$0xff]
        %v2303 = vld [vmem:[#allocation8 + $0x368] sm:$0xff]
        %v2304 = vld [vmem:[#allocation8 + $0x370] sm:$0xff]
        %v2305 = vld [vmem:[#allocation8 + $0x378] sm:$0xff]
        %v2306 = vld [vmem:[#allocation8 + $0x380] sm:$0xff]
        %v2307 = vld [vmem:[#allocation8 + $0x388] sm:$0xff]
        %v2308 = vld [vmem:[#allocation8 + $0x390] sm:$0xff]
        %v2309 = vld [vmem:[#allocation8 + $0x398] sm:$0xff]
        %v2310 = vld [vmem:[#allocation8 + $0x3a0] sm:$0xff]
        %v2311 = vld [vmem:[#allocation8 + $0x3a8] sm:$0xff]
        %v2312 = vld [vmem:[#allocation8 + $0x3b0] sm:$0xff]
        %v2313 = vld [vmem:[#allocation8 + $0x3b8] sm:$0xff]
        %v2314 = vld [vmem:[#allocation8 + $0x3c0] sm:$0xff]
        %v2315 = vld [vmem:[#allocation8 + $0x3c8] sm:$0xff]
        %v2316 = vld [vmem:[#allocation8 + $0x3d0] sm:$0xff]
        %v2317 = vld [vmem:[#allocation8 + $0x3d8] sm:$0xff]
        %v2318 = vld [vmem:[#allocation8 + $0x3e0] sm:$0xff]
        %v2319 = vld [vmem:[#allocation8 + $0x3e8] sm:$0xff]
        %v2320 = vld [vmem:[#allocation8 + $0x3f0] sm:$0xff]
        %v2321 = vld [vmem:[#allocation8 + $0x3f8] sm:$0xff]
        %v2322 = vld [vmem:[#allocation8 + $0x400] sm:$0xff]
        %v2323 = vld [vmem:[#allocation8 + $0x408] sm:$0xff]
        %v2324 = vld [vmem:[#allocation8 + $0x410] sm:$0xff]
        %v2325 = vld [vmem:[#allocation8 + $0x418] sm:$0xff]
        %v2326 = vld [vmem:[#allocation8 + $0x420] sm:$0xff]
        %v2327 = vld [vmem:[#allocation8 + $0x428] sm:$0xff]
        %v2328 = vld [vmem:[#allocation8 + $0x430] sm:$0xff]
        %v2329 = vld [vmem:[#allocation8 + $0x438] sm:$0xff]
        %v2330 = vld [vmem:[#allocation8 + $0x440] sm:$0xff]
        %v2331 = vld [vmem:[#allocation8 + $0x448] sm:$0xff]
        %v2332 = vld [vmem:[#allocation8 + $0x450] sm:$0xff]
        %v2333 = vld [vmem:[#allocation8 + $0x458] sm:$0xff]
        %v2334 = vld [vmem:[#allocation8 + $0x460] sm:$0xff]
        %v2335 = vld [vmem:[#allocation8 + $0x468] sm:$0xff]
        %v2336 = vld [vmem:[#allocation8 + $0x470] sm:$0xff]
        %v2337 = vld [vmem:[#allocation8 + $0x478] sm:$0xff]
        %2338 = vmatpush.msra.mxu0 %v2209
        %2339 = vmatpush.msra.mxu0 %v2208
        %2340 = vmatpush.msra.mxu0 %v2207
        %2341 = vmatpush.msra.mxu0 %v2206
        %2342 = vmatpush.msra.mxu0 %v2205
        %2343 = vmatpush.msra.mxu0 %v2204
        %2344 = vmatpush.msra.mxu0 %v2203
        %2345 = vmatpush.msra.mxu0 %v2202
        %2346 = vmatpush.msra.mxu0 %v2201
        %2347 = vmatpush.msra.mxu0 %v2200
        %2348 = vmatpush.msra.mxu0 %v2199
        %2349 = vmatpush.msra.mxu0 %v2198
        %2350 = vmatpush.msra.mxu0 %v2197
        %2351 = vmatpush.msra.mxu0 %v2196
        %2352 = vmatpush.msra.mxu0 %v2195
        %2353 = vmatpush.msra.mxu0 %v2194
        %2354 = vmatmul.f32.gmra.mxu0 %v2059
        %v2355 = vpop.f32.mrf.mxu0
        %v2356 = vadd.f32 0.0, %v2355
        %2357 = vmatmul.f32.gmra.mxu0 %v2060
        %v2358 = vpop.f32.mrf.mxu0
        %v2359 = vadd.f32 0.0, %v2358
        %2360 = vmatmul.f32.gmra.mxu0 %v2061
        %v2361 = vpop.f32.mrf.mxu0
        %v2362 = vadd.f32 0.0, %v2361
        %2363 = vmatmul.f32.gmra.mxu0 %v2062
        %v2364 = vpop.f32.mrf.mxu0
        %v2365 = vadd.f32 0.0, %v2364
        %2366 = vmatmul.f32.gmra.mxu0 %v2063
        %v2367 = vpop.f32.mrf.mxu0
        %v2368 = vadd.f32 0.0, %v2367
        %2369 = vmatmul.f32.gmra.mxu0 %v2064
        %v2370 = vpop.f32.mrf.mxu0
        %v2371 = vadd.f32 0.0, %v2370
        %2372 = vmatmul.f32.gmra.mxu0 %v2065
        %v2373 = vpop.f32.mrf.mxu0
        %v2374 = vadd.f32 0.0, %v2373
        %2375 = vmatmul.f32.gmra.mxu0 %v2066
        %v2376 = vpop.f32.mrf.mxu0
        %v2377 = vadd.f32 0.0, %v2376
        %2378 = vmatmul.f32.gmra.mxu0 %v2067
        %v2379 = vpop.f32.mrf.mxu0
        %v2380 = vadd.f32 0.0, %v2379
        %2381 = vmatmul.f32.gmra.mxu0 %v2068
        %v2382 = vpop.f32.mrf.mxu0
        %v2383 = vadd.f32 0.0, %v2382
        %2384 = vmatmul.f32.gmra.mxu0 %v2069
        %v2385 = vpop.f32.mrf.mxu0
        %v2386 = vadd.f32 0.0, %v2385
        %2387 = vmatmul.f32.gmra.mxu0 %v2070
        %v2388 = vpop.f32.mrf.mxu0
        %v2389 = vadd.f32 0.0, %v2388
        %2390 = vmatmul.f32.gmra.mxu0 %v2071
        %v2391 = vpop.f32.mrf.mxu0
        %v2392 = vadd.f32 0.0, %v2391
        %2393 = vmatmul.f32.gmra.mxu0 %v2072
        %v2394 = vpop.f32.mrf.mxu0
        %v2395 = vadd.f32 0.0, %v2394
        %2396 = vmatmul.f32.gmra.mxu0 %v2073
        %v2397 = vpop.f32.mrf.mxu0
        %v2398 = vadd.f32 0.0, %v2397
        %2399 = vmatmul.f32.gmra.mxu0 %v2074
        %v2400 = vpop.f32.mrf.mxu0
        %v2401 = vadd.f32 0.0, %v2400
        %2402 = vmatmul.f32.gmra.mxu0 %v2075
        %v2403 = vpop.f32.mrf.mxu0
        %v2404 = vadd.f32 0.0, %v2403
        %2405 = vmatmul.f32.gmra.mxu0 %v2076
        %v2406 = vpop.f32.mrf.mxu0
        %v2407 = vadd.f32 0.0, %v2406
        %2408 = vmatmul.f32.gmra.mxu0 %v2077
        %v2409 = vpop.f32.mrf.mxu0
        %v2410 = vadd.f32 0.0, %v2409
        %2411 = vmatmul.f32.gmra.mxu0 %v2078
        %v2412 = vpop.f32.mrf.mxu0
        %v2413 = vadd.f32 0.0, %v2412
        %2414 = vdwg.mxu0
        %2415 = vmatpush.msra.mxu0 %v2225
        %2416 = vmatpush.msra.mxu0 %v2224
        %2417 = vmatpush.msra.mxu0 %v2223
        %2418 = vmatpush.msra.mxu0 %v2222
        %2419 = vmatpush.msra.mxu0 %v2221
        %2420 = vmatpush.msra.mxu0 %v2220
        %2421 = vmatpush.msra.mxu0 %v2219
        %2422 = vmatpush.msra.mxu0 %v2218
        %2423 = vmatpush.msra.mxu0 %v2217
        %2424 = vmatpush.msra.mxu0 %v2216
        %2425 = vmatpush.msra.mxu0 %v2215
        %2426 = vmatpush.msra.mxu0 %v2214
        %2427 = vmatpush.msra.mxu0 %v2213
        %2428 = vmatpush.msra.mxu0 %v2212
        %2429 = vmatpush.msra.mxu0 %v2211
        %2430 = vmatpush.msra.mxu0 %v2210
        %2431 = vmatmul.f32.gmra.mxu0 %v2079
        %v2432 = vpop.f32.mrf.mxu0
        %v2433 = vadd.f32 %v2356, %v2432
        %2434 = vmatmul.f32.gmra.mxu0 %v2080
        %v2435 = vpop.f32.mrf.mxu0
        %v2436 = vadd.f32 %v2359, %v2435
        %2437 = vmatmul.f32.gmra.mxu0 %v2081
        %v2438 = vpop.f32.mrf.mxu0
        %v2439 = vadd.f32 %v2362, %v2438
        %2440 = vmatmul.f32.gmra.mxu0 %v2082
        %v2441 = vpop.f32.mrf.mxu0
        %v2442 = vadd.f32 %v2365, %v2441
        %2443 = vmatmul.f32.gmra.mxu0 %v2083
        %v2444 = vpop.f32.mrf.mxu0
        %v2445 = vadd.f32 %v2368, %v2444
        %2446 = vmatmul.f32.gmra.mxu0 %v2084
        %v2447 = vpop.f32.mrf.mxu0
        %v2448 = vadd.f32 %v2371, %v2447
        %2449 = vmatmul.f32.gmra.mxu0 %v2085
        %v2450 = vpop.f32.mrf.mxu0
        %v2451 = vadd.f32 %v2374, %v2450
        %2452 = vmatmul.f32.gmra.mxu0 %v2086
        %v2453 = vpop.f32.mrf.mxu0
        %v2454 = vadd.f32 %v2377, %v2453
        %2455 = vmatmul.f32.gmra.mxu0 %v2087
        %v2456 = vpop.f32.mrf.mxu0
        %v2457 = vadd.f32 %v2380, %v2456
        %2458 = vmatmul.f32.gmra.mxu0 %v2088
        %v2459 = vpop.f32.mrf.mxu0
        %v2460 = vadd.f32 %v2383, %v2459
        %2461 = vmatmul.f32.gmra.mxu0 %v2089
        %v2462 = vpop.f32.mrf.mxu0
        %v2463 = vadd.f32 %v2386, %v2462
        %2464 = vmatmul.f32.gmra.mxu0 %v2090
        %v2465 = vpop.f32.mrf.mxu0
        %v2466 = vadd.f32 %v2389, %v2465
        %2467 = vmatmul.f32.gmra.mxu0 %v2091
        %v2468 = vpop.f32.mrf.mxu0
        %v2469 = vadd.f32 %v2392, %v2468
        %2470 = vmatmul.f32.gmra.mxu0 %v2092
        %v2471 = vpop.f32.mrf.mxu0
        %v2472 = vadd.f32 %v2395, %v2471
        %2473 = vmatmul.f32.gmra.mxu0 %v2093
        %v2474 = vpop.f32.mrf.mxu0
        %v2475 = vadd.f32 %v2398, %v2474
        %2476 = vmatmul.f32.gmra.mxu0 %v2094
        %v2477 = vpop.f32.mrf.mxu0
        %v2478 = vadd.f32 %v2401, %v2477
        %2479 = vmatmul.f32.gmra.mxu0 %v2095
        %v2480 = vpop.f32.mrf.mxu0
        %v2481 = vadd.f32 %v2404, %v2480
        %2482 = vmatmul.f32.gmra.mxu0 %v2096
        %v2483 = vpop.f32.mrf.mxu0
        %v2484 = vadd.f32 %v2407, %v2483
        %2485 = vmatmul.f32.gmra.mxu0 %v2097
        %v2486 = vpop.f32.mrf.mxu0
        %v2487 = vadd.f32 %v2410, %v2486
        %2488 = vmatmul.f32.gmra.mxu0 %v2098
        %v2489 = vpop.f32.mrf.mxu0
        %v2490 = vadd.f32 %v2413, %v2489
        %2491 = vdwg.mxu0
        %2492 = vmatpush.msra.mxu0 %v2241
        %2493 = vmatpush.msra.mxu0 %v2240
        %2494 = vmatpush.msra.mxu0 %v2239
        %2495 = vmatpush.msra.mxu0 %v2238
        %2496 = vmatpush.msra.mxu0 %v2237
        %2497 = vmatpush.msra.mxu0 %v2236
        %2498 = vmatpush.msra.mxu0 %v2235
        %2499 = vmatpush.msra.mxu0 %v2234
        %2500 = vmatpush.msra.mxu0 %v2233
        %2501 = vmatpush.msra.mxu0 %v2232
        %2502 = vmatpush.msra.mxu0 %v2231
        %2503 = vmatpush.msra.mxu0 %v2230
        %2504 = vmatpush.msra.mxu0 %v2229
        %2505 = vmatpush.msra.mxu0 %v2228
        %2506 = vmatpush.msra.mxu0 %v2227
        %2507 = vmatpush.msra.mxu0 %v2226
        %2508 = vmatmul.f32.gmra.mxu0 %v2099
        %v2509 = vpop.f32.mrf.mxu0
        %v2510 = vadd.f32 %v2433, %v2509
        %2511 = vmatmul.f32.gmra.mxu0 %v2100
        %v2512 = vpop.f32.mrf.mxu0
        %v2513 = vadd.f32 %v2436, %v2512
        %2514 = vmatmul.f32.gmra.mxu0 %v2101
        %v2515 = vpop.f32.mrf.mxu0
        %v2516 = vadd.f32 %v2439, %v2515
        %2517 = vmatmul.f32.gmra.mxu0 %v2102
        %v2518 = vpop.f32.mrf.mxu0
        %v2519 = vadd.f32 %v2442, %v2518
        %2520 = vmatmul.f32.gmra.mxu0 %v2103
        %v2521 = vpop.f32.mrf.mxu0
        %v2522 = vadd.f32 %v2445, %v2521
        %2523 = vmatmul.f32.gmra.mxu0 %v2104
        %v2524 = vpop.f32.mrf.mxu0
        %v2525 = vadd.f32 %v2448, %v2524
        %2526 = vmatmul.f32.gmra.mxu0 %v2105
        %v2527 = vpop.f32.mrf.mxu0
        %v2528 = vadd.f32 %v2451, %v2527
        %2529 = vmatmul.f32.gmra.mxu0 %v2106
        %v2530 = vpop.f32.mrf.mxu0
        %v2531 = vadd.f32 %v2454, %v2530
        %2532 = vmatmul.f32.gmra.mxu0 %v2107
        %v2533 = vpop.f32.mrf.mxu0
        %v2534 = vadd.f32 %v2457, %v2533
        %2535 = vmatmul.f32.gmra.mxu0 %v2108
        %v2536 = vpop.f32.mrf.mxu0
        %v2537 = vadd.f32 %v2460, %v2536
        %2538 = vmatmul.f32.gmra.mxu0 %v2109
        %v2539 = vpop.f32.mrf.mxu0
        %v2540 = vadd.f32 %v2463, %v2539
        %2541 = vmatmul.f32.gmra.mxu0 %v2110
        %v2542 = vpop.f32.mrf.mxu0
        %v2543 = vadd.f32 %v2466, %v2542
        %2544 = vmatmul.f32.gmra.mxu0 %v2111
        %v2545 = vpop.f32.mrf.mxu0
        %v2546 = vadd.f32 %v2469, %v2545
        %2547 = vmatmul.f32.gmra.mxu0 %v2112
        %v2548 = vpop.f32.mrf.mxu0
        %v2549 = vadd.f32 %v2472, %v2548
        %2550 = vmatmul.f32.gmra.mxu0 %v2113
        %v2551 = vpop.f32.mrf.mxu0
        %v2552 = vadd.f32 %v2475, %v2551
        %2553 = vmatmul.f32.gmra.mxu0 %v2114
        %v2554 = vpop.f32.mrf.mxu0
        %v2555 = vadd.f32 %v2478, %v2554
        %2556 = vmatmul.f32.gmra.mxu0 %v2115
        %v2557 = vpop.f32.mrf.mxu0
        %v2558 = vadd.f32 %v2481, %v2557
        %2559 = vmatmul.f32.gmra.mxu0 %v2116
        %v2560 = vpop.f32.mrf.mxu0
        %v2561 = vadd.f32 %v2484, %v2560
        %2562 = vmatmul.f32.gmra.mxu0 %v2117
        %v2563 = vpop.f32.mrf.mxu0
        %v2564 = vadd.f32 %v2487, %v2563
        %2565 = vmatmul.f32.gmra.mxu0 %v2118
        %v2566 = vpop.f32.mrf.mxu0
        %v2567 = vadd.f32 %v2490, %v2566
        %2568 = vdwg.mxu0
        %2569 = vmatpush.msra.mxu0 %v2257
        %2570 = vmatpush.msra.mxu0 %v2256
        %2571 = vmatpush.msra.mxu0 %v2255
        %2572 = vmatpush.msra.mxu0 %v2254
        %2573 = vmatpush.msra.mxu0 %v2253
        %2574 = vmatpush.msra.mxu0 %v2252
        %2575 = vmatpush.msra.mxu0 %v2251
        %2576 = vmatpush.msra.mxu0 %v2250
        %2577 = vmatpush.msra.mxu0 %v2249
        %2578 = vmatpush.msra.mxu0 %v2248
        %2579 = vmatpush.msra.mxu0 %v2247
        %2580 = vmatpush.msra.mxu0 %v2246
        %2581 = vmatpush.msra.mxu0 %v2245
        %2582 = vmatpush.msra.mxu0 %v2244
        %2583 = vmatpush.msra.mxu0 %v2243
        %2584 = vmatpush.msra.mxu0 %v2242
        %2585 = vmatmul.f32.gmra.mxu0 %v2119
        %v2586 = vpop.f32.mrf.mxu0
        %v2587 = vadd.f32 %v2510, %v2586
        %2588 = vmatmul.f32.gmra.mxu0 %v2120
        %v2589 = vpop.f32.mrf.mxu0
        %v2590 = vadd.f32 %v2513, %v2589
        %2591 = vmatmul.f32.gmra.mxu0 %v2121
        %v2592 = vpop.f32.mrf.mxu0
        %v2593 = vadd.f32 %v2516, %v2592
        %2594 = vmatmul.f32.gmra.mxu0 %v2122
        %v2595 = vpop.f32.mrf.mxu0
        %v2596 = vadd.f32 %v2519, %v2595
        %2597 = vmatmul.f32.gmra.mxu0 %v2123
        %v2598 = vpop.f32.mrf.mxu0
        %v2599 = vadd.f32 %v2522, %v2598
        %2600 = vmatmul.f32.gmra.mxu0 %v2124
        %v2601 = vpop.f32.mrf.mxu0
        %v2602 = vadd.f32 %v2525, %v2601
        %2603 = vmatmul.f32.gmra.mxu0 %v2125
        %v2604 = vpop.f32.mrf.mxu0
        %v2605 = vadd.f32 %v2528, %v2604
        %2606 = vmatmul.f32.gmra.mxu0 %v2126
        %v2607 = vpop.f32.mrf.mxu0
        %v2608 = vadd.f32 %v2531, %v2607
        %2609 = vmatmul.f32.gmra.mxu0 %v2127
        %v2610 = vpop.f32.mrf.mxu0
        %v2611 = vadd.f32 %v2534, %v2610
        %2612 = vmatmul.f32.gmra.mxu0 %v2128
        %v2613 = vpop.f32.mrf.mxu0
        %v2614 = vadd.f32 %v2537, %v2613
        %2615 = vmatmul.f32.gmra.mxu0 %v2129
        %v2616 = vpop.f32.mrf.mxu0
        %v2617 = vadd.f32 %v2540, %v2616
        %2618 = vmatmul.f32.gmra.mxu0 %v2130
        %v2619 = vpop.f32.mrf.mxu0
        %v2620 = vadd.f32 %v2543, %v2619
        %2621 = vmatmul.f32.gmra.mxu0 %v2131
        %v2622 = vpop.f32.mrf.mxu0
        %v2623 = vadd.f32 %v2546, %v2622
        %2624 = vmatmul.f32.gmra.mxu0 %v2132
        %v2625 = vpop.f32.mrf.mxu0
        %v2626 = vadd.f32 %v2549, %v2625
        %2627 = vmatmul.f32.gmra.mxu0 %v2133
        %v2628 = vpop.f32.mrf.mxu0
        %v2629 = vadd.f32 %v2552, %v2628
        %2630 = vmatmul.f32.gmra.mxu0 %v2134
        %v2631 = vpop.f32.mrf.mxu0
        %v2632 = vadd.f32 %v2555, %v2631
        %2633 = vmatmul.f32.gmra.mxu0 %v2135
        %v2634 = vpop.f32.mrf.mxu0
        %v2635 = vadd.f32 %v2558, %v2634
        %2636 = vmatmul.f32.gmra.mxu0 %v2136
        %v2637 = vpop.f32.mrf.mxu0
        %v2638 = vadd.f32 %v2561, %v2637
        %2639 = vmatmul.f32.gmra.mxu0 %v2137
        %v2640 = vpop.f32.mrf.mxu0
        %v2641 = vadd.f32 %v2564, %v2640
        %2642 = vmatmul.f32.gmra.mxu0 %v2138
        %v2643 = vpop.f32.mrf.mxu0
        %v2644 = vadd.f32 %v2567, %v2643
        %2645 = vdwg.mxu0
        %2646 = vmatpush.msra.mxu0 %v2273
        %2647 = vmatpush.msra.mxu0 %v2272
        %2648 = vmatpush.msra.mxu0 %v2271
        %2649 = vmatpush.msra.mxu0 %v2270
        %2650 = vmatpush.msra.mxu0 %v2269
        %2651 = vmatpush.msra.mxu0 %v2268
        %2652 = vmatpush.msra.mxu0 %v2267
        %2653 = vmatpush.msra.mxu0 %v2266
        %2654 = vmatpush.msra.mxu0 %v2265
        %2655 = vmatpush.msra.mxu0 %v2264
        %2656 = vmatpush.msra.mxu0 %v2263
        %2657 = vmatpush.msra.mxu0 %v2262
        %2658 = vmatpush.msra.mxu0 %v2261
        %2659 = vmatpush.msra.mxu0 %v2260
        %2660 = vmatpush.msra.mxu0 %v2259
        %2661 = vmatpush.msra.mxu0 %v2258
        %2662 = vmatmul.f32.gmra.mxu0 %v2139
        %v2663 = vpop.f32.mrf.mxu0
        %v2664 = vadd.f32 %v2587, %v2663
        %2665 = vmatmul.f32.gmra.mxu0 %v2140
        %v2666 = vpop.f32.mrf.mxu0
        %v2667 = vadd.f32 %v2590, %v2666
        %2668 = vmatmul.f32.gmra.mxu0 %v2141
        %v2669 = vpop.f32.mrf.mxu0
        %v2670 = vadd.f32 %v2593, %v2669
        %2671 = vmatmul.f32.gmra.mxu0 %v2142
        %v2672 = vpop.f32.mrf.mxu0
        %v2673 = vadd.f32 %v2596, %v2672
        %2674 = vmatmul.f32.gmra.mxu0 %v2143
        %v2675 = vpop.f32.mrf.mxu0
        %v2676 = vadd.f32 %v2599, %v2675
        %2677 = vmatmul.f32.gmra.mxu0 %v2144
        %v2678 = vpop.f32.mrf.mxu0
        %v2679 = vadd.f32 %v2602, %v2678
        %2680 = vmatmul.f32.gmra.mxu0 %v2145
        %v2681 = vpop.f32.mrf.mxu0
        %v2682 = vadd.f32 %v2605, %v2681
        %2683 = vmatmul.f32.gmra.mxu0 %v2146
        %v2684 = vpop.f32.mrf.mxu0
        %v2685 = vadd.f32 %v2608, %v2684
        %2686 = vmatmul.f32.gmra.mxu0 %v2147
        %v2687 = vpop.f32.mrf.mxu0
        %v2688 = vadd.f32 %v2611, %v2687
        %2689 = vmatmul.f32.gmra.mxu0 %v2148
        %v2690 = vpop.f32.mrf.mxu0
        %v2691 = vadd.f32 %v2614, %v2690
        %2692 = vmatmul.f32.gmra.mxu0 %v2149
        %v2693 = vpop.f32.mrf.mxu0
        %v2694 = vadd.f32 %v2617, %v2693
        %2695 = vmatmul.f32.gmra.mxu0 %v2150
        %v2696 = vpop.f32.mrf.mxu0
        %v2697 = vadd.f32 %v2620, %v2696
        %2698 = vmatmul.f32.gmra.mxu0 %v2151
        %v2699 = vpop.f32.mrf.mxu0
        %v2700 = vadd.f32 %v2623, %v2699
        %2701 = vmatmul.f32.gmra.mxu0 %v2152
        %v2702 = vpop.f32.mrf.mxu0
        %v2703 = vadd.f32 %v2626, %v2702
        %2704 = vmatmul.f32.gmra.mxu0 %v2153
        %v2705 = vpop.f32.mrf.mxu0
        %v2706 = vadd.f32 %v2629, %v2705
        %2707 = vmatmul.f32.gmra.mxu0 %v2154
        %v2708 = vpop.f32.mrf.mxu0
        %v2709 = vadd.f32 %v2632, %v2708
        %2710 = vmatmul.f32.gmra.mxu0 %v2155
        %v2711 = vpop.f32.mrf.mxu0
        %v2712 = vadd.f32 %v2635, %v2711
        %2713 = vmatmul.f32.gmra.mxu0 %v2156
        %v2714 = vpop.f32.mrf.mxu0
        %v2715 = vadd.f32 %v2638, %v2714
        %2716 = vmatmul.f32.gmra.mxu0 %v2157
        %v2717 = vpop.f32.mrf.mxu0
        %v2718 = vadd.f32 %v2641, %v2717
        %2719 = vmatmul.f32.gmra.mxu0 %v2158
        %v2720 = vpop.f32.mrf.mxu0
        %v2721 = vadd.f32 %v2644, %v2720
        %2722 = vdwg.mxu0
        %2723 = vmatpush.msra.mxu0 %v2289
        %2724 = vmatpush.msra.mxu0 %v2288
        %2725 = vmatpush.msra.mxu0 %v2287
        %2726 = vmatpush.msra.mxu0 %v2286
        %2727 = vmatpush.msra.mxu0 %v2285
        %2728 = vmatpush.msra.mxu0 %v2284
        %2729 = vmatpush.msra.mxu0 %v2283
        %2730 = vmatpush.msra.mxu0 %v2282
        %2731 = vmatpush.msra.mxu0 %v2281
        %2732 = vmatpush.msra.mxu0 %v2280
        %2733 = vmatpush.msra.mxu0 %v2279
        %2734 = vmatpush.msra.mxu0 %v2278
        %2735 = vmatpush.msra.mxu0 %v2277
        %2736 = vmatpush.msra.mxu0 %v2276
        %2737 = vmatpush.msra.mxu0 %v2275
        %2738 = vmatpush.msra.mxu0 %v2274
        %2739 = vmatmul.f32.gmra.mxu0 %v2159
        %v2740 = vpop.f32.mrf.mxu0
        %v2741 = vadd.f32 %v2664, %v2740
        %2742 = vmatmul.f32.gmra.mxu0 %v2160
        %v2743 = vpop.f32.mrf.mxu0
        %v2744 = vadd.f32 %v2667, %v2743
        %2745 = vmatmul.f32.gmra.mxu0 %v2161
        %v2746 = vpop.f32.mrf.mxu0
        %v2747 = vadd.f32 %v2670, %v2746
        %2748 = vmatmul.f32.gmra.mxu0 %v2162
        %v2749 = vpop.f32.mrf.mxu0
        %v2750 = vadd.f32 %v2673, %v2749
        %2751 = vmatmul.f32.gmra.mxu0 %v2163
        %v2752 = vpop.f32.mrf.mxu0
        %v2753 = vadd.f32 %v2676, %v2752
        %2754 = vmatmul.f32.gmra.mxu0 %v2164
        %v2755 = vpop.f32.mrf.mxu0
        %v2756 = vadd.f32 %v2679, %v2755
        %2757 = vmatmul.f32.gmra.mxu0 %v2165
        %v2758 = vpop.f32.mrf.mxu0
        %v2759 = vadd.f32 %v2682, %v2758
        %2760 = vmatmul.f32.gmra.mxu0 %v2166
        %v2761 = vpop.f32.mrf.mxu0
        %v2762 = vadd.f32 %v2685, %v2761
        %2763 = vmatmul.f32.gmra.mxu0 %v2167
        %v2764 = vpop.f32.mrf.mxu0
        %v2765 = vadd.f32 %v2688, %v2764
        %2766 = vmatmul.f32.gmra.mxu0 %v2168
        %v2767 = vpop.f32.mrf.mxu0
        %v2768 = vadd.f32 %v2691, %v2767
        %2769 = vmatmul.f32.gmra.mxu0 %v2169
        %v2770 = vpop.f32.mrf.mxu0
        %v2771 = vadd.f32 %v2694, %v2770
        %2772 = vmatmul.f32.gmra.mxu0 %v2170
        %v2773 = vpop.f32.mrf.mxu0
        %v2774 = vadd.f32 %v2697, %v2773
        %2775 = vmatmul.f32.gmra.mxu0 %v2171
        %v2776 = vpop.f32.mrf.mxu0
        %v2777 = vadd.f32 %v2700, %v2776
        %2778 = vmatmul.f32.gmra.mxu0 %v2172
        %v2779 = vpop.f32.mrf.mxu0
        %v2780 = vadd.f32 %v2703, %v2779
        %2781 = vmatmul.f32.gmra.mxu0 %v2173
        %v2782 = vpop.f32.mrf.mxu0
        %v2783 = vadd.f32 %v2706, %v2782
        %2784 = vmatmul.f32.gmra.mxu0 %v2174
        %v2785 = vpop.f32.mrf.mxu0
        %v2786 = vadd.f32 %v2709, %v2785
        %2787 = vmatmul.f32.gmra.mxu0 %v2175
        %v2788 = vpop.f32.mrf.mxu0
        %v2789 = vadd.f32 %v2712, %v2788
        %2790 = vmatmul.f32.gmra.mxu0 %v2176
        %v2791 = vpop.f32.mrf.mxu0
        %v2792 = vadd.f32 %v2715, %v2791
        %2793 = vmatmul.f32.gmra.mxu0 %v2177
        %v2794 = vpop.f32.mrf.mxu0
        %v2795 = vadd.f32 %v2718, %v2794
        %2796 = vmatmul.f32.gmra.mxu0 %v2178
        %v2797 = vpop.f32.mrf.mxu0
        %v2798 = vadd.f32 %v2721, %v2797
        %2799 = vdwg.mxu0
        %2800 = vmatpush.msra.mxu0 %v2305
        %2801 = vmatpush.msra.mxu0 %v2304
        %2802 = vmatpush.msra.mxu0 %v2303
        %2803 = vmatpush.msra.mxu0 %v2302
        %2804 = vmatpush.msra.mxu0 %v2301
        %2805 = vmatpush.msra.mxu0 %v2300
        %2806 = vmatpush.msra.mxu0 %v2299
        %2807 = vmatpush.msra.mxu0 %v2298
        %2808 = vmatpush.msra.mxu0 %v2297
        %2809 = vmatpush.msra.mxu0 %v2296
        %2810 = vmatpush.msra.mxu0 %v2295
        %2811 = vmatpush.msra.mxu0 %v2294
        %2812 = vmatpush.msra.mxu0 %v2293
        %2813 = vmatpush.msra.mxu0 %v2292
        %2814 = vmatpush.msra.mxu0 %v2291
        %2815 = vmatpush.msra.mxu0 %v2290
        %2816 = vmatmul.f32.gmra.mxu0 %v2064
        %v2817 = vpop.f32.mrf.mxu0
        %v2818 = vadd.f32 %v2741, %v2817
        %2819 = vmatmul.f32.gmra.mxu0 %v2065
        %v2820 = vpop.f32.mrf.mxu0
        %v2821 = vadd.f32 %v2744, %v2820
        %2822 = vmatmul.f32.gmra.mxu0 %v2066
        %v2823 = vpop.f32.mrf.mxu0
        %v2824 = vadd.f32 %v2747, %v2823
        %2825 = vmatmul.f32.gmra.mxu0 %v2067
        %v2826 = vpop.f32.mrf.mxu0
        %v2827 = vadd.f32 %v2750, %v2826
        %2828 = vmatmul.f32.gmra.mxu0 %v2068
        %v2829 = vpop.f32.mrf.mxu0
        %v2830 = vadd.f32 %v2753, %v2829
        %2831 = vmatmul.f32.gmra.mxu0 %v2069
        %v2832 = vpop.f32.mrf.mxu0
        %v2833 = vadd.f32 %v2756, %v2832
        %2834 = vmatmul.f32.gmra.mxu0 %v2070
        %v2835 = vpop.f32.mrf.mxu0
        %v2836 = vadd.f32 %v2759, %v2835
        %2837 = vmatmul.f32.gmra.mxu0 %v2071
        %v2838 = vpop.f32.mrf.mxu0
        %v2839 = vadd.f32 %v2762, %v2838
        %2840 = vmatmul.f32.gmra.mxu0 %v2072
        %v2841 = vpop.f32.mrf.mxu0
        %v2842 = vadd.f32 %v2765, %v2841
        %2843 = vmatmul.f32.gmra.mxu0 %v2073
        %v2844 = vpop.f32.mrf.mxu0
        %v2845 = vadd.f32 %v2768, %v2844
        %2846 = vmatmul.f32.gmra.mxu0 %v2074
        %v2847 = vpop.f32.mrf.mxu0
        %v2848 = vadd.f32 %v2771, %v2847
        %2849 = vmatmul.f32.gmra.mxu0 %v2075
        %v2850 = vpop.f32.mrf.mxu0
        %v2851 = vadd.f32 %v2774, %v2850
        %2852 = vmatmul.f32.gmra.mxu0 %v2076
        %v2853 = vpop.f32.mrf.mxu0
        %v2854 = vadd.f32 %v2777, %v2853
        %2855 = vmatmul.f32.gmra.mxu0 %v2077
        %v2856 = vpop.f32.mrf.mxu0
        %v2857 = vadd.f32 %v2780, %v2856
        %2858 = vmatmul.f32.gmra.mxu0 %v2078
        %v2859 = vpop.f32.mrf.mxu0
        %v2860 = vadd.f32 %v2783, %v2859
        %2861 = vmatmul.f32.gmra.mxu0 %v2179
        %v2862 = vpop.f32.mrf.mxu0
        %v2863 = vadd.f32 %v2786, %v2862
        %2864 = vmatmul.f32.gmra.mxu0 %v2180
        %v2865 = vpop.f32.mrf.mxu0
        %v2866 = vadd.f32 %v2789, %v2865
        %2867 = vmatmul.f32.gmra.mxu0 %v2181
        %v2868 = vpop.f32.mrf.mxu0
        %v2869 = vadd.f32 %v2792, %v2868
        %2870 = vmatmul.f32.gmra.mxu0 %v2182
        %v2871 = vpop.f32.mrf.mxu0
        %v2872 = vadd.f32 %v2795, %v2871
        %2873 = vmatmul.f32.gmra.mxu0 %v2183
        %v2874 = vpop.f32.mrf.mxu0
        %v2875 = vadd.f32 %v2798, %v2874
        %2876 = vdwg.mxu0
        %2877 = vmatpush.msra.mxu0 %v2321
        %2878 = vmatpush.msra.mxu0 %v2320
        %2879 = vmatpush.msra.mxu0 %v2319
        %2880 = vmatpush.msra.mxu0 %v2318
        %2881 = vmatpush.msra.mxu0 %v2317
        %2882 = vmatpush.msra.mxu0 %v2316
        %2883 = vmatpush.msra.mxu0 %v2315
        %2884 = vmatpush.msra.mxu0 %v2314
        %2885 = vmatpush.msra.mxu0 %v2313
        %2886 = vmatpush.msra.mxu0 %v2312
        %2887 = vmatpush.msra.mxu0 %v2311
        %2888 = vmatpush.msra.mxu0 %v2310
        %2889 = vmatpush.msra.mxu0 %v2309
        %2890 = vmatpush.msra.mxu0 %v2308
        %2891 = vmatpush.msra.mxu0 %v2307
        %2892 = vmatpush.msra.mxu0 %v2306
        %2893 = vmatmul.f32.gmra.mxu0 %v2084
        %v2894 = vpop.f32.mrf.mxu0
        %v2895 = vadd.f32 %v2818, %v2894
        %2896 = vmatmul.f32.gmra.mxu0 %v2085
        %v2897 = vpop.f32.mrf.mxu0
        %v2898 = vadd.f32 %v2821, %v2897
        %2899 = vmatmul.f32.gmra.mxu0 %v2086
        %v2900 = vpop.f32.mrf.mxu0
        %v2901 = vadd.f32 %v2824, %v2900
        %2902 = vmatmul.f32.gmra.mxu0 %v2087
        %v2903 = vpop.f32.mrf.mxu0
        %v2904 = vadd.f32 %v2827, %v2903
        %2905 = vmatmul.f32.gmra.mxu0 %v2088
        %v2906 = vpop.f32.mrf.mxu0
        %v2907 = vadd.f32 %v2830, %v2906
        %2908 = vmatmul.f32.gmra.mxu0 %v2089
        %v2909 = vpop.f32.mrf.mxu0
        %v2910 = vadd.f32 %v2833, %v2909
        %2911 = vmatmul.f32.gmra.mxu0 %v2090
        %v2912 = vpop.f32.mrf.mxu0
        %v2913 = vadd.f32 %v2836, %v2912
        %2914 = vmatmul.f32.gmra.mxu0 %v2091
        %v2915 = vpop.f32.mrf.mxu0
        %v2916 = vadd.f32 %v2839, %v2915
        %2917 = vmatmul.f32.gmra.mxu0 %v2092
        %v2918 = vpop.f32.mrf.mxu0
        %v2919 = vadd.f32 %v2842, %v2918
        %2920 = vmatmul.f32.gmra.mxu0 %v2093
        %v2921 = vpop.f32.mrf.mxu0
        %v2922 = vadd.f32 %v2845, %v2921
        %2923 = vmatmul.f32.gmra.mxu0 %v2094
        %v2924 = vpop.f32.mrf.mxu0
        %v2925 = vadd.f32 %v2848, %v2924
        %2926 = vmatmul.f32.gmra.mxu0 %v2095
        %v2927 = vpop.f32.mrf.mxu0
        %v2928 = vadd.f32 %v2851, %v2927
        %2929 = vmatmul.f32.gmra.mxu0 %v2096
        %v2930 = vpop.f32.mrf.mxu0
        %v2931 = vadd.f32 %v2854, %v2930
        %2932 = vmatmul.f32.gmra.mxu0 %v2097
        %v2933 = vpop.f32.mrf.mxu0
        %v2934 = vadd.f32 %v2857, %v2933
        %2935 = vmatmul.f32.gmra.mxu0 %v2098
        %v2936 = vpop.f32.mrf.mxu0
        %v2937 = vadd.f32 %v2860, %v2936
        %2938 = vmatmul.f32.gmra.mxu0 %v2184
        %v2939 = vpop.f32.mrf.mxu0
        %v2940 = vadd.f32 %v2863, %v2939
        %2941 = vmatmul.f32.gmra.mxu0 %v2185
        %v2942 = vpop.f32.mrf.mxu0
        %v2943 = vadd.f32 %v2866, %v2942
        %2944 = vmatmul.f32.gmra.mxu0 %v2186
        %v2945 = vpop.f32.mrf.mxu0
        %v2946 = vadd.f32 %v2869, %v2945
        %2947 = vmatmul.f32.gmra.mxu0 %v2187
        %v2948 = vpop.f32.mrf.mxu0
        %v2949 = vadd.f32 %v2872, %v2948
        %2950 = vmatmul.f32.gmra.mxu0 %v2188
        %v2951 = vpop.f32.mrf.mxu0
        %v2952 = vadd.f32 %v2875, %v2951
        %2953 = vdwg.mxu0
        %2954 = vmatpush.msra.mxu0 %v2337
        %2955 = vmatpush.msra.mxu0 %v2336
        %2956 = vmatpush.msra.mxu0 %v2335
        %2957 = vmatpush.msra.mxu0 %v2334
        %2958 = vmatpush.msra.mxu0 %v2333
        %2959 = vmatpush.msra.mxu0 %v2332
        %2960 = vmatpush.msra.mxu0 %v2331
        %2961 = vmatpush.msra.mxu0 %v2330
        %2962 = vmatpush.msra.mxu0 %v2329
        %2963 = vmatpush.msra.mxu0 %v2328
        %2964 = vmatpush.msra.mxu0 %v2327
        %2965 = vmatpush.msra.mxu0 %v2326
        %2966 = vmatpush.msra.mxu0 %v2325
        %2967 = vmatpush.msra.mxu0 %v2324
        %2968 = vmatpush.msra.mxu0 %v2323
        %2969 = vmatpush.msra.mxu0 %v2322
        %2970 = vmatmul.f32.gmra.mxu0 %v2104
        %v2971 = vpop.f32.mrf.mxu0
        %v2972 = vadd.f32 %v2895, %v2971
        %2973 = vmatmul.f32.gmra.mxu0 %v2105
        %v2974 = vpop.f32.mrf.mxu0
        %v2975 = vadd.f32 %v2898, %v2974
        %2976 = vmatmul.f32.gmra.mxu0 %v2106
        %v2977 = vpop.f32.mrf.mxu0
        %v2978 = vadd.f32 %v2901, %v2977
        %2979 = vmatmul.f32.gmra.mxu0 %v2107
        %v2980 = vpop.f32.mrf.mxu0
        %v2981 = vadd.f32 %v2904, %v2980
        %2982 = vmatmul.f32.gmra.mxu0 %v2108
        %v2983 = vpop.f32.mrf.mxu0
        %v2984 = vadd.f32 %v2907, %v2983
        %2985 = vmatmul.f32.gmra.mxu0 %v2109
        %v2986 = vpop.f32.mrf.mxu0
        %v2987 = vadd.f32 %v2910, %v2986
        %2988 = vmatmul.f32.gmra.mxu0 %v2110
        %v2989 = vpop.f32.mrf.mxu0
        %v2990 = vadd.f32 %v2913, %v2989
        %2991 = vmatmul.f32.gmra.mxu0 %v2111
        %v2992 = vpop.f32.mrf.mxu0
        %v2993 = vadd.f32 %v2916, %v2992
        %2994 = vmatmul.f32.gmra.mxu0 %v2112
        %v2995 = vpop.f32.mrf.mxu0
        %v2996 = vadd.f32 %v2919, %v2995
        %2997 = vmatmul.f32.gmra.mxu0 %v2113
        %v2998 = vpop.f32.mrf.mxu0
        %v2999 = vadd.f32 %v2922, %v2998
        %3000 = vmatmul.f32.gmra.mxu0 %v2114
        %v3001 = vpop.f32.mrf.mxu0
        %v3002 = vadd.f32 %v2925, %v3001
        %3003 = vmatmul.f32.gmra.mxu0 %v2115
        %v3004 = vpop.f32.mrf.mxu0
        %v3005 = vadd.f32 %v2928, %v3004
        %3006 = vmatmul.f32.gmra.mxu0 %v2116
        %v3007 = vpop.f32.mrf.mxu0
        %v3008 = vadd.f32 %v2931, %v3007
        %3009 = vmatmul.f32.gmra.mxu0 %v2117
        %v3010 = vpop.f32.mrf.mxu0
        %v3011 = vadd.f32 %v2934, %v3010
        %3012 = vmatmul.f32.gmra.mxu0 %v2118
        %v3013 = vpop.f32.mrf.mxu0
        %v3014 = vadd.f32 %v2937, %v3013
        %3015 = vmatmul.f32.gmra.mxu0 %v2189
        %v3016 = vpop.f32.mrf.mxu0
        %v3017 = vadd.f32 %v2940, %v3016
        %3018 = vmatmul.f32.gmra.mxu0 %v2190
        %v3019 = vpop.f32.mrf.mxu0
        %v3020 = vadd.f32 %v2943, %v3019
        %3021 = vmatmul.f32.gmra.mxu0 %v2191
        %v3022 = vpop.f32.mrf.mxu0
        %v3023 = vadd.f32 %v2946, %v3022
        %3024 = vmatmul.f32.gmra.mxu0 %v2192
        %v3025 = vpop.f32.mrf.mxu0
        %v3026 = vadd.f32 %v2949, %v3025
        %3027 = vmatmul.f32.gmra.mxu0 %v2193
        %v3028 = vpop.f32.mrf.mxu0
        %v3029 = vadd.f32 %v2952, %v3028
        %3030 = vdwg.mxu0
        %v3031 = vld [vmem:[%s5] sm:$0x1]
        %v3033 = vperm.slane %v3031, 0
        %v3035 = vmul.f32 %v2972, %v3033
        %v3036 = vmul.f32 %v2975, %v3033
        %v3037 = vmul.f32 %v2978, %v3033
        %v3038 = vmul.f32 %v2981, %v3033
        %v3039 = vmul.f32 %v2984, %v3033
        %v3040 = vmul.f32 %v2987, %v3033
        %v3041 = vmul.f32 %v2990, %v3033
        %v3042 = vmul.f32 %v2993, %v3033
        %v3043 = vmul.f32 %v2996, %v3033
        %v3044 = vmul.f32 %v2999, %v3033
        %v3045 = vmul.f32 %v3002, %v3033
        %v3046 = vmul.f32 %v3005, %v3033
        %v3047 = vmul.f32 %v3008, %v3033
        %v3048 = vmul.f32 %v3011, %v3033
        %v3049 = vmul.f32 %v3014, %v3033
        %v3050 = vmul.f32 %v3017, %v3033
        %v3051 = vmul.f32 %v3020, %v3033
        %v3052 = vmul.f32 %v3023, %v3033
        %v3053 = vmul.f32 %v3026, %v3033
        %v3054 = vmul.f32 %v3029, %v3033
        %v3055 = vld [vmem:[%s6] sm:$0x1]
        %v3057 = vperm.slane %v3055, 0
        %v3059 = vadd.f32 %v3035, %v3057
        %v3060 = vadd.f32 %v3036, %v3057
        %v3061 = vadd.f32 %v3037, %v3057
        %v3062 = vadd.f32 %v3038, %v3057
        %v3063 = vadd.f32 %v3039, %v3057
        %v3064 = vadd.f32 %v3040, %v3057
        %v3065 = vadd.f32 %v3041, %v3057
        %v3066 = vadd.f32 %v3042, %v3057
        %v3067 = vadd.f32 %v3043, %v3057
        %v3068 = vadd.f32 %v3044, %v3057
        %v3069 = vadd.f32 %v3045, %v3057
        %v3070 = vadd.f32 %v3046, %v3057
        %v3071 = vadd.f32 %v3047, %v3057
        %v3072 = vadd.f32 %v3048, %v3057
        %v3073 = vadd.f32 %v3049, %v3057
        %v3074 = vadd.f32 %v3050, %v3057
        %v3075 = vadd.f32 %v3051, %v3057
        %v3076 = vadd.f32 %v3052, %v3057
        %v3077 = vadd.f32 %v3053, %v3057
        %v3078 = vadd.f32 %v3054, %v3057
        %v3079 = vsub.f32 0.0, %v3059
        %v3080 = vsub.f32 0.0, %v3060
        %v3081 = vsub.f32 0.0, %v3061
        %v3082 = vsub.f32 0.0, %v3062
        %v3083 = vsub.f32 0.0, %v3063
        %v3084 = vsub.f32 0.0, %v3064
        %v3085 = vsub.f32 0.0, %v3065
        %v3086 = vsub.f32 0.0, %v3066
        %v3087 = vsub.f32 0.0, %v3067
        %v3088 = vsub.f32 0.0, %v3068
        %v3089 = vsub.f32 0.0, %v3069
        %v3090 = vsub.f32 0.0, %v3070
        %v3091 = vsub.f32 0.0, %v3071
        %v3092 = vsub.f32 0.0, %v3072
        %v3093 = vsub.f32 0.0, %v3073
        %v3094 = vsub.f32 0.0, %v3074
        %v3095 = vsub.f32 0.0, %v3075
        %v3096 = vsub.f32 0.0, %v3076
        %v3097 = vsub.f32 0.0, %v3077
        %v3098 = vsub.f32 0.0, %v3078
        %v3099 = vmul.f32 %v3079, 1.442695
        %v3100 = vpow.pop %v3099
        %v3101 = vmul.f32 %v3080, 1.442695
        %v3102 = vpow.pop %v3101
        %v3103 = vmul.f32 %v3081, 1.442695
        %v3104 = vpow.pop %v3103
        %v3105 = vmul.f32 %v3082, 1.442695
        %v3106 = vpow.pop %v3105
        %v3107 = vmul.f32 %v3083, 1.442695
        %v3108 = vpow.pop %v3107
        %v3109 = vmul.f32 %v3084, 1.442695
        %v3110 = vpow.pop %v3109
        %v3111 = vmul.f32 %v3085, 1.442695
        %v3112 = vpow.pop %v3111
        %v3113 = vmul.f32 %v3086, 1.442695
        %v3114 = vpow.pop %v3113
        %v3115 = vmul.f32 %v3087, 1.442695
        %v3116 = vpow.pop %v3115
        %v3117 = vmul.f32 %v3088, 1.442695
        %v3118 = vpow.pop %v3117
        %v3119 = vmul.f32 %v3089, 1.442695
        %v3120 = vpow.pop %v3119
        %v3121 = vmul.f32 %v3090, 1.442695
        %v3122 = vpow.pop %v3121
        %v3123 = vmul.f32 %v3091, 1.442695
        %v3124 = vpow.pop %v3123
        %v3125 = vmul.f32 %v3092, 1.442695
        %v3126 = vpow.pop %v3125
        %v3127 = vmul.f32 %v3093, 1.442695
        %v3128 = vpow.pop %v3127
        %v3129 = vmul.f32 %v3094, 1.442695
        %v3130 = vpow.pop %v3129
        %v3131 = vmul.f32 %v3095, 1.442695
        %v3132 = vpow.pop %v3131
        %v3133 = vmul.f32 %v3096, 1.442695
        %v3134 = vpow.pop %v3133
        %v3135 = vmul.f32 %v3097, 1.442695
        %v3136 = vpow.pop %v3135
        %v3137 = vmul.f32 %v3098, 1.442695
        %v3138 = vpow.pop %v3137
        %v3139 = vadd.f32 %v3100, 1.0
        %v3140 = vadd.f32 %v3102, 1.0
        %v3141 = vadd.f32 %v3104, 1.0
        %v3142 = vadd.f32 %v3106, 1.0
        %v3143 = vadd.f32 %v3108, 1.0
        %v3144 = vadd.f32 %v3110, 1.0
        %v3145 = vadd.f32 %v3112, 1.0
        %v3146 = vadd.f32 %v3114, 1.0
        %v3147 = vadd.f32 %v3116, 1.0
        %v3148 = vadd.f32 %v3118, 1.0
        %v3149 = vadd.f32 %v3120, 1.0
        %v3150 = vadd.f32 %v3122, 1.0
        %v3151 = vadd.f32 %v3124, 1.0
        %v3152 = vadd.f32 %v3126, 1.0
        %v3153 = vadd.f32 %v3128, 1.0
        %v3154 = vadd.f32 %v3130, 1.0
        %v3155 = vadd.f32 %v3132, 1.0
        %v3156 = vadd.f32 %v3134, 1.0
        %v3157 = vadd.f32 %v3136, 1.0
        %v3158 = vadd.f32 %v3138, 1.0
        %v3159 = vrcp.pop %v3139
        %v3160 = vmul.f32 %v3139, %v3159
        %v3161 = vsub.f32 1.0, %v3160
        %v3162 = vmul.f32 %v3159, %v3161
        %v3163 = vadd.f32 %v3159, %v3162
        %vm3164 = vweird.f32 %v3139
        %vm3165 = vweird.f32 %v3159
        %vm3166 = vmor %vm3164, %vm3165
        %v3167 = vsel %vm3166, %v3159, %v3163
        %v3168 = vand.u32 2147483647, %v3139
        %vm3169 = vcmp.eq.f32.partialorder %v3168, 8.507059e+37
        %v3170 = vand.u32 %v3139, 2147483648
        %v3171 = vor.u32 1.1754944e-38, %v3170
        %v3172 = vsel %vm3169, %v3171, %v3167
        %v3173 = vmul.f32 1.0, %v3172
        %v3174 = vrcp.pop %v3140
        %v3175 = vmul.f32 %v3140, %v3174
        %v3176 = vsub.f32 1.0, %v3175
        %v3177 = vmul.f32 %v3174, %v3176
        %v3178 = vadd.f32 %v3174, %v3177
        %vm3179 = vweird.f32 %v3140
        %vm3180 = vweird.f32 %v3174
        %vm3181 = vmor %vm3179, %vm3180
        %v3182 = vsel %vm3181, %v3174, %v3178
        %v3183 = vand.u32 2147483647, %v3140
        %vm3184 = vcmp.eq.f32.partialorder %v3183, 8.507059e+37
        %v3185 = vand.u32 %v3140, 2147483648
        %v3186 = vor.u32 1.1754944e-38, %v3185
        %v3187 = vsel %vm3184, %v3186, %v3182
        %v3188 = vmul.f32 1.0, %v3187
        %v3189 = vrcp.pop %v3141
        %v3190 = vmul.f32 %v3141, %v3189
        %v3191 = vsub.f32 1.0, %v3190
        %v3192 = vmul.f32 %v3189, %v3191
        %v3193 = vadd.f32 %v3189, %v3192
        %vm3194 = vweird.f32 %v3141
        %vm3195 = vweird.f32 %v3189
        %vm3196 = vmor %vm3194, %vm3195
        %v3197 = vsel %vm3196, %v3189, %v3193
        %v3198 = vand.u32 2147483647, %v3141
        %vm3199 = vcmp.eq.f32.partialorder %v3198, 8.507059e+37
        %v3200 = vand.u32 %v3141, 2147483648
        %v3201 = vor.u32 1.1754944e-38, %v3200
        %v3202 = vsel %vm3199, %v3201, %v3197
        %v3203 = vmul.f32 1.0, %v3202
        %v3204 = vrcp.pop %v3142
        %v3205 = vmul.f32 %v3142, %v3204
        %v3206 = vsub.f32 1.0, %v3205
        %v3207 = vmul.f32 %v3204, %v3206
        %v3208 = vadd.f32 %v3204, %v3207
        %vm3209 = vweird.f32 %v3142
        %vm3210 = vweird.f32 %v3204
        %vm3211 = vmor %vm3209, %vm3210
        %v3212 = vsel %vm3211, %v3204, %v3208
        %v3213 = vand.u32 2147483647, %v3142
        %vm3214 = vcmp.eq.f32.partialorder %v3213, 8.507059e+37
        %v3215 = vand.u32 %v3142, 2147483648
        %v3216 = vor.u32 1.1754944e-38, %v3215
        %v3217 = vsel %vm3214, %v3216, %v3212
        %v3218 = vmul.f32 1.0, %v3217
        %v3219 = vrcp.pop %v3143
        %v3220 = vmul.f32 %v3143, %v3219
        %v3221 = vsub.f32 1.0, %v3220
        %v3222 = vmul.f32 %v3219, %v3221
        %v3223 = vadd.f32 %v3219, %v3222
        %vm3224 = vweird.f32 %v3143
        %vm3225 = vweird.f32 %v3219
        %vm3226 = vmor %vm3224, %vm3225
        %v3227 = vsel %vm3226, %v3219, %v3223
        %v3228 = vand.u32 2147483647, %v3143
        %vm3229 = vcmp.eq.f32.partialorder %v3228, 8.507059e+37
        %v3230 = vand.u32 %v3143, 2147483648
        %v3231 = vor.u32 1.1754944e-38, %v3230
        %v3232 = vsel %vm3229, %v3231, %v3227
        %v3233 = vmul.f32 1.0, %v3232
        %v3234 = vrcp.pop %v3144
        %v3235 = vmul.f32 %v3144, %v3234
        %v3236 = vsub.f32 1.0, %v3235
        %v3237 = vmul.f32 %v3234, %v3236
        %v3238 = vadd.f32 %v3234, %v3237
        %vm3239 = vweird.f32 %v3144
        %vm3240 = vweird.f32 %v3234
        %vm3241 = vmor %vm3239, %vm3240
        %v3242 = vsel %vm3241, %v3234, %v3238
        %v3243 = vand.u32 2147483647, %v3144
        %vm3244 = vcmp.eq.f32.partialorder %v3243, 8.507059e+37
        %v3245 = vand.u32 %v3144, 2147483648
        %v3246 = vor.u32 1.1754944e-38, %v3245
        %v3247 = vsel %vm3244, %v3246, %v3242
        %v3248 = vmul.f32 1.0, %v3247
        %v3249 = vrcp.pop %v3145
        %v3250 = vmul.f32 %v3145, %v3249
        %v3251 = vsub.f32 1.0, %v3250
        %v3252 = vmul.f32 %v3249, %v3251
        %v3253 = vadd.f32 %v3249, %v3252
        %vm3254 = vweird.f32 %v3145
        %vm3255 = vweird.f32 %v3249
        %vm3256 = vmor %vm3254, %vm3255
        %v3257 = vsel %vm3256, %v3249, %v3253
        %v3258 = vand.u32 2147483647, %v3145
        %vm3259 = vcmp.eq.f32.partialorder %v3258, 8.507059e+37
        %v3260 = vand.u32 %v3145, 2147483648
        %v3261 = vor.u32 1.1754944e-38, %v3260
        %v3262 = vsel %vm3259, %v3261, %v3257
        %v3263 = vmul.f32 1.0, %v3262
        %v3264 = vrcp.pop %v3146
        %v3265 = vmul.f32 %v3146, %v3264
        %v3266 = vsub.f32 1.0, %v3265
        %v3267 = vmul.f32 %v3264, %v3266
        %v3268 = vadd.f32 %v3264, %v3267
        %vm3269 = vweird.f32 %v3146
        %vm3270 = vweird.f32 %v3264
        %vm3271 = vmor %vm3269, %vm3270
        %v3272 = vsel %vm3271, %v3264, %v3268
        %v3273 = vand.u32 2147483647, %v3146
        %vm3274 = vcmp.eq.f32.partialorder %v3273, 8.507059e+37
        %v3275 = vand.u32 %v3146, 2147483648
        %v3276 = vor.u32 1.1754944e-38, %v3275
        %v3277 = vsel %vm3274, %v3276, %v3272
        %v3278 = vmul.f32 1.0, %v3277
        %v3279 = vrcp.pop %v3147
        %v3280 = vmul.f32 %v3147, %v3279
        %v3281 = vsub.f32 1.0, %v3280
        %v3282 = vmul.f32 %v3279, %v3281
        %v3283 = vadd.f32 %v3279, %v3282
        %vm3284 = vweird.f32 %v3147
        %vm3285 = vweird.f32 %v3279
        %vm3286 = vmor %vm3284, %vm3285
        %v3287 = vsel %vm3286, %v3279, %v3283
        %v3288 = vand.u32 2147483647, %v3147
        %vm3289 = vcmp.eq.f32.partialorder %v3288, 8.507059e+37
        %v3290 = vand.u32 %v3147, 2147483648
        %v3291 = vor.u32 1.1754944e-38, %v3290
        %v3292 = vsel %vm3289, %v3291, %v3287
        %v3293 = vmul.f32 1.0, %v3292
        %v3294 = vrcp.pop %v3148
        %v3295 = vmul.f32 %v3148, %v3294
        %v3296 = vsub.f32 1.0, %v3295
        %v3297 = vmul.f32 %v3294, %v3296
        %v3298 = vadd.f32 %v3294, %v3297
        %vm3299 = vweird.f32 %v3148
        %vm3300 = vweird.f32 %v3294
        %vm3301 = vmor %vm3299, %vm3300
        %v3302 = vsel %vm3301, %v3294, %v3298
        %v3303 = vand.u32 2147483647, %v3148
        %vm3304 = vcmp.eq.f32.partialorder %v3303, 8.507059e+37
        %v3305 = vand.u32 %v3148, 2147483648
        %v3306 = vor.u32 1.1754944e-38, %v3305
        %v3307 = vsel %vm3304, %v3306, %v3302
        %v3308 = vmul.f32 1.0, %v3307
        %v3309 = vrcp.pop %v3149
        %v3310 = vmul.f32 %v3149, %v3309
        %v3311 = vsub.f32 1.0, %v3310
        %v3312 = vmul.f32 %v3309, %v3311
        %v3313 = vadd.f32 %v3309, %v3312
        %vm3314 = vweird.f32 %v3149
        %vm3315 = vweird.f32 %v3309
        %vm3316 = vmor %vm3314, %vm3315
        %v3317 = vsel %vm3316, %v3309, %v3313
        %v3318 = vand.u32 2147483647, %v3149
        %vm3319 = vcmp.eq.f32.partialorder %v3318, 8.507059e+37
        %v3320 = vand.u32 %v3149, 2147483648
        %v3321 = vor.u32 1.1754944e-38, %v3320
        %v3322 = vsel %vm3319, %v3321, %v3317
        %v3323 = vmul.f32 1.0, %v3322
        %v3324 = vrcp.pop %v3150
        %v3325 = vmul.f32 %v3150, %v3324
        %v3326 = vsub.f32 1.0, %v3325
        %v3327 = vmul.f32 %v3324, %v3326
        %v3328 = vadd.f32 %v3324, %v3327
        %vm3329 = vweird.f32 %v3150
        %vm3330 = vweird.f32 %v3324
        %vm3331 = vmor %vm3329, %vm3330
        %v3332 = vsel %vm3331, %v3324, %v3328
        %v3333 = vand.u32 2147483647, %v3150
        %vm3334 = vcmp.eq.f32.partialorder %v3333, 8.507059e+37
        %v3335 = vand.u32 %v3150, 2147483648
        %v3336 = vor.u32 1.1754944e-38, %v3335
        %v3337 = vsel %vm3334, %v3336, %v3332
        %v3338 = vmul.f32 1.0, %v3337
        %v3339 = vrcp.pop %v3151
        %v3340 = vmul.f32 %v3151, %v3339
        %v3341 = vsub.f32 1.0, %v3340
        %v3342 = vmul.f32 %v3339, %v3341
        %v3343 = vadd.f32 %v3339, %v3342
        %vm3344 = vweird.f32 %v3151
        %vm3345 = vweird.f32 %v3339
        %vm3346 = vmor %vm3344, %vm3345
        %v3347 = vsel %vm3346, %v3339, %v3343
        %v3348 = vand.u32 2147483647, %v3151
        %vm3349 = vcmp.eq.f32.partialorder %v3348, 8.507059e+37
        %v3350 = vand.u32 %v3151, 2147483648
        %v3351 = vor.u32 1.1754944e-38, %v3350
        %v3352 = vsel %vm3349, %v3351, %v3347
        %v3353 = vmul.f32 1.0, %v3352
        %v3354 = vrcp.pop %v3152
        %v3355 = vmul.f32 %v3152, %v3354
        %v3356 = vsub.f32 1.0, %v3355
        %v3357 = vmul.f32 %v3354, %v3356
        %v3358 = vadd.f32 %v3354, %v3357
        %vm3359 = vweird.f32 %v3152
        %vm3360 = vweird.f32 %v3354
        %vm3361 = vmor %vm3359, %vm3360
        %v3362 = vsel %vm3361, %v3354, %v3358
        %v3363 = vand.u32 2147483647, %v3152
        %vm3364 = vcmp.eq.f32.partialorder %v3363, 8.507059e+37
        %v3365 = vand.u32 %v3152, 2147483648
        %v3366 = vor.u32 1.1754944e-38, %v3365
        %v3367 = vsel %vm3364, %v3366, %v3362
        %v3368 = vmul.f32 1.0, %v3367
        %v3369 = vrcp.pop %v3153
        %v3370 = vmul.f32 %v3153, %v3369
        %v3371 = vsub.f32 1.0, %v3370
        %v3372 = vmul.f32 %v3369, %v3371
        %v3373 = vadd.f32 %v3369, %v3372
        %vm3374 = vweird.f32 %v3153
        %vm3375 = vweird.f32 %v3369
        %vm3376 = vmor %vm3374, %vm3375
        %v3377 = vsel %vm3376, %v3369, %v3373
        %v3378 = vand.u32 2147483647, %v3153
        %vm3379 = vcmp.eq.f32.partialorder %v3378, 8.507059e+37
        %v3380 = vand.u32 %v3153, 2147483648
        %v3381 = vor.u32 1.1754944e-38, %v3380
        %v3382 = vsel %vm3379, %v3381, %v3377
        %v3383 = vmul.f32 1.0, %v3382
        %v3384 = vrcp.pop %v3154
        %v3385 = vmul.f32 %v3154, %v3384
        %v3386 = vsub.f32 1.0, %v3385
        %v3387 = vmul.f32 %v3384, %v3386
        %v3388 = vadd.f32 %v3384, %v3387
        %vm3389 = vweird.f32 %v3154
        %vm3390 = vweird.f32 %v3384
        %vm3391 = vmor %vm3389, %vm3390
        %v3392 = vsel %vm3391, %v3384, %v3388
        %v3393 = vand.u32 2147483647, %v3154
        %vm3394 = vcmp.eq.f32.partialorder %v3393, 8.507059e+37
        %v3395 = vand.u32 %v3154, 2147483648
        %v3396 = vor.u32 1.1754944e-38, %v3395
        %v3397 = vsel %vm3394, %v3396, %v3392
        %v3398 = vmul.f32 1.0, %v3397
        %v3399 = vrcp.pop %v3155
        %v3400 = vmul.f32 %v3155, %v3399
        %v3401 = vsub.f32 1.0, %v3400
        %v3402 = vmul.f32 %v3399, %v3401
        %v3403 = vadd.f32 %v3399, %v3402
        %vm3404 = vweird.f32 %v3155
        %vm3405 = vweird.f32 %v3399
        %vm3406 = vmor %vm3404, %vm3405
        %v3407 = vsel %vm3406, %v3399, %v3403
        %v3408 = vand.u32 2147483647, %v3155
        %vm3409 = vcmp.eq.f32.partialorder %v3408, 8.507059e+37
        %v3410 = vand.u32 %v3155, 2147483648
        %v3411 = vor.u32 1.1754944e-38, %v3410
        %v3412 = vsel %vm3409, %v3411, %v3407
        %v3413 = vmul.f32 1.0, %v3412
        %v3414 = vrcp.pop %v3156
        %v3415 = vmul.f32 %v3156, %v3414
        %v3416 = vsub.f32 1.0, %v3415
        %v3417 = vmul.f32 %v3414, %v3416
        %v3418 = vadd.f32 %v3414, %v3417
        %vm3419 = vweird.f32 %v3156
        %vm3420 = vweird.f32 %v3414
        %vm3421 = vmor %vm3419, %vm3420
        %v3422 = vsel %vm3421, %v3414, %v3418
        %v3423 = vand.u32 2147483647, %v3156
        %vm3424 = vcmp.eq.f32.partialorder %v3423, 8.507059e+37
        %v3425 = vand.u32 %v3156, 2147483648
        %v3426 = vor.u32 1.1754944e-38, %v3425
        %v3427 = vsel %vm3424, %v3426, %v3422
        %v3428 = vmul.f32 1.0, %v3427
        %v3429 = vrcp.pop %v3157
        %v3430 = vmul.f32 %v3157, %v3429
        %v3431 = vsub.f32 1.0, %v3430
        %v3432 = vmul.f32 %v3429, %v3431
        %v3433 = vadd.f32 %v3429, %v3432
        %vm3434 = vweird.f32 %v3157
        %vm3435 = vweird.f32 %v3429
        %vm3436 = vmor %vm3434, %vm3435
        %v3437 = vsel %vm3436, %v3429, %v3433
        %v3438 = vand.u32 2147483647, %v3157
        %vm3439 = vcmp.eq.f32.partialorder %v3438, 8.507059e+37
        %v3440 = vand.u32 %v3157, 2147483648
        %v3441 = vor.u32 1.1754944e-38, %v3440
        %v3442 = vsel %vm3439, %v3441, %v3437
        %v3443 = vmul.f32 1.0, %v3442
        %v3444 = vrcp.pop %v3158
        %v3445 = vmul.f32 %v3158, %v3444
        %v3446 = vsub.f32 1.0, %v3445
        %v3447 = vmul.f32 %v3444, %v3446
        %v3448 = vadd.f32 %v3444, %v3447
        %vm3449 = vweird.f32 %v3158
        %vm3450 = vweird.f32 %v3444
        %vm3451 = vmor %vm3449, %vm3450
        %v3452 = vsel %vm3451, %v3444, %v3448
        %v3453 = vand.u32 2147483647, %v3158
        %vm3454 = vcmp.eq.f32.partialorder %v3453, 8.507059e+37
        %v3455 = vand.u32 %v3158, 2147483648
        %v3456 = vor.u32 1.1754944e-38, %v3455
        %v3457 = vsel %vm3454, %v3456, %v3452
        %v3458 = vmul.f32 1.0, %v3457
        %v3459 = vmul.f32 %v3059, %v3173
        %v3460 = vmul.f32 %v3060, %v3188
        %v3461 = vmul.f32 %v3061, %v3203
        %v3462 = vmul.f32 %v3062, %v3218
        %v3463 = vmul.f32 %v3063, %v3233
        %v3464 = vmul.f32 %v3064, %v3248
        %v3465 = vmul.f32 %v3065, %v3263
        %v3466 = vmul.f32 %v3066, %v3278
        %v3467 = vmul.f32 %v3067, %v3293
        %v3468 = vmul.f32 %v3068, %v3308
        %v3469 = vmul.f32 %v3069, %v3323
        %v3470 = vmul.f32 %v3070, %v3338
        %v3471 = vmul.f32 %v3071, %v3353
        %v3472 = vmul.f32 %v3072, %v3368
        %v3473 = vmul.f32 %v3073, %v3383
        %v3474 = vmul.f32 %v3074, %v3398
        %v3475 = vmul.f32 %v3075, %v3413
        %v3476 = vmul.f32 %v3076, %v3428
        %v3477 = vmul.f32 %v3077, %v3443
        %v3478 = vmul.f32 %v3078, %v3458
        %v3479 = vld [vmem:[#allocation2 + $0x30] sm:$0xff]
        %v3480 = vld [vmem:[#allocation2 + $0x38] sm:$0xff]
        %v3481 = vld [vmem:[#allocation2 + $0x40] sm:$0xff]
        %v3482 = vld [vmem:[#allocation2 + $0x48] sm:$0xff]
        %v3483 = vld [vmem:[#allocation2 + $0x50] sm:$0xff]
        %v3484 = vld [vmem:[#allocation2 + $0x58] sm:$0xff]
        %v3485 = vld [vmem:[#allocation2 + $0x60] sm:$0xff]
        %v3486 = vld [vmem:[#allocation2 + $0x68] sm:$0xff]
        %v3487 = vld [vmem:[#allocation2 + $0x70] sm:$0xff]
        %v3488 = vld [vmem:[#allocation2 + $0x78] sm:$0xff]
        %v3489 = vld [vmem:[#allocation2 + $0x80] sm:$0xff]
        %v3490 = vld [vmem:[#allocation2 + $0x88] sm:$0xff]
        %v3491 = vld [vmem:[#allocation2 + $0x90] sm:$0xff]
        %v3492 = vld [vmem:[#allocation2 + $0x98] sm:$0xff]
        %v3493 = vld [vmem:[#allocation2 + $0xa0] sm:$0xff]
        %v3494 = vld [vmem:[#allocation2 + $0xa8] sm:$0xff]
        %v3495 = vld [vmem:[#allocation2 + $0xb0] sm:$0xff]
        %v3496 = vld [vmem:[#allocation2 + $0xb8] sm:$0xff]
        %v3497 = vld [vmem:[#allocation2 + $0xc0] sm:$0xff]
        %v3498 = vld [vmem:[#allocation2 + $0xc8] sm:$0xff]
        %v3499 = vadd.f32 %v3459, %v3479
        %v3500 = vadd.f32 %v3460, %v3480
        %v3501 = vadd.f32 %v3461, %v3481
        %v3502 = vadd.f32 %v3462, %v3482
        %v3503 = vadd.f32 %v3463, %v3483
        %v3504 = vadd.f32 %v3464, %v3484
        %v3505 = vadd.f32 %v3465, %v3485
        %v3506 = vadd.f32 %v3466, %v3486
        %v3507 = vadd.f32 %v3467, %v3487
        %v3508 = vadd.f32 %v3468, %v3488
        %v3509 = vadd.f32 %v3469, %v3489
        %v3510 = vadd.f32 %v3470, %v3490
        %v3511 = vadd.f32 %v3471, %v3491
        %v3512 = vadd.f32 %v3472, %v3492
        %v3513 = vadd.f32 %v3473, %v3493
        %v3514 = vadd.f32 %v3474, %v3494
        %v3515 = vadd.f32 %v3475, %v3495
        %v3516 = vadd.f32 %v3476, %v3496
        %v3517 = vadd.f32 %v3477, %v3497
        %v3518 = vadd.f32 %v3478, %v3498
        %3519 = vst [vmem:[%s278] sm:$0xff] %v3499
        %3520 = vst [vmem:[%s278 + $0x8] sm:$0xff] %v3500
        %3521 = vst [vmem:[%s278 + $0x10] sm:$0xff] %v3501
        %3522 = vst [vmem:[%s278 + $0x18] sm:$0xff] %v3502
        %3523 = vst [vmem:[%s278 + $0x20] sm:$0xff] %v3503
        %3524 = vst [vmem:[%s278 + $0x28] sm:$0xff] %v3504
        %3525 = vst [vmem:[%s278 + $0x30] sm:$0xff] %v3505
        %3526 = vst [vmem:[%s278 + $0x38] sm:$0xff] %v3506
        %3527 = vst [vmem:[%s278 + $0x40] sm:$0xff] %v3507
        %3528 = vst [vmem:[%s278 + $0x48] sm:$0xff] %v3508
        %3529 = vst [vmem:[%s278 + $0x50] sm:$0xff] %v3509
        %3530 = vst [vmem:[%s278 + $0x58] sm:$0xff] %v3510
        %3531 = vst [vmem:[%s278 + $0x60] sm:$0xff] %v3511
        %3532 = vst [vmem:[%s278 + $0x68] sm:$0xff] %v3512
        %3533 = vst [vmem:[%s278 + $0x70] sm:$0xff] %v3513
        %3534 = vst [vmem:[%s278 + $0x78] sm:$0xff] %v3514
        %3535 = vst [vmem:[%s278 + $0x80] sm:$0xff] %v3515
        %3536 = vst [vmem:[%s278 + $0x88] sm:$0xff] %v3516
        %3537 = vst [vmem:[%s278 + $0x90] sm:$0xff] %v3517
        %3538 = vst [vmem:[%s278 + $0x98] sm:$0xff] %v3518
        %s3539 = sand.u32 %s171, 1
        %s3540 = scalar_lea.sflag [#allocation7], %s3539
        %s3541 = sand.u32 %s171, 1
        %s3542 = smul.addr %s3541, 160
        %s3543 = scalar_lea.vmem [#allocation10], %s3542
        // Predicated region
        $region65: #{tpu_custom_call.1} parent=43 // pred_check
          %p3544 = pneg %p181
        $region66: #{tpu_custom_call.1} parent=43 // pred_check_branch
          %3546 = sbr.rel (%p3544) target = $region68
        $region67: #{tpu_custom_call.1} parent=43 // pred_region
          %s3547 = smul.u32 20, %s28
          %3549 = vsyncadd %s3540, 0
          %s3550 = smul.addr %s27, 40
          %s3551 = sadd.s32 %s3547, %s3550
          %s3552 = smul.addr %s3551, 8
          %s3553 = scalar_lea.hbm %s7, %s3552
          %s3554 = sshll.u32 %s3543, 4
          %s3555 = int_to_ptr.vmem [resolvable:$true] %s3554
          %s3556 = sshll.u32 %s3553, 4
          %s3557 = int_to_ptr.hbm [resolvable:$true] %s3556
          %3562 = dma.vmem_to_hbm [thread:$0]  %s3555, 2560, %s3557, %s3540, 128, 128, 8
        $region68: #{tpu_custom_call.1} parent=43 // pred_fallthru
          _
      $region44: #{tpu_custom_call.1} parent=5 // pred_fallthru
        _
      %p3563 = scmp.le.s32.totalorder 2, %s18
      // Predicated region
      $region69: #{tpu_custom_call.1} parent=5 // pred_check
        %p3564 = pneg %p3563
      $region70: #{tpu_custom_call.1} parent=5 // pred_check_branch
        %3566 = sbr.rel (%p3564) target = $region72
      $region71: #{tpu_custom_call.1} parent=5 // pred_region
        %s3567 = ssub.s32 %s18, 2
        // Predicated region
        $region73: #{tpu_custom_call.1} parent=71 // pred_check
          %p3568 = pneg %p187
        $region74: #{tpu_custom_call.1} parent=71 // pred_check_branch
          %3570 = sbr.rel (%p3568) target = $region76
        $region75: #{tpu_custom_call.1} parent=71 // pred_region
          %s3571 = sand.u32 %s172, 1
          %s3572 = scalar_lea.sflag [#allocation7], %s3571
          %s3573 = sand.u32 %s172, 1
          %s3574 = smul.addr %s3573, 160
          %s3575 = scalar_lea.vmem [#allocation10], %s3574
          %3577 = dma.done %s3572, 2560
        $region76: #{tpu_custom_call.1} parent=71 // pred_fallthru
          _
      $region72: #{tpu_custom_call.1} parent=5 // pred_fallthru
        _
    $region6: #{tpu_custom_call.1} parent=1 // loop_footer
      %s22 = sadd.s32 1, %s18
    $region7: #{tpu_custom_call.1} parent=1 // loop_footer_branch
      %17 = sbr.rel target = $region3
    $region8: #{tpu_custom_call.1} parent=1 // loop_exit
      _
    %3578 = vsyncpa [#allocation6], 1
    %s3579 = scalar_lea.sflag [#allocation6], 1
    %3580 = vsyncpa %s3579, 1
    %3581 = vsyncpa [#allocation9], 1
    %3582 = vsyncpa [#allocation7], 1
    %s3583 = scalar_lea.sflag [#allocation7], 1
    %3584 = vsyncpa %s3583, 1
  %3585 = vsyncmov [#allocation4]
  %s3586 = vpop.sfrf %3585
  %p3587 = scmp.eq.s32.totalorder %s3586, 0
  %p3588 = pneg %p3587
  %3590 = shalt.err (%p3588)

</llo_original>
